<compile_context>
chip_gen: v7x
topology: tpu7x:2x2x1
jax: 0.10.0
libtpu: 0.0.40
codegen_flags: <defaults>
</compile_context>

<pallas_src>
import jax
import jax.numpy as jnp
from jax.experimental import pallas as pl
from jax.experimental.pallas import tpu as pltpu


_LANE = 128
_MIN_BYTES_FOR_PALLAS = 2 * 1024 * 1024     # below this, XLA einsum wins
_TARGET_STEP_BYTES = 4 * 1024 * 1024        # ~4 MiB of B + out per grid step
_MIN_STEP_BYTES = 1 * 1024 * 1024           # don't shrink steps below ~1 MiB


def _vmem_budget_bytes():
    # Budget for kernel buffers (resident A + double-buffered B/out tiles).
    # Physical VMEM: 128 MiB on v5e/v6e, 64 MiB on v7x.
    cap = 64 * 1024 * 1024
    try:
        info = pltpu.get_tpu_info()
        cap = int(getattr(info, "vmem_capacity_bytes", cap))
    except Exception:
        pass
    # -> 48 MiB on v5e/v6e (128 MiB physical), 32 MiB on v7x (64 MiB physical)
    return max(12 * 1024 * 1024, min(cap // 2, 48 * 1024 * 1024))


def _round_up(x, m):
    return ((x + m - 1) // m) * m


def _choose_tile_d(n, d, itemsize, vmem_budget):
    d_cap = _round_up(d, _LANE)
    # Bytes-based target: per-step payload (B tile + out tile) ~ 4 MiB.
    bytes_cap = max(_LANE, _TARGET_STEP_BYTES // (2 * n * itemsize))
    # Hard VMEM cap: resident A + 2x double-buffered (B tile + out tile).
    avail = vmem_budget - n * n * itemsize
    vmem_cap = max(_LANE, avail // (4 * n * itemsize))
    # Prefer >= ~8 grid steps (2 TCs x >= 4 pipelined steps on v7x), but never
    # shrink a step below ~1 MiB of payload (per-step overhead ~0.35 us).
    steps_cap = _round_up(pl.cdiv(d, 8), _LANE)
    min_payload_tile = _round_up(
        max(_LANE, _MIN_STEP_BYTES // (2 * n * itemsize)), _LANE)
    steps_cap_eff = max(steps_cap, min_payload_tile)

    tile = min(bytes_cap, vmem_cap, steps_cap_eff, d_cap)
    return max(_LANE, (tile // _LANE) * _LANE)


# ----------------------------- Pallas kernel -------------------------------

def _general_product_kernel(a_ref, b_ref, o_ref):
    # One lane-dense feature tile: out[:, jT:(j+1)T] = A @ B[:, jT:(j+1)T].
    o_ref[...] = jnp.dot(
        a_ref[...], b_ref[...], preferred_element_type=jnp.float32
    ).astype(o_ref.dtype)


def general_product_pallas(A, B_flat):
    n, d = B_flat.shape
    itemsize = B_flat.dtype.itemsize
    budget = _vmem_budget_bytes()
    tile_d = _choose_tile_d(n, d, itemsize, budget)
    grid = (pl.cdiv(d, tile_d),)

    # Scoped-VMEM limit: cover the budget with headroom, stay below v7x's
    # 64 MiB physical VMEM (v5e/v6e have 128 MiB physical).
    vmem_limit = min(budget + 8 * 1024 * 1024, 56 * 1024 * 1024)

    return pl.pallas_call(
        _general_product_kernel,
        out_shape=jax.ShapeDtypeStruct((n, d), B_flat.dtype),
        grid_spec=pltpu.PrefetchScalarGridSpec(
            num_scalar_prefetch=0,
            grid=grid,
            in_specs=[
                # Constant block index -> A fetched once, stays VMEM-resident.
                pl.BlockSpec((n, n), lambda j: (0, 0)),
                # B tiled along the flattened feature (lane) dim; ragged last
                # block handled by Pallas masked boundary load/store.
                pl.BlockSpec((n, tile_d), lambda j: (0, j)),
            ],
            out_specs=pl.BlockSpec((n, tile_d), lambda j: (0, j)),
        ),
        compiler_params=pltpu.CompilerParams(
            # Feature-dim blocks are independent -> shard across v7x's 2 TCs.
            dimension_semantics=("parallel",),
            vmem_limit_bytes=vmem_limit,
        ),
        cost_estimate=pl.CostEstimate(
            flops=2 * n * n * d,
            transcendentals=0,
            bytes_accessed=(n * n + 2 * n * d) * itemsize,
        ),
    )(A, B_flat)


# ----------------------------- Module wrapper -------------------------------

class Particle:
    """JAX/Pallas port of converter_project Particle."""

    def __init__(self, prior_shape, n_particles, key):
        self.prior_shape = tuple(prior_shape)
        self.n_particles = int(n_particles)
        # initialize_parameters: materialize (n_particles, *prior.shape) and
        # fill with a draw from the (synthetic standard-normal) prior.
        self.particles = jax.random.normal(
            key, (self.n_particles, *self.prior_shape), dtype=jnp.float32
        )

    @property
    def flattened_particles(self):
        return self.particles.reshape(self.n_particles, -1)

    def forward(self, *args, **kwargs):
        # Pure parameter read: returning the array directly avoids a pointless
        # HBM->VMEM->HBM round trip plus pallas_call dispatch overhead.
        return self.particles

    def general_product(self, A, B):
        assert A.shape[0] == A.shape[1], "A must be a square matrix"
        assert A.shape[1] == B.shape[0], (
            "The first dimension of B must match A's dimensions"
        )
        b_flat = B.reshape(B.shape[0], -1)
        n, d = b_flat.shape
        itemsize = b_flat.dtype.itemsize
        budget = _vmem_budget_bytes()
        # Gate on total bytes of B (memory-bound op) and on A + minimal tiles
        # actually fitting the VMEM budget.
        fits_vmem = n * n * itemsize + 4 * n * _LANE * itemsize <= budget
        if n * d * itemsize < _MIN_BYTES_FOR_PALLAS or not fits_vmem:
            out = jnp.einsum("ij,jk->ik", A, b_flat)
        else:
            out = general_product_pallas(A, b_flat)
        return out.reshape(B.shape)

    def perturb_gradients(self, kernel_matrix, particles_grad):
        # TODO(synk): PyTorch mutates self.particles.grad in place; JAX has no
        # mutable .grad slot, so the preconditioned gradient is returned.
        return self.general_product(kernel_matrix, particles_grad)


# --------------------------------- main -------------------------------------

if __name__ == "__main__":
    key = jax.random.PRNGKey(0)
    k_init, k_kern, k_grad, k_rag = jax.random.split(key, 4)

    n_particles = 8
    prior_shape = (256, 256)  # flattened D = 65536 -> 2 MiB of B, Pallas path

    module = Particle(prior_shape, n_particles, k_init)

    # --- forward pass (returns particles, no kernel) ---
    out = jax.block_until_ready(module.forward())
    assert out.shape == (n_particles, *prior_shape)
    assert jnp.array_equal(out, module.particles)

    # --- general_product / perturb_gradients hot path (Pallas) ---
    kernel_matrix = jax.random.normal(
        k_kern, (n_particles, n_particles), dtype=jnp.float32
    )
    fake_grad = jax.random.normal(
        k_grad, (n_particles, *prior_shape), dtype=jnp.float32
    )
    perturbed = jax.block_until_ready(
        module.perturb_gradients(kernel_matrix, fake_grad)
    )
    ref = jnp.einsum("ij,jkl->ikl", kernel_matrix, fake_grad)
    assert perturbed.shape == fake_grad.shape
    assert jnp.allclose(perturbed, ref, atol=1e-4, rtol=1e-4)

    # --- ragged boundary check (d % 128 != 0) exercising masked stores ---
    d_ragged = 2056  # not a multiple of 128
    b_ragged = jax.random.normal(
        k_rag, (n_particles, d_ragged), dtype=jnp.float32
    )
    out_ragged = jax.block_until_ready(
        general_product_pallas(kernel_matrix, b_ragged)
    )
    ref_ragged = kernel_matrix @ b_ragged
    assert out_ragged.shape == b_ragged.shape
    assert jnp.allclose(out_ragged, ref_ragged, atol=1e-4, rtol=1e-4)

    # --- small-problem fallback path (dispatches to jnp.einsum) ---
    small = Particle((4, 32), n_particles, k_init)
    small_grad = jax.random.normal(
        k_grad, (n_particles, 4, 32), dtype=jnp.float32
    )
    small_out = jax.block_until_ready(
        small.perturb_gradients(kernel_matrix, small_grad)
    )
    small_ref = jnp.einsum("ij,jkl->ikl", kernel_matrix, small_grad)
    assert jnp.allclose(small_out, small_ref, atol=1e-4, rtol=1e-4)

    print("KERNEL_OK")
</pallas_src>

<mosaic_0001>
module attributes {stable_mosaic.version = 11 : i64} {
  func.func @_general_product_kernel(%arg0: i32, %arg1: memref<8x8xf32, #tpu.memory_space<vmem>>, %arg2: memref<8x16384xf32, #tpu.memory_space<vmem>>, %arg3: memref<8x16384xf32, #tpu.memory_space<vmem>>) attributes {dimension_semantics = [#tpu.dimension_semantics<parallel>], iteration_bounds = array<i64: 4>, scalar_prefetch = 0 : i64, scratch_operands = 0 : i64, tpu.core_type = #tpu.core_type<tc>, window_params = [{pipeline_mode = #tpu.pipeline_mode<synchronous>, transform_indices = @transform_0, window_bounds = array<i64: 8, 8>}, {transform_indices = @transform_1, window_bounds = array<i64: 8, 16384>}, {transform_indices = @transform_2, window_bounds = array<i64: 8, 16384>}]} {
    %c0 = arith.constant 0 : index
    %c0_0 = arith.constant 0 : index
    %0 = vector.load %arg1[%c0, %c0_0] : memref<8x8xf32, #tpu.memory_space<vmem>>, vector<8x8xf32>
    %c0_1 = arith.constant 0 : index
    %c0_2 = arith.constant 0 : index
    %1 = vector.load %arg2[%c0_1, %c0_2] : memref<8x16384xf32, #tpu.memory_space<vmem>>, vector<8x16384xf32>
    %cst = arith.constant dense<0.000000e+00> : vector<8x16384xf32>
    %2 = tpu.matmul %0, %1, %cst {dimension_numbers = #tpu.dot_dimension_numbers<[1], [0], [0], [1], [0, 0, 1, 1], [], []>} : vector<8x8xf32>, vector<8x16384xf32>, vector<8x16384xf32> -> vector<8x16384xf32>
    %c0_3 = arith.constant 0 : index
    %c0_4 = arith.constant 0 : index
    %3 = vector.load %arg3[%c0_3, %c0_4] : memref<8x16384xf32, #tpu.memory_space<vmem>>, vector<8x16384xf32>
    tpu.vector_store %arg3[%c0_3, %c0_4], %2 {strides = array<i32>} : memref<8x16384xf32, #tpu.memory_space<vmem>>, vector<8x16384xf32>,
    return
  }
  func.func @transform_0(%arg0: i32) -> (i32, i32) {
    %c0_i32 = arith.constant 0 : i32
    %c0_i32_0 = arith.constant 0 : i32
    %c0_i32_1 = arith.constant 0 : i32
    return %c0_i32, %c0_i32_0 : i32, i32
  }
  func.func @transform_1(%arg0: i32) -> (i32, i32) {
    %c0_i32 = arith.constant 0 : i32
    %c0_i32_0 = arith.constant 0 : i32
    return %c0_i32, %arg0 : i32, i32
  }
  func.func @transform_2(%arg0: i32) -> (i32, i32) {
    %c0_i32 = arith.constant 0 : i32
    %c0_i32_0 = arith.constant 0 : i32
    return %c0_i32, %arg0 : i32, i32
  }
}

</mosaic_0001>

<llo_original>
// kernel: tpu_custom_call.1
$region0: #{tpu_custom_call.1}
  #allocation0 [shape = 'u32[]', space=smem, size = 0x4, offset = 0x4, fixed_abs, tag = 'smem constant byte address 0x4 - core index']
  #allocation1 [shape = 'u32[144,128]{1,0:T(1,128)}', space=vmem, size = 0x12000, scoped, tag = 'internal scratch']
  %s0 = inlined_call_operand.hbm [shape: f32[8,8], index: 0, kind: input, shape index: {}]
  %s1 = inlined_call_operand.hbm [shape: f32[8,65536], index: 1, kind: input, shape index: {}]
  %s2 = inlined_call_operand.hbm [shape: f32[8,65536], index: 2, kind: output, shape index: {}]
  %s3 = sld [smem:[#allocation0]]
  $region49: #{tpu_custom_call.1} parent=0
    _
  %s5 = ssub.s32 1, %s3
  %s6 = scalar_select 0, %s5, %s3
  $region1: #{tpu_custom_call.1} parent=0
    #allocation2 [shape = 'u8[4096]{0}', space=vmem, size = 0x1000, scoped, tag = 'input window, operand 0, single buffered']
    #allocation3 [shape = 's32[2]{0}', space=sflag, size = 0x8, scoped, tag = 'scoped memory for tpu_custom_call.1']
    #allocation4 [shape = 's32[2]{0}', space=sflag, size = 0x8, scoped, tag = 'scoped memory for tpu_custom_call.1']
    #allocation5 [shape = 'u8[1048576]{0}', space=vmem, size = 0x100000, scoped, tag = 'input window, operand 1']
    #allocation6 [shape = 's32[2]{0}', space=sflag, size = 0x8, scoped, tag = 'scoped memory for tpu_custom_call.1']
    #allocation7 [shape = 'u8[1048576]{0}', space=vmem, size = 0x100000, scoped, tag = 'output window, operand 0']
    %7 = vsyncpa [#allocation3], 0
    %8 = vsyncpa [#allocation6], 0
    %s9 = scalar_lea.sflag [#allocation6], 1
    %10 = vsyncpa %s9, 0
    %11 = vsyncpa [#allocation4], 0
    %s12 = scalar_lea.sflag [#allocation4], 1
    %13 = vsyncpa %s12, 0
    loop: start=0, step=1, limit=6
    $region2: #{tpu_custom_call.1} parent=1 // loop_pre_header
      _
    $region3: #{tpu_custom_call.1} parent=1 // loop_header
      %s15 = sphi 0, %s19
      %p16 = scmp.ge.s32.totalorder %s15, 6
      %s23 = sphi 0, %s23
      %s25 = sphi 0, %s23
      %s26 = sphi 0, %s25
      %s40 = sphi 0, %s26
      %s46 = sphi 0, %s48
      %s49 = sphi 0, %s46
      %s50 = sphi 0, %s49
      %s66 = sphi 0, %s50
      %s72 = sphi 0, %s74
      %s75 = sphi 0, %s72
      %s76 = sphi 0, %s75
      %s92 = sphi 0, %s76
    $region4: #{tpu_custom_call.1} parent=1 // loop_header_branch
      %18 = sbr.rel (%p16) target = $region8
    $region5: #{tpu_custom_call.1} parent=1 // loop_body
      %s20 = ssub.s32 %s15, 1
      %s21 = ssub.s32 %s15, 2
      %s22 = sadd.s32 %s15, 1
      %s24 = sadd.s32 %s23, 1
      %p27 = scmp.eq.s32.totalorder %s15, 3
      %p28 = scmp.ne.s32.totalorder %s23, %s25
      %p29 = scmp.eq.s32.totalorder %s15, 0
      %p30 = por %p28, %p29
      %p31 = scmp.ne.s32.totalorder %s23, %s25
      %p32 = scmp.eq.s32.totalorder %s20, 3
      %p33 = por %p31, %p32
      %p34 = scmp.ne.s32.totalorder %s25, %s26
      %p35 = scmp.eq.s32.totalorder %s20, 0
      %p36 = por %p34, %p35
      %p37 = scmp.ne.s32.totalorder %s25, %s26
      %p38 = scmp.eq.s32.totalorder %s21, 3
      %p39 = por %p37, %p38
      %p41 = scmp.ne.s32.totalorder %s26, %s40
      %p42 = scmp.eq.s32.totalorder %s21, 0
      %p43 = por %p41, %p42
      %s44 = ssub.s32 %s15, %s22
      %p45 = scmp.eq.s32.totalorder %s44, 0
      %s47 = sadd.s32 %s46, 1
      %s48 = scalar_select %p45, %s46, %s47
      %p51 = pneg %p45
      %p52 = scmp.eq.s32.totalorder %s15, 3
      %p53 = por %p51, %p52
      %p54 = scmp.ne.s32.totalorder %s46, %s49
      %p55 = scmp.eq.s32.totalorder %s15, 0
      %p56 = por %p54, %p55
      %p57 = scmp.ne.s32.totalorder %s46, %s49
      %p58 = scmp.eq.s32.totalorder %s20, 3
      %p59 = por %p57, %p58
      %p60 = scmp.ne.s32.totalorder %s49, %s50
      %p61 = scmp.eq.s32.totalorder %s20, 0
      %p62 = por %p60, %p61
      %p63 = scmp.ne.s32.totalorder %s49, %s50
      %p64 = scmp.eq.s32.totalorder %s21, 3
      %p65 = por %p63, %p64
      %p67 = scmp.ne.s32.totalorder %s50, %s66
      %p68 = scmp.eq.s32.totalorder %s21, 0
      %p69 = por %p67, %p68
      %s70 = ssub.s32 %s15, %s22
      %p71 = scmp.eq.s32.totalorder %s70, 0
      %s73 = sadd.s32 %s72, 1
      %s74 = scalar_select %p71, %s72, %s73
      %p77 = pneg %p71
      %p78 = scmp.eq.s32.totalorder %s15, 3
      %p79 = por %p77, %p78
      %p80 = scmp.ne.s32.totalorder %s72, %s75
      %p81 = scmp.eq.s32.totalorder %s15, 0
      %p82 = por %p80, %p81
      %p83 = scmp.ne.s32.totalorder %s72, %s75
      %p84 = scmp.eq.s32.totalorder %s20, 3
      %p85 = por %p83, %p84
      %p86 = scmp.ne.s32.totalorder %s75, %s76
      %p87 = scmp.eq.s32.totalorder %s20, 0
      %p88 = por %p86, %p87
      %p89 = scmp.ne.s32.totalorder %s75, %s76
      %p90 = scmp.eq.s32.totalorder %s21, 3
      %p91 = por %p89, %p90
      %p93 = scmp.ne.s32.totalorder %s76, %s92
      %p94 = scmp.eq.s32.totalorder %s21, 0
      %p95 = por %p93, %p94
      %p96 = scmp.le.s32.totalorder 1, %s15
      %p97 = scmp.lt.s32.totalorder %s15, 5
      %p98 = pnand %p96, %p97
      %p99 = pneg %p98
      // Predicated region
      $region9: #{tpu_custom_call.1} parent=5 // pred_check
        _
      $region10: #{tpu_custom_call.1} parent=5 // pred_check_branch
        %101 = sbr.rel (%p98) target = $region12
      $region11: #{tpu_custom_call.1} parent=5 // pred_region
        %s102 = ssub.s32 %s15, 1
        // Predicated region
        $region13: #{tpu_custom_call.1} parent=11 // pred_check
          %p103 = pneg %p36
        $region14: #{tpu_custom_call.1} parent=11 // pred_check_branch
          %105 = sbr.rel (%p103) target = $region16
        $region15: #{tpu_custom_call.1} parent=11 // pred_region
          %s107 = ssub.s32 128, 128
          %108 = vsyncadd [#allocation3], %s107
          %s110 = sshll.u32 [#allocation2], 4
          %s111 = int_to_ptr.vmem [resolvable:$true] %s110
          %113 = dma.hbm_to_vmem [thread:$0]  %s0, 128, %s111, [#allocation3]
        $region16: #{tpu_custom_call.1} parent=11 // pred_fallthru
          _
      $region12: #{tpu_custom_call.1} parent=5 // pred_fallthru
        _
      %p114 = scmp.lt.s32.totalorder %s15, 4
      // Predicated region
      $region17: #{tpu_custom_call.1} parent=5 // pred_check
        %p115 = pneg %p114
      $region18: #{tpu_custom_call.1} parent=5 // pred_check_branch
        %117 = sbr.rel (%p115) target = $region20
      $region19: #{tpu_custom_call.1} parent=5 // pred_region
        // Predicated region
        $region21: #{tpu_custom_call.1} parent=19 // pred_check
          %p118 = pneg %p56
        $region22: #{tpu_custom_call.1} parent=19 // pred_check_branch
          %120 = sbr.rel (%p118) target = $region24
        $region23: #{tpu_custom_call.1} parent=19 // pred_region
          %s121 = sand.u32 %s46, 1
          %s122 = scalar_lea.sflag [#allocation6], %s121
          %s123 = sand.u32 %s46, 1
          %s124 = smul.addr %s123, 1024
          %s125 = scalar_lea.vmem [#allocation5], %s124
          %s126 = smul.u32 128, %s15
          %s128 = ssub.s32 16384, 16384
          %129 = vsyncadd %s122, %s128
          %s130 = smul.addr %s126, 128
          %s131 = scalar_lea.hbm %s1, %s130
          %s133 = sshll.u32 %s125, 4
          %s134 = int_to_ptr.vmem [resolvable:$true] %s133
          %136 = dma.hbm_to_vmem [thread:$0]  %s131, 16384, %s134, %s122
        $region24: #{tpu_custom_call.1} parent=19 // pred_fallthru
          _
      $region20: #{tpu_custom_call.1} parent=5 // pred_fallthru
        _
      %p137 = scmp.le.s32.totalorder 1, %s15
      %p138 = scmp.lt.s32.totalorder %s15, 5
      %p139 = pnand %p137, %p138
      %p140 = pneg %p139
      // Predicated region
      $region25: #{tpu_custom_call.1} parent=5 // pred_check
        _
      $region26: #{tpu_custom_call.1} parent=5 // pred_check_branch
        %142 = sbr.rel (%p139) target = $region28
      $region27: #{tpu_custom_call.1} parent=5 // pred_region
        %s143 = ssub.s32 %s15, 1
        // Predicated region
        $region29: #{tpu_custom_call.1} parent=27 // pred_check
          %p144 = pneg %p36
        $region30: #{tpu_custom_call.1} parent=27 // pred_check_branch
          %146 = sbr.rel (%p144) target = $region32
        $region31: #{tpu_custom_call.1} parent=27 // pred_region
          %147 = dma.done [#allocation3], 128
        $region32: #{tpu_custom_call.1} parent=27 // pred_fallthru
          _
        %s148 = sand.u32 %s49, 1
        %s149 = scalar_lea.sflag [#allocation6], %s148
        %s150 = sand.u32 %s49, 1
        %s151 = smul.addr %s150, 1024
        %s152 = scalar_lea.vmem [#allocation5], %s151
        // Predicated region
        $region33: #{tpu_custom_call.1} parent=27 // pred_check
          %p153 = pneg %p62
        $region34: #{tpu_custom_call.1} parent=27 // pred_check_branch
          %155 = sbr.rel (%p153) target = $region36
        $region35: #{tpu_custom_call.1} parent=27 // pred_region
          %156 = dma.done %s149, 16384
        $region36: #{tpu_custom_call.1} parent=27 // pred_fallthru
          _
        %p157 = pneg %p36
        %p158 = pneg %p33
        %s159 = sand.u32 %s49, 1
        %s160 = scalar_lea.sflag [#allocation6], %s159
        %s161 = sand.u32 %s49, 1
        %s162 = smul.addr %s161, 1024
        %s163 = scalar_lea.vmem [#allocation5], %s162
        %p164 = pneg %p62
        %p165 = pneg %p59
        %p166 = pneg %p88
        %p167 = pneg %p85
        %s168 = sand.u32 %s75, 1
        %s169 = scalar_lea.sflag [#allocation4], %s168
        %s170 = sand.u32 %s75, 1
        %s171 = smul.addr %s170, 1024
        %s172 = scalar_lea.vmem [#allocation7], %s171
        %s173 = smul.u32 128, %s20
        %s174 = smul.u32 128, %s20
        %v175 = vld [vmem:[#allocation2] sm:$0xff]
        %v176 = vld [vmem:[%s152] sm:$0xff]
        %v177 = vld [vmem:[%s152 + $0x8] sm:$0xff]
        %v178 = vld [vmem:[%s152 + $0x10] sm:$0xff]
        %v179 = vld [vmem:[%s152 + $0x18] sm:$0xff]
        %v180 = vld [vmem:[%s152 + $0x20] sm:$0xff]
        %v181 = vld [vmem:[%s152 + $0x28] sm:$0xff]
        %v182 = vld [vmem:[%s152 + $0x30] sm:$0xff]
        %v183 = vld [vmem:[%s152 + $0x38] sm:$0xff]
        %v184 = vld [vmem:[%s152 + $0x40] sm:$0xff]
        %v185 = vld [vmem:[%s152 + $0x48] sm:$0xff]
        %v186 = vld [vmem:[%s152 + $0x50] sm:$0xff]
        %v187 = vld [vmem:[%s152 + $0x58] sm:$0xff]
        %v188 = vld [vmem:[%s152 + $0x60] sm:$0xff]
        %v189 = vld [vmem:[%s152 + $0x68] sm:$0xff]
        %v190 = vld [vmem:[%s152 + $0x70] sm:$0xff]
        %v191 = vld [vmem:[%s152 + $0x78] sm:$0xff]
        %v192 = vld [vmem:[%s152 + $0x80] sm:$0xff]
        %v193 = vld [vmem:[%s152 + $0x88] sm:$0xff]
        %v194 = vld [vmem:[%s152 + $0x90] sm:$0xff]
        %v195 = vld [vmem:[%s152 + $0x98] sm:$0xff]
        %v196 = vld [vmem:[%s152 + $0xa0] sm:$0xff]
        %v197 = vld [vmem:[%s152 + $0xa8] sm:$0xff]
        %v198 = vld [vmem:[%s152 + $0xb0] sm:$0xff]
        %v199 = vld [vmem:[%s152 + $0xb8] sm:$0xff]
        %v200 = vld [vmem:[%s152 + $0xc0] sm:$0xff]
        %v201 = vld [vmem:[%s152 + $0xc8] sm:$0xff]
        %v202 = vld [vmem:[%s152 + $0xd0] sm:$0xff]
        %v203 = vld [vmem:[%s152 + $0xd8] sm:$0xff]
        %v204 = vld [vmem:[%s152 + $0xe0] sm:$0xff]
        %v205 = vld [vmem:[%s152 + $0xe8] sm:$0xff]
        %v206 = vld [vmem:[%s152 + $0xf0] sm:$0xff]
        %v207 = vld [vmem:[%s152 + $0xf8] sm:$0xff]
        %v208 = vld [vmem:[%s152 + $0x100] sm:$0xff]
        %v209 = vld [vmem:[%s152 + $0x108] sm:$0xff]
        %v210 = vld [vmem:[%s152 + $0x110] sm:$0xff]
        %v211 = vld [vmem:[%s152 + $0x118] sm:$0xff]
        %v212 = vld [vmem:[%s152 + $0x120] sm:$0xff]
        %v213 = vld [vmem:[%s152 + $0x128] sm:$0xff]
        %v214 = vld [vmem:[%s152 + $0x130] sm:$0xff]
        %v215 = vld [vmem:[%s152 + $0x138] sm:$0xff]
        %v216 = vld [vmem:[%s152 + $0x140] sm:$0xff]
        %v217 = vld [vmem:[%s152 + $0x148] sm:$0xff]
        %v218 = vld [vmem:[%s152 + $0x150] sm:$0xff]
        %v219 = vld [vmem:[%s152 + $0x158] sm:$0xff]
        %v220 = vld [vmem:[%s152 + $0x160] sm:$0xff]
        %v221 = vld [vmem:[%s152 + $0x168] sm:$0xff]
        %v222 = vld [vmem:[%s152 + $0x170] sm:$0xff]
        %v223 = vld [vmem:[%s152 + $0x178] sm:$0xff]
        %v224 = vld [vmem:[%s152 + $0x180] sm:$0xff]
        %v225 = vld [vmem:[%s152 + $0x188] sm:$0xff]
        %v226 = vld [vmem:[%s152 + $0x190] sm:$0xff]
        %v227 = vld [vmem:[%s152 + $0x198] sm:$0xff]
        %v228 = vld [vmem:[%s152 + $0x1a0] sm:$0xff]
        %v229 = vld [vmem:[%s152 + $0x1a8] sm:$0xff]
        %v230 = vld [vmem:[%s152 + $0x1b0] sm:$0xff]
        %v231 = vld [vmem:[%s152 + $0x1b8] sm:$0xff]
        %v232 = vld [vmem:[%s152 + $0x1c0] sm:$0xff]
        %v233 = vld [vmem:[%s152 + $0x1c8] sm:$0xff]
        %v234 = vld [vmem:[%s152 + $0x1d0] sm:$0xff]
        %v235 = vld [vmem:[%s152 + $0x1d8] sm:$0xff]
        %v236 = vld [vmem:[%s152 + $0x1e0] sm:$0xff]
        %v237 = vld [vmem:[%s152 + $0x1e8] sm:$0xff]
        %v238 = vld [vmem:[%s152 + $0x1f0] sm:$0xff]
        %v239 = vld [vmem:[%s152 + $0x1f8] sm:$0xff]
        %v240 = vld [vmem:[%s152 + $0x200] sm:$0xff]
        %v241 = vld [vmem:[%s152 + $0x208] sm:$0xff]
        %v242 = vld [vmem:[%s152 + $0x210] sm:$0xff]
        %v243 = vld [vmem:[%s152 + $0x218] sm:$0xff]
        %v244 = vld [vmem:[%s152 + $0x220] sm:$0xff]
        %v245 = vld [vmem:[%s152 + $0x228] sm:$0xff]
        %v246 = vld [vmem:[%s152 + $0x230] sm:$0xff]
        %v247 = vld [vmem:[%s152 + $0x238] sm:$0xff]
        %v248 = vld [vmem:[%s152 + $0x240] sm:$0xff]
        %v249 = vld [vmem:[%s152 + $0x248] sm:$0xff]
        %v250 = vld [vmem:[%s152 + $0x250] sm:$0xff]
        %v251 = vld [vmem:[%s152 + $0x258] sm:$0xff]
        %v252 = vld [vmem:[%s152 + $0x260] sm:$0xff]
        %v253 = vld [vmem:[%s152 + $0x268] sm:$0xff]
        %v254 = vld [vmem:[%s152 + $0x270] sm:$0xff]
        %v255 = vld [vmem:[%s152 + $0x278] sm:$0xff]
        %v256 = vld [vmem:[%s152 + $0x280] sm:$0xff]
        %v257 = vld [vmem:[%s152 + $0x288] sm:$0xff]
        %v258 = vld [vmem:[%s152 + $0x290] sm:$0xff]
        %v259 = vld [vmem:[%s152 + $0x298] sm:$0xff]
        %v260 = vld [vmem:[%s152 + $0x2a0] sm:$0xff]
        %v261 = vld [vmem:[%s152 + $0x2a8] sm:$0xff]
        %v262 = vld [vmem:[%s152 + $0x2b0] sm:$0xff]
        %v263 = vld [vmem:[%s152 + $0x2b8] sm:$0xff]
        %v264 = vld [vmem:[%s152 + $0x2c0] sm:$0xff]
        %v265 = vld [vmem:[%s152 + $0x2c8] sm:$0xff]
        %v266 = vld [vmem:[%s152 + $0x2d0] sm:$0xff]
        %v267 = vld [vmem:[%s152 + $0x2d8] sm:$0xff]
        %v268 = vld [vmem:[%s152 + $0x2e0] sm:$0xff]
        %v269 = vld [vmem:[%s152 + $0x2e8] sm:$0xff]
        %v270 = vld [vmem:[%s152 + $0x2f0] sm:$0xff]
        %v271 = vld [vmem:[%s152 + $0x2f8] sm:$0xff]
        %v272 = vld [vmem:[%s152 + $0x300] sm:$0xff]
        %v273 = vld [vmem:[%s152 + $0x308] sm:$0xff]
        %v274 = vld [vmem:[%s152 + $0x310] sm:$0xff]
        %v275 = vld [vmem:[%s152 + $0x318] sm:$0xff]
        %v276 = vld [vmem:[%s152 + $0x320] sm:$0xff]
        %v277 = vld [vmem:[%s152 + $0x328] sm:$0xff]
        %v278 = vld [vmem:[%s152 + $0x330] sm:$0xff]
        %v279 = vld [vmem:[%s152 + $0x338] sm:$0xff]
        %v280 = vld [vmem:[%s152 + $0x340] sm:$0xff]
        %v281 = vld [vmem:[%s152 + $0x348] sm:$0xff]
        %v282 = vld [vmem:[%s152 + $0x350] sm:$0xff]
        %v283 = vld [vmem:[%s152 + $0x358] sm:$0xff]
        %v284 = vld [vmem:[%s152 + $0x360] sm:$0xff]
        %v285 = vld [vmem:[%s152 + $0x368] sm:$0xff]
        %v286 = vld [vmem:[%s152 + $0x370] sm:$0xff]
        %v287 = vld [vmem:[%s152 + $0x378] sm:$0xff]
        %v288 = vld [vmem:[%s152 + $0x380] sm:$0xff]
        %v289 = vld [vmem:[%s152 + $0x388] sm:$0xff]
        %v290 = vld [vmem:[%s152 + $0x390] sm:$0xff]
        %v291 = vld [vmem:[%s152 + $0x398] sm:$0xff]
        %v292 = vld [vmem:[%s152 + $0x3a0] sm:$0xff]
        %v293 = vld [vmem:[%s152 + $0x3a8] sm:$0xff]
        %v294 = vld [vmem:[%s152 + $0x3b0] sm:$0xff]
        %v295 = vld [vmem:[%s152 + $0x3b8] sm:$0xff]
        %v296 = vld [vmem:[%s152 + $0x3c0] sm:$0xff]
        %v297 = vld [vmem:[%s152 + $0x3c8] sm:$0xff]
        %v298 = vld [vmem:[%s152 + $0x3d0] sm:$0xff]
        %v299 = vld [vmem:[%s152 + $0x3d8] sm:$0xff]
        %v300 = vld [vmem:[%s152 + $0x3e0] sm:$0xff]
        %v301 = vld [vmem:[%s152 + $0x3e8] sm:$0xff]
        %v302 = vld [vmem:[%s152 + $0x3f0] sm:$0xff]
        %v303 = vld [vmem:[%s152 + $0x3f8] sm:$0xff]
        %vm304 = vcmask 64512
        %v306 = vsel %vm304, %v175, 0
        %308 = vmatprep.subr.mxu0 %v177
        %309 = vmatpush1.msra.mxu0 %v176
        %310 = vmatprep.subr.mxu0 0.0
        %311 = vmatpush1.msra.mxu0 0.0
        %312 = vmatprep.subr.mxu0 0.0
        %313 = vmatpush1.msra.mxu0 0.0
        %314 = vmatprep.subr.mxu0 0.0
        %315 = vmatpush1.msra.mxu0 0.0
        %316 = vmatprep.subr.mxu0 0.0
        %317 = vmatpush1.msra.mxu0 0.0
        %318 = vmatprep.subr.mxu0 0.0
        %319 = vmatpush1.msra.mxu0 0.0
        %320 = vmatprep.subr.mxu0 0.0
        %321 = vmatpush1.msra.mxu0 0.0
        %322 = vmatprep.subr.mxu0 0.0
        %323 = vmatpush1.msra.mxu0 0.0
        %324 = vmatprep.subr.mxu0 0.0
        %325 = vmatpush1.msra.mxu0 0.0
        %326 = vmatprep.subr.mxu0 0.0
        %327 = vmatpush1.msra.mxu0 0.0
        %328 = vmatprep.subr.mxu0 0.0
        %329 = vmatpush1.msra.mxu0 0.0
        %330 = vmatprep.subr.mxu0 0.0
        %331 = vmatpush1.msra.mxu0 0.0
        %332 = vmatprep.subr.mxu0 0.0
        %333 = vmatpush1.msra.mxu0 0.0
        %334 = vmatprep.subr.mxu0 0.0
        %335 = vmatpush1.msra.mxu0 0.0
        %336 = vmatprep.subr.mxu0 0.0
        %337 = vmatpush1.msra.mxu0 0.0
        %338 = vmatprep.subr.mxu0 0.0
        %339 = vmatpush1.msra.mxu0 0.0
        %340 = vmatprep.subr.mxu0 0.0
        %341 = vmatpush1.msra.mxu0 0.0
        %342 = vmatprep.subr.mxu0 0.0
        %343 = vmatpush1.msra.mxu0 0.0
        %344 = vmatprep.subr.mxu0 0.0
        %345 = vmatpush1.msra.mxu0 0.0
        %346 = vmatprep.subr.mxu0 0.0
        %347 = vmatpush1.msra.mxu0 0.0
        %348 = vmatprep.subr.mxu0 0.0
        %349 = vmatpush1.msra.mxu0 0.0
        %350 = vmatprep.subr.mxu0 0.0
        %351 = vmatpush1.msra.mxu0 0.0
        %352 = vmatprep.subr.mxu0 0.0
        %353 = vmatpush1.msra.mxu0 0.0
        %354 = vmatprep.subr.mxu0 0.0
        %355 = vmatpush1.msra.mxu0 0.0
        %356 = vmatprep.subr.mxu0 0.0
        %357 = vmatpush1.msra.mxu0 0.0
        %358 = vmatprep.subr.mxu0 0.0
        %359 = vmatpush1.msra.mxu0 0.0
        %360 = vmatprep.subr.mxu0 0.0
        %361 = vmatpush1.msra.mxu0 0.0
        %362 = vmatprep.subr.mxu0 0.0
        %363 = vmatpush1.msra.mxu0 0.0
        %364 = vmatprep.subr.mxu0 0.0
        %365 = vmatpush1.msra.mxu0 0.0
        %366 = vmatprep.subr.mxu0 0.0
        %367 = vmatpush1.msra.mxu0 0.0
        %368 = vmatprep.subr.mxu0 0.0
        %369 = vmatpush1.msra.mxu0 0.0
        %370 = vmatprep.subr.mxu0 0.0
        %371 = vmatpush1.msra.mxu0 0.0
        %372 = vmatprep.mubr.f32.mxu0 0.0
        %373 = vmatmul.mubr.f32.gmra.mrb[0].mxu0 %v306
        %v374 = vpop.f32.mrb[0].mxu0
        %v375 = vadd.f32 0.0, %v374
        %v376 = vpop.f32.mrb[0].mxu0
        %v377 = vadd.f32 0.0, %v376
        %378 = vdwg.mxu0
        %379 = vmatprep.subr.mxu0 %v179
        %380 = vmatpush1.msra.mxu0 %v178
        %381 = vmatprep.subr.mxu0 0.0
        %382 = vmatpush1.msra.mxu0 0.0
        %383 = vmatprep.subr.mxu0 0.0
        %384 = vmatpush1.msra.mxu0 0.0
        %385 = vmatprep.subr.mxu0 0.0
        %386 = vmatpush1.msra.mxu0 0.0
        %387 = vmatprep.subr.mxu0 0.0
        %388 = vmatpush1.msra.mxu0 0.0
        %389 = vmatprep.subr.mxu0 0.0
        %390 = vmatpush1.msra.mxu0 0.0
        %391 = vmatprep.subr.mxu0 0.0
        %392 = vmatpush1.msra.mxu0 0.0
        %393 = vmatprep.subr.mxu0 0.0
        %394 = vmatpush1.msra.mxu0 0.0
        %395 = vmatprep.subr.mxu0 0.0
        %396 = vmatpush1.msra.mxu0 0.0
        %397 = vmatprep.subr.mxu0 0.0
        %398 = vmatpush1.msra.mxu0 0.0
        %399 = vmatprep.subr.mxu0 0.0
        %400 = vmatpush1.msra.mxu0 0.0
        %401 = vmatprep.subr.mxu0 0.0
        %402 = vmatpush1.msra.mxu0 0.0
        %403 = vmatprep.subr.mxu0 0.0
        %404 = vmatpush1.msra.mxu0 0.0
        %405 = vmatprep.subr.mxu0 0.0
        %406 = vmatpush1.msra.mxu0 0.0
        %407 = vmatprep.subr.mxu0 0.0
        %408 = vmatpush1.msra.mxu0 0.0
        %409 = vmatprep.subr.mxu0 0.0
        %410 = vmatpush1.msra.mxu0 0.0
        %411 = vmatprep.subr.mxu0 0.0
        %412 = vmatpush1.msra.mxu0 0.0
        %413 = vmatprep.subr.mxu0 0.0
        %414 = vmatpush1.msra.mxu0 0.0
        %415 = vmatprep.subr.mxu0 0.0
        %416 = vmatpush1.msra.mxu0 0.0
        %417 = vmatprep.subr.mxu0 0.0
        %418 = vmatpush1.msra.mxu0 0.0
        %419 = vmatprep.subr.mxu0 0.0
        %420 = vmatpush1.msra.mxu0 0.0
        %421 = vmatprep.subr.mxu0 0.0
        %422 = vmatpush1.msra.mxu0 0.0
        %423 = vmatprep.subr.mxu0 0.0
        %424 = vmatpush1.msra.mxu0 0.0
        %425 = vmatprep.subr.mxu0 0.0
        %426 = vmatpush1.msra.mxu0 0.0
        %427 = vmatprep.subr.mxu0 0.0
        %428 = vmatpush1.msra.mxu0 0.0
        %429 = vmatprep.subr.mxu0 0.0
        %430 = vmatpush1.msra.mxu0 0.0
        %431 = vmatprep.subr.mxu0 0.0
        %432 = vmatpush1.msra.mxu0 0.0
        %433 = vmatprep.subr.mxu0 0.0
        %434 = vmatpush1.msra.mxu0 0.0
        %435 = vmatprep.subr.mxu0 0.0
        %436 = vmatpush1.msra.mxu0 0.0
        %437 = vmatprep.subr.mxu0 0.0
        %438 = vmatpush1.msra.mxu0 0.0
        %439 = vmatprep.subr.mxu0 0.0
        %440 = vmatpush1.msra.mxu0 0.0
        %441 = vmatprep.subr.mxu0 0.0
        %442 = vmatpush1.msra.mxu0 0.0
        %443 = vmatprep.mubr.f32.mxu0 0.0
        %444 = vmatmul.mubr.f32.gmra.mrb[0].mxu0 %v306
        %v445 = vpop.f32.mrb[0].mxu0
        %v446 = vadd.f32 0.0, %v445
        %v447 = vpop.f32.mrb[0].mxu0
        %v448 = vadd.f32 0.0, %v447
        %449 = vdwg.mxu0
        %450 = vmatprep.subr.mxu0 %v181
        %451 = vmatpush1.msra.mxu0 %v180
        %452 = vmatprep.subr.mxu0 0.0
        %453 = vmatpush1.msra.mxu0 0.0
        %454 = vmatprep.subr.mxu0 0.0
        %455 = vmatpush1.msra.mxu0 0.0
        %456 = vmatprep.subr.mxu0 0.0
        %457 = vmatpush1.msra.mxu0 0.0
        %458 = vmatprep.subr.mxu0 0.0
        %459 = vmatpush1.msra.mxu0 0.0
        %460 = vmatprep.subr.mxu0 0.0
        %461 = vmatpush1.msra.mxu0 0.0
        %462 = vmatprep.subr.mxu0 0.0
        %463 = vmatpush1.msra.mxu0 0.0
        %464 = vmatprep.subr.mxu0 0.0
        %465 = vmatpush1.msra.mxu0 0.0
        %466 = vmatprep.subr.mxu0 0.0
        %467 = vmatpush1.msra.mxu0 0.0
        %468 = vmatprep.subr.mxu0 0.0
        %469 = vmatpush1.msra.mxu0 0.0
        %470 = vmatprep.subr.mxu0 0.0
        %471 = vmatpush1.msra.mxu0 0.0
        %472 = vmatprep.subr.mxu0 0.0
        %473 = vmatpush1.msra.mxu0 0.0
        %474 = vmatprep.subr.mxu0 0.0
        %475 = vmatpush1.msra.mxu0 0.0
        %476 = vmatprep.subr.mxu0 0.0
        %477 = vmatpush1.msra.mxu0 0.0
        %478 = vmatprep.subr.mxu0 0.0
        %479 = vmatpush1.msra.mxu0 0.0
        %480 = vmatprep.subr.mxu0 0.0
        %481 = vmatpush1.msra.mxu0 0.0
        %482 = vmatprep.subr.mxu0 0.0
        %483 = vmatpush1.msra.mxu0 0.0
        %484 = vmatprep.subr.mxu0 0.0
        %485 = vmatpush1.msra.mxu0 0.0
        %486 = vmatprep.subr.mxu0 0.0
        %487 = vmatpush1.msra.mxu0 0.0
        %488 = vmatprep.subr.mxu0 0.0
        %489 = vmatpush1.msra.mxu0 0.0
        %490 = vmatprep.subr.mxu0 0.0
        %491 = vmatpush1.msra.mxu0 0.0
        %492 = vmatprep.subr.mxu0 0.0
        %493 = vmatpush1.msra.mxu0 0.0
        %494 = vmatprep.subr.mxu0 0.0
        %495 = vmatpush1.msra.mxu0 0.0
        %496 = vmatprep.subr.mxu0 0.0
        %497 = vmatpush1.msra.mxu0 0.0
        %498 = vmatprep.subr.mxu0 0.0
        %499 = vmatpush1.msra.mxu0 0.0
        %500 = vmatprep.subr.mxu0 0.0
        %501 = vmatpush1.msra.mxu0 0.0
        %502 = vmatprep.subr.mxu0 0.0
        %503 = vmatpush1.msra.mxu0 0.0
        %504 = vmatprep.subr.mxu0 0.0
        %505 = vmatpush1.msra.mxu0 0.0
        %506 = vmatprep.subr.mxu0 0.0
        %507 = vmatpush1.msra.mxu0 0.0
        %508 = vmatprep.subr.mxu0 0.0
        %509 = vmatpush1.msra.mxu0 0.0
        %510 = vmatprep.subr.mxu0 0.0
        %511 = vmatpush1.msra.mxu0 0.0
        %512 = vmatprep.subr.mxu0 0.0
        %513 = vmatpush1.msra.mxu0 0.0
        %514 = vmatprep.mubr.f32.mxu0 0.0
        %515 = vmatmul.mubr.f32.gmra.mrb[0].mxu0 %v306
        %v516 = vpop.f32.mrb[0].mxu0
        %v517 = vadd.f32 0.0, %v516
        %v518 = vpop.f32.mrb[0].mxu0
        %v519 = vadd.f32 0.0, %v518
        %520 = vdwg.mxu0
        %521 = vmatprep.subr.mxu0 %v183
        %522 = vmatpush1.msra.mxu0 %v182
        %523 = vmatprep.subr.mxu0 0.0
        %524 = vmatpush1.msra.mxu0 0.0
        %525 = vmatprep.subr.mxu0 0.0
        %526 = vmatpush1.msra.mxu0 0.0
        %527 = vmatprep.subr.mxu0 0.0
        %528 = vmatpush1.msra.mxu0 0.0
        %529 = vmatprep.subr.mxu0 0.0
        %530 = vmatpush1.msra.mxu0 0.0
        %531 = vmatprep.subr.mxu0 0.0
        %532 = vmatpush1.msra.mxu0 0.0
        %533 = vmatprep.subr.mxu0 0.0
        %534 = vmatpush1.msra.mxu0 0.0
        %535 = vmatprep.subr.mxu0 0.0
        %536 = vmatpush1.msra.mxu0 0.0
        %537 = vmatprep.subr.mxu0 0.0
        %538 = vmatpush1.msra.mxu0 0.0
        %539 = vmatprep.subr.mxu0 0.0
        %540 = vmatpush1.msra.mxu0 0.0
        %541 = vmatprep.subr.mxu0 0.0
        %542 = vmatpush1.msra.mxu0 0.0
        %543 = vmatprep.subr.mxu0 0.0
        %544 = vmatpush1.msra.mxu0 0.0
        %545 = vmatprep.subr.mxu0 0.0
        %546 = vmatpush1.msra.mxu0 0.0
        %547 = vmatprep.subr.mxu0 0.0
        %548 = vmatpush1.msra.mxu0 0.0
        %549 = vmatprep.subr.mxu0 0.0
        %550 = vmatpush1.msra.mxu0 0.0
        %551 = vmatprep.subr.mxu0 0.0
        %552 = vmatpush1.msra.mxu0 0.0
        %553 = vmatprep.subr.mxu0 0.0
        %554 = vmatpush1.msra.mxu0 0.0
        %555 = vmatprep.subr.mxu0 0.0
        %556 = vmatpush1.msra.mxu0 0.0
        %557 = vmatprep.subr.mxu0 0.0
        %558 = vmatpush1.msra.mxu0 0.0
        %559 = vmatprep.subr.mxu0 0.0
        %560 = vmatpush1.msra.mxu0 0.0
        %561 = vmatprep.subr.mxu0 0.0
        %562 = vmatpush1.msra.mxu0 0.0
        %563 = vmatprep.subr.mxu0 0.0
        %564 = vmatpush1.msra.mxu0 0.0
        %565 = vmatprep.subr.mxu0 0.0
        %566 = vmatpush1.msra.mxu0 0.0
        %567 = vmatprep.subr.mxu0 0.0
        %568 = vmatpush1.msra.mxu0 0.0
        %569 = vmatprep.subr.mxu0 0.0
        %570 = vmatpush1.msra.mxu0 0.0
        %571 = vmatprep.subr.mxu0 0.0
        %572 = vmatpush1.msra.mxu0 0.0
        %573 = vmatprep.subr.mxu0 0.0
        %574 = vmatpush1.msra.mxu0 0.0
        %575 = vmatprep.subr.mxu0 0.0
        %576 = vmatpush1.msra.mxu0 0.0
        %577 = vmatprep.subr.mxu0 0.0
        %578 = vmatpush1.msra.mxu0 0.0
        %579 = vmatprep.subr.mxu0 0.0
        %580 = vmatpush1.msra.mxu0 0.0
        %581 = vmatprep.subr.mxu0 0.0
        %582 = vmatpush1.msra.mxu0 0.0
        %583 = vmatprep.subr.mxu0 0.0
        %584 = vmatpush1.msra.mxu0 0.0
        %585 = vmatprep.mubr.f32.mxu0 0.0
        %586 = vmatmul.mubr.f32.gmra.mrb[0].mxu0 %v306
        %v587 = vpop.f32.mrb[0].mxu0
        %v588 = vadd.f32 0.0, %v587
        %v589 = vpop.f32.mrb[0].mxu0
        %v590 = vadd.f32 0.0, %v589
        %591 = vdwg.mxu0
        %592 = vmatprep.subr.mxu0 %v185
        %593 = vmatpush1.msra.mxu0 %v184
        %594 = vmatprep.subr.mxu0 0.0
        %595 = vmatpush1.msra.mxu0 0.0
        %596 = vmatprep.subr.mxu0 0.0
        %597 = vmatpush1.msra.mxu0 0.0
        %598 = vmatprep.subr.mxu0 0.0
        %599 = vmatpush1.msra.mxu0 0.0
        %600 = vmatprep.subr.mxu0 0.0
        %601 = vmatpush1.msra.mxu0 0.0
        %602 = vmatprep.subr.mxu0 0.0
        %603 = vmatpush1.msra.mxu0 0.0
        %604 = vmatprep.subr.mxu0 0.0
        %605 = vmatpush1.msra.mxu0 0.0
        %606 = vmatprep.subr.mxu0 0.0
        %607 = vmatpush1.msra.mxu0 0.0
        %608 = vmatprep.subr.mxu0 0.0
        %609 = vmatpush1.msra.mxu0 0.0
        %610 = vmatprep.subr.mxu0 0.0
        %611 = vmatpush1.msra.mxu0 0.0
        %612 = vmatprep.subr.mxu0 0.0
        %613 = vmatpush1.msra.mxu0 0.0
        %614 = vmatprep.subr.mxu0 0.0
        %615 = vmatpush1.msra.mxu0 0.0
        %616 = vmatprep.subr.mxu0 0.0
        %617 = vmatpush1.msra.mxu0 0.0
        %618 = vmatprep.subr.mxu0 0.0
        %619 = vmatpush1.msra.mxu0 0.0
        %620 = vmatprep.subr.mxu0 0.0
        %621 = vmatpush1.msra.mxu0 0.0
        %622 = vmatprep.subr.mxu0 0.0
        %623 = vmatpush1.msra.mxu0 0.0
        %624 = vmatprep.subr.mxu0 0.0
        %625 = vmatpush1.msra.mxu0 0.0
        %626 = vmatprep.subr.mxu0 0.0
        %627 = vmatpush1.msra.mxu0 0.0
        %628 = vmatprep.subr.mxu0 0.0
        %629 = vmatpush1.msra.mxu0 0.0
        %630 = vmatprep.subr.mxu0 0.0
        %631 = vmatpush1.msra.mxu0 0.0
        %632 = vmatprep.subr.mxu0 0.0
        %633 = vmatpush1.msra.mxu0 0.0
        %634 = vmatprep.subr.mxu0 0.0
        %635 = vmatpush1.msra.mxu0 0.0
        %636 = vmatprep.subr.mxu0 0.0
        %637 = vmatpush1.msra.mxu0 0.0
        %638 = vmatprep.subr.mxu0 0.0
        %639 = vmatpush1.msra.mxu0 0.0
        %640 = vmatprep.subr.mxu0 0.0
        %641 = vmatpush1.msra.mxu0 0.0
        %642 = vmatprep.subr.mxu0 0.0
        %643 = vmatpush1.msra.mxu0 0.0
        %644 = vmatprep.subr.mxu0 0.0
        %645 = vmatpush1.msra.mxu0 0.0
        %646 = vmatprep.subr.mxu0 0.0
        %647 = vmatpush1.msra.mxu0 0.0
        %648 = vmatprep.subr.mxu0 0.0
        %649 = vmatpush1.msra.mxu0 0.0
        %650 = vmatprep.subr.mxu0 0.0
        %651 = vmatpush1.msra.mxu0 0.0
        %652 = vmatprep.subr.mxu0 0.0
        %653 = vmatpush1.msra.mxu0 0.0
        %654 = vmatprep.subr.mxu0 0.0
        %655 = vmatpush1.msra.mxu0 0.0
        %656 = vmatprep.mubr.f32.mxu0 0.0
        %657 = vmatmul.mubr.f32.gmra.mrb[0].mxu0 %v306
        %v658 = vpop.f32.mrb[0].mxu0
        %v659 = vadd.f32 0.0, %v658
        %v660 = vpop.f32.mrb[0].mxu0
        %v661 = vadd.f32 0.0, %v660
        %662 = vdwg.mxu0
        %663 = vmatprep.subr.mxu0 %v187
        %664 = vmatpush1.msra.mxu0 %v186
        %665 = vmatprep.subr.mxu0 0.0
        %666 = vmatpush1.msra.mxu0 0.0
        %667 = vmatprep.subr.mxu0 0.0
        %668 = vmatpush1.msra.mxu0 0.0
        %669 = vmatprep.subr.mxu0 0.0
        %670 = vmatpush1.msra.mxu0 0.0
        %671 = vmatprep.subr.mxu0 0.0
        %672 = vmatpush1.msra.mxu0 0.0
        %673 = vmatprep.subr.mxu0 0.0
        %674 = vmatpush1.msra.mxu0 0.0
        %675 = vmatprep.subr.mxu0 0.0
        %676 = vmatpush1.msra.mxu0 0.0
        %677 = vmatprep.subr.mxu0 0.0
        %678 = vmatpush1.msra.mxu0 0.0
        %679 = vmatprep.subr.mxu0 0.0
        %680 = vmatpush1.msra.mxu0 0.0
        %681 = vmatprep.subr.mxu0 0.0
        %682 = vmatpush1.msra.mxu0 0.0
        %683 = vmatprep.subr.mxu0 0.0
        %684 = vmatpush1.msra.mxu0 0.0
        %685 = vmatprep.subr.mxu0 0.0
        %686 = vmatpush1.msra.mxu0 0.0
        %687 = vmatprep.subr.mxu0 0.0
        %688 = vmatpush1.msra.mxu0 0.0
        %689 = vmatprep.subr.mxu0 0.0
        %690 = vmatpush1.msra.mxu0 0.0
        %691 = vmatprep.subr.mxu0 0.0
        %692 = vmatpush1.msra.mxu0 0.0
        %693 = vmatprep.subr.mxu0 0.0
        %694 = vmatpush1.msra.mxu0 0.0
        %695 = vmatprep.subr.mxu0 0.0
        %696 = vmatpush1.msra.mxu0 0.0
        %697 = vmatprep.subr.mxu0 0.0
        %698 = vmatpush1.msra.mxu0 0.0
        %699 = vmatprep.subr.mxu0 0.0
        %700 = vmatpush1.msra.mxu0 0.0
        %701 = vmatprep.subr.mxu0 0.0
        %702 = vmatpush1.msra.mxu0 0.0
        %703 = vmatprep.subr.mxu0 0.0
        %704 = vmatpush1.msra.mxu0 0.0
        %705 = vmatprep.subr.mxu0 0.0
        %706 = vmatpush1.msra.mxu0 0.0
        %707 = vmatprep.subr.mxu0 0.0
        %708 = vmatpush1.msra.mxu0 0.0
        %709 = vmatprep.subr.mxu0 0.0
        %710 = vmatpush1.msra.mxu0 0.0
        %711 = vmatprep.subr.mxu0 0.0
        %712 = vmatpush1.msra.mxu0 0.0
        %713 = vmatprep.subr.mxu0 0.0
        %714 = vmatpush1.msra.mxu0 0.0
        %715 = vmatprep.subr.mxu0 0.0
        %716 = vmatpush1.msra.mxu0 0.0
        %717 = vmatprep.subr.mxu0 0.0
        %718 = vmatpush1.msra.mxu0 0.0
        %719 = vmatprep.subr.mxu0 0.0
        %720 = vmatpush1.msra.mxu0 0.0
        %721 = vmatprep.subr.mxu0 0.0
        %722 = vmatpush1.msra.mxu0 0.0
        %723 = vmatprep.subr.mxu0 0.0
        %724 = vmatpush1.msra.mxu0 0.0
        %725 = vmatprep.subr.mxu0 0.0
        %726 = vmatpush1.msra.mxu0 0.0
        %727 = vmatprep.mubr.f32.mxu0 0.0
        %728 = vmatmul.mubr.f32.gmra.mrb[0].mxu0 %v306
        %v729 = vpop.f32.mrb[0].mxu0
        %v730 = vadd.f32 0.0, %v729
        %v731 = vpop.f32.mrb[0].mxu0
        %v732 = vadd.f32 0.0, %v731
        %733 = vdwg.mxu0
        %734 = vmatprep.subr.mxu0 %v189
        %735 = vmatpush1.msra.mxu0 %v188
        %736 = vmatprep.subr.mxu0 0.0
        %737 = vmatpush1.msra.mxu0 0.0
        %738 = vmatprep.subr.mxu0 0.0
        %739 = vmatpush1.msra.mxu0 0.0
        %740 = vmatprep.subr.mxu0 0.0
        %741 = vmatpush1.msra.mxu0 0.0
        %742 = vmatprep.subr.mxu0 0.0
        %743 = vmatpush1.msra.mxu0 0.0
        %744 = vmatprep.subr.mxu0 0.0
        %745 = vmatpush1.msra.mxu0 0.0
        %746 = vmatprep.subr.mxu0 0.0
        %747 = vmatpush1.msra.mxu0 0.0
        %748 = vmatprep.subr.mxu0 0.0
        %749 = vmatpush1.msra.mxu0 0.0
        %750 = vmatprep.subr.mxu0 0.0
        %751 = vmatpush1.msra.mxu0 0.0
        %752 = vmatprep.subr.mxu0 0.0
        %753 = vmatpush1.msra.mxu0 0.0
        %754 = vmatprep.subr.mxu0 0.0
        %755 = vmatpush1.msra.mxu0 0.0
        %756 = vmatprep.subr.mxu0 0.0
        %757 = vmatpush1.msra.mxu0 0.0
        %758 = vmatprep.subr.mxu0 0.0
        %759 = vmatpush1.msra.mxu0 0.0
        %760 = vmatprep.subr.mxu0 0.0
        %761 = vmatpush1.msra.mxu0 0.0
        %762 = vmatprep.subr.mxu0 0.0
        %763 = vmatpush1.msra.mxu0 0.0
        %764 = vmatprep.subr.mxu0 0.0
        %765 = vmatpush1.msra.mxu0 0.0
        %766 = vmatprep.subr.mxu0 0.0
        %767 = vmatpush1.msra.mxu0 0.0
        %768 = vmatprep.subr.mxu0 0.0
        %769 = vmatpush1.msra.mxu0 0.0
        %770 = vmatprep.subr.mxu0 0.0
        %771 = vmatpush1.msra.mxu0 0.0
        %772 = vmatprep.subr.mxu0 0.0
        %773 = vmatpush1.msra.mxu0 0.0
        %774 = vmatprep.subr.mxu0 0.0
        %775 = vmatpush1.msra.mxu0 0.0
        %776 = vmatprep.subr.mxu0 0.0
        %777 = vmatpush1.msra.mxu0 0.0
        %778 = vmatprep.subr.mxu0 0.0
        %779 = vmatpush1.msra.mxu0 0.0
        %780 = vmatprep.subr.mxu0 0.0
        %781 = vmatpush1.msra.mxu0 0.0
        %782 = vmatprep.subr.mxu0 0.0
        %783 = vmatpush1.msra.mxu0 0.0
        %784 = vmatprep.subr.mxu0 0.0
        %785 = vmatpush1.msra.mxu0 0.0
        %786 = vmatprep.subr.mxu0 0.0
        %787 = vmatpush1.msra.mxu0 0.0
        %788 = vmatprep.subr.mxu0 0.0
        %789 = vmatpush1.msra.mxu0 0.0
        %790 = vmatprep.subr.mxu0 0.0
        %791 = vmatpush1.msra.mxu0 0.0
        %792 = vmatprep.subr.mxu0 0.0
        %793 = vmatpush1.msra.mxu0 0.0
        %794 = vmatprep.subr.mxu0 0.0
        %795 = vmatpush1.msra.mxu0 0.0
        %796 = vmatprep.subr.mxu0 0.0
        %797 = vmatpush1.msra.mxu0 0.0
        %798 = vmatprep.mubr.f32.mxu0 0.0
        %799 = vmatmul.mubr.f32.gmra.mrb[0].mxu0 %v306
        %v800 = vpop.f32.mrb[0].mxu0
        %v801 = vadd.f32 0.0, %v800
        %v802 = vpop.f32.mrb[0].mxu0
        %v803 = vadd.f32 0.0, %v802
        %804 = vdwg.mxu0
        %805 = vmatprep.subr.mxu0 %v191
        %806 = vmatpush1.msra.mxu0 %v190
        %807 = vmatprep.subr.mxu0 0.0
        %808 = vmatpush1.msra.mxu0 0.0
        %809 = vmatprep.subr.mxu0 0.0
        %810 = vmatpush1.msra.mxu0 0.0
        %811 = vmatprep.subr.mxu0 0.0
        %812 = vmatpush1.msra.mxu0 0.0
        %813 = vmatprep.subr.mxu0 0.0
        %814 = vmatpush1.msra.mxu0 0.0
        %815 = vmatprep.subr.mxu0 0.0
        %816 = vmatpush1.msra.mxu0 0.0
        %817 = vmatprep.subr.mxu0 0.0
        %818 = vmatpush1.msra.mxu0 0.0
        %819 = vmatprep.subr.mxu0 0.0
        %820 = vmatpush1.msra.mxu0 0.0
        %821 = vmatprep.subr.mxu0 0.0
        %822 = vmatpush1.msra.mxu0 0.0
        %823 = vmatprep.subr.mxu0 0.0
        %824 = vmatpush1.msra.mxu0 0.0
        %825 = vmatprep.subr.mxu0 0.0
        %826 = vmatpush1.msra.mxu0 0.0
        %827 = vmatprep.subr.mxu0 0.0
        %828 = vmatpush1.msra.mxu0 0.0
        %829 = vmatprep.subr.mxu0 0.0
        %830 = vmatpush1.msra.mxu0 0.0
        %831 = vmatprep.subr.mxu0 0.0
        %832 = vmatpush1.msra.mxu0 0.0
        %833 = vmatprep.subr.mxu0 0.0
        %834 = vmatpush1.msra.mxu0 0.0
        %835 = vmatprep.subr.mxu0 0.0
        %836 = vmatpush1.msra.mxu0 0.0
        %837 = vmatprep.subr.mxu0 0.0
        %838 = vmatpush1.msra.mxu0 0.0
        %839 = vmatprep.subr.mxu0 0.0
        %840 = vmatpush1.msra.mxu0 0.0
        %841 = vmatprep.subr.mxu0 0.0
        %842 = vmatpush1.msra.mxu0 0.0
        %843 = vmatprep.subr.mxu0 0.0
        %844 = vmatpush1.msra.mxu0 0.0
        %845 = vmatprep.subr.mxu0 0.0
        %846 = vmatpush1.msra.mxu0 0.0
        %847 = vmatprep.subr.mxu0 0.0
        %848 = vmatpush1.msra.mxu0 0.0
        %849 = vmatprep.subr.mxu0 0.0
        %850 = vmatpush1.msra.mxu0 0.0
        %851 = vmatprep.subr.mxu0 0.0
        %852 = vmatpush1.msra.mxu0 0.0
        %853 = vmatprep.subr.mxu0 0.0
        %854 = vmatpush1.msra.mxu0 0.0
        %855 = vmatprep.subr.mxu0 0.0
        %856 = vmatpush1.msra.mxu0 0.0
        %857 = vmatprep.subr.mxu0 0.0
        %858 = vmatpush1.msra.mxu0 0.0
        %859 = vmatprep.subr.mxu0 0.0
        %860 = vmatpush1.msra.mxu0 0.0
        %861 = vmatprep.subr.mxu0 0.0
        %862 = vmatpush1.msra.mxu0 0.0
        %863 = vmatprep.subr.mxu0 0.0
        %864 = vmatpush1.msra.mxu0 0.0
        %865 = vmatprep.subr.mxu0 0.0
        %866 = vmatpush1.msra.mxu0 0.0
        %867 = vmatprep.subr.mxu0 0.0
        %868 = vmatpush1.msra.mxu0 0.0
        %869 = vmatprep.mubr.f32.mxu0 0.0
        %870 = vmatmul.mubr.f32.gmra.mrb[0].mxu0 %v306
        %v871 = vpop.f32.mrb[0].mxu0
        %v872 = vadd.f32 0.0, %v871
        %v873 = vpop.f32.mrb[0].mxu0
        %v874 = vadd.f32 0.0, %v873
        %875 = vdwg.mxu0
        %876 = vmatprep.subr.mxu0 %v193
        %877 = vmatpush1.msra.mxu0 %v192
        %878 = vmatprep.subr.mxu0 0.0
        %879 = vmatpush1.msra.mxu0 0.0
        %880 = vmatprep.subr.mxu0 0.0
        %881 = vmatpush1.msra.mxu0 0.0
        %882 = vmatprep.subr.mxu0 0.0
        %883 = vmatpush1.msra.mxu0 0.0
        %884 = vmatprep.subr.mxu0 0.0
        %885 = vmatpush1.msra.mxu0 0.0
        %886 = vmatprep.subr.mxu0 0.0
        %887 = vmatpush1.msra.mxu0 0.0
        %888 = vmatprep.subr.mxu0 0.0
        %889 = vmatpush1.msra.mxu0 0.0
        %890 = vmatprep.subr.mxu0 0.0
        %891 = vmatpush1.msra.mxu0 0.0
        %892 = vmatprep.subr.mxu0 0.0
        %893 = vmatpush1.msra.mxu0 0.0
        %894 = vmatprep.subr.mxu0 0.0
        %895 = vmatpush1.msra.mxu0 0.0
        %896 = vmatprep.subr.mxu0 0.0
        %897 = vmatpush1.msra.mxu0 0.0
        %898 = vmatprep.subr.mxu0 0.0
        %899 = vmatpush1.msra.mxu0 0.0
        %900 = vmatprep.subr.mxu0 0.0
        %901 = vmatpush1.msra.mxu0 0.0
        %902 = vmatprep.subr.mxu0 0.0
        %903 = vmatpush1.msra.mxu0 0.0
        %904 = vmatprep.subr.mxu0 0.0
        %905 = vmatpush1.msra.mxu0 0.0
        %906 = vmatprep.subr.mxu0 0.0
        %907 = vmatpush1.msra.mxu0 0.0
        %908 = vmatprep.subr.mxu0 0.0
        %909 = vmatpush1.msra.mxu0 0.0
        %910 = vmatprep.subr.mxu0 0.0
        %911 = vmatpush1.msra.mxu0 0.0
        %912 = vmatprep.subr.mxu0 0.0
        %913 = vmatpush1.msra.mxu0 0.0
        %914 = vmatprep.subr.mxu0 0.0
        %915 = vmatpush1.msra.mxu0 0.0
        %916 = vmatprep.subr.mxu0 0.0
        %917 = vmatpush1.msra.mxu0 0.0
        %918 = vmatprep.subr.mxu0 0.0
        %919 = vmatpush1.msra.mxu0 0.0
        %920 = vmatprep.subr.mxu0 0.0
        %921 = vmatpush1.msra.mxu0 0.0
        %922 = vmatprep.subr.mxu0 0.0
        %923 = vmatpush1.msra.mxu0 0.0
        %924 = vmatprep.subr.mxu0 0.0
        %925 = vmatpush1.msra.mxu0 0.0
        %926 = vmatprep.subr.mxu0 0.0
        %927 = vmatpush1.msra.mxu0 0.0
        %928 = vmatprep.subr.mxu0 0.0
        %929 = vmatpush1.msra.mxu0 0.0
        %930 = vmatprep.subr.mxu0 0.0
        %931 = vmatpush1.msra.mxu0 0.0
        %932 = vmatprep.subr.mxu0 0.0
        %933 = vmatpush1.msra.mxu0 0.0
        %934 = vmatprep.subr.mxu0 0.0
        %935 = vmatpush1.msra.mxu0 0.0
        %936 = vmatprep.subr.mxu0 0.0
        %937 = vmatpush1.msra.mxu0 0.0
        %938 = vmatprep.subr.mxu0 0.0
        %939 = vmatpush1.msra.mxu0 0.0
        %940 = vmatprep.mubr.f32.mxu0 0.0
        %941 = vmatmul.mubr.f32.gmra.mrb[0].mxu0 %v306
        %v942 = vpop.f32.mrb[0].mxu0
        %v943 = vadd.f32 0.0, %v942
        %v944 = vpop.f32.mrb[0].mxu0
        %v945 = vadd.f32 0.0, %v944
        %946 = vdwg.mxu0
        %947 = vmatprep.subr.mxu0 %v195
        %948 = vmatpush1.msra.mxu0 %v194
        %949 = vmatprep.subr.mxu0 0.0
        %950 = vmatpush1.msra.mxu0 0.0
        %951 = vmatprep.subr.mxu0 0.0
        %952 = vmatpush1.msra.mxu0 0.0
        %953 = vmatprep.subr.mxu0 0.0
        %954 = vmatpush1.msra.mxu0 0.0
        %955 = vmatprep.subr.mxu0 0.0
        %956 = vmatpush1.msra.mxu0 0.0
        %957 = vmatprep.subr.mxu0 0.0
        %958 = vmatpush1.msra.mxu0 0.0
        %959 = vmatprep.subr.mxu0 0.0
        %960 = vmatpush1.msra.mxu0 0.0
        %961 = vmatprep.subr.mxu0 0.0
        %962 = vmatpush1.msra.mxu0 0.0
        %963 = vmatprep.subr.mxu0 0.0
        %964 = vmatpush1.msra.mxu0 0.0
        %965 = vmatprep.subr.mxu0 0.0
        %966 = vmatpush1.msra.mxu0 0.0
        %967 = vmatprep.subr.mxu0 0.0
        %968 = vmatpush1.msra.mxu0 0.0
        %969 = vmatprep.subr.mxu0 0.0
        %970 = vmatpush1.msra.mxu0 0.0
        %971 = vmatprep.subr.mxu0 0.0
        %972 = vmatpush1.msra.mxu0 0.0
        %973 = vmatprep.subr.mxu0 0.0
        %974 = vmatpush1.msra.mxu0 0.0
        %975 = vmatprep.subr.mxu0 0.0
        %976 = vmatpush1.msra.mxu0 0.0
        %977 = vmatprep.subr.mxu0 0.0
        %978 = vmatpush1.msra.mxu0 0.0
        %979 = vmatprep.subr.mxu0 0.0
        %980 = vmatpush1.msra.mxu0 0.0
        %981 = vmatprep.subr.mxu0 0.0
        %982 = vmatpush1.msra.mxu0 0.0
        %983 = vmatprep.subr.mxu0 0.0
        %984 = vmatpush1.msra.mxu0 0.0
        %985 = vmatprep.subr.mxu0 0.0
        %986 = vmatpush1.msra.mxu0 0.0
        %987 = vmatprep.subr.mxu0 0.0
        %988 = vmatpush1.msra.mxu0 0.0
        %989 = vmatprep.subr.mxu0 0.0
        %990 = vmatpush1.msra.mxu0 0.0
        %991 = vmatprep.subr.mxu0 0.0
        %992 = vmatpush1.msra.mxu0 0.0
        %993 = vmatprep.subr.mxu0 0.0
        %994 = vmatpush1.msra.mxu0 0.0
        %995 = vmatprep.subr.mxu0 0.0
        %996 = vmatpush1.msra.mxu0 0.0
        %997 = vmatprep.subr.mxu0 0.0
        %998 = vmatpush1.msra.mxu0 0.0
        %999 = vmatprep.subr.mxu0 0.0
        %1000 = vmatpush1.msra.mxu0 0.0
        %1001 = vmatprep.subr.mxu0 0.0
        %1002 = vmatpush1.msra.mxu0 0.0
        %1003 = vmatprep.subr.mxu0 0.0
        %1004 = vmatpush1.msra.mxu0 0.0
        %1005 = vmatprep.subr.mxu0 0.0
        %1006 = vmatpush1.msra.mxu0 0.0
        %1007 = vmatprep.subr.mxu0 0.0
        %1008 = vmatpush1.msra.mxu0 0.0
        %1009 = vmatprep.subr.mxu0 0.0
        %1010 = vmatpush1.msra.mxu0 0.0
        %1011 = vmatprep.mubr.f32.mxu0 0.0
        %1012 = vmatmul.mubr.f32.gmra.mrb[0].mxu0 %v306
        %v1013 = vpop.f32.mrb[0].mxu0
        %v1014 = vadd.f32 0.0, %v1013
        %v1015 = vpop.f32.mrb[0].mxu0
        %v1016 = vadd.f32 0.0, %v1015
        %1017 = vdwg.mxu0
        %1018 = vmatprep.subr.mxu0 %v197
        %1019 = vmatpush1.msra.mxu0 %v196
        %1020 = vmatprep.subr.mxu0 0.0
        %1021 = vmatpush1.msra.mxu0 0.0
        %1022 = vmatprep.subr.mxu0 0.0
        %1023 = vmatpush1.msra.mxu0 0.0
        %1024 = vmatprep.subr.mxu0 0.0
        %1025 = vmatpush1.msra.mxu0 0.0
        %1026 = vmatprep.subr.mxu0 0.0
        %1027 = vmatpush1.msra.mxu0 0.0
        %1028 = vmatprep.subr.mxu0 0.0
        %1029 = vmatpush1.msra.mxu0 0.0
        %1030 = vmatprep.subr.mxu0 0.0
        %1031 = vmatpush1.msra.mxu0 0.0
        %1032 = vmatprep.subr.mxu0 0.0
        %1033 = vmatpush1.msra.mxu0 0.0
        %1034 = vmatprep.subr.mxu0 0.0
        %1035 = vmatpush1.msra.mxu0 0.0
        %1036 = vmatprep.subr.mxu0 0.0
        %1037 = vmatpush1.msra.mxu0 0.0
        %1038 = vmatprep.subr.mxu0 0.0
        %1039 = vmatpush1.msra.mxu0 0.0
        %1040 = vmatprep.subr.mxu0 0.0
        %1041 = vmatpush1.msra.mxu0 0.0
        %1042 = vmatprep.subr.mxu0 0.0
        %1043 = vmatpush1.msra.mxu0 0.0
        %1044 = vmatprep.subr.mxu0 0.0
        %1045 = vmatpush1.msra.mxu0 0.0
        %1046 = vmatprep.subr.mxu0 0.0
        %1047 = vmatpush1.msra.mxu0 0.0
        %1048 = vmatprep.subr.mxu0 0.0
        %1049 = vmatpush1.msra.mxu0 0.0
        %1050 = vmatprep.subr.mxu0 0.0
        %1051 = vmatpush1.msra.mxu0 0.0
        %1052 = vmatprep.subr.mxu0 0.0
        %1053 = vmatpush1.msra.mxu0 0.0
        %1054 = vmatprep.subr.mxu0 0.0
        %1055 = vmatpush1.msra.mxu0 0.0
        %1056 = vmatprep.subr.mxu0 0.0
        %1057 = vmatpush1.msra.mxu0 0.0
        %1058 = vmatprep.subr.mxu0 0.0
        %1059 = vmatpush1.msra.mxu0 0.0
        %1060 = vmatprep.subr.mxu0 0.0
        %1061 = vmatpush1.msra.mxu0 0.0
        %1062 = vmatprep.subr.mxu0 0.0
        %1063 = vmatpush1.msra.mxu0 0.0
        %1064 = vmatprep.subr.mxu0 0.0
        %1065 = vmatpush1.msra.mxu0 0.0
        %1066 = vmatprep.subr.mxu0 0.0
        %1067 = vmatpush1.msra.mxu0 0.0
        %1068 = vmatprep.subr.mxu0 0.0
        %1069 = vmatpush1.msra.mxu0 0.0
        %1070 = vmatprep.subr.mxu0 0.0
        %1071 = vmatpush1.msra.mxu0 0.0
        %1072 = vmatprep.subr.mxu0 0.0
        %1073 = vmatpush1.msra.mxu0 0.0
        %1074 = vmatprep.subr.mxu0 0.0
        %1075 = vmatpush1.msra.mxu0 0.0
        %1076 = vmatprep.subr.mxu0 0.0
        %1077 = vmatpush1.msra.mxu0 0.0
        %1078 = vmatprep.subr.mxu0 0.0
        %1079 = vmatpush1.msra.mxu0 0.0
        %1080 = vmatprep.subr.mxu0 0.0
        %1081 = vmatpush1.msra.mxu0 0.0
        %1082 = vmatprep.mubr.f32.mxu0 0.0
        %1083 = vmatmul.mubr.f32.gmra.mrb[0].mxu0 %v306
        %v1084 = vpop.f32.mrb[0].mxu0
        %v1085 = vadd.f32 0.0, %v1084
        %v1086 = vpop.f32.mrb[0].mxu0
        %v1087 = vadd.f32 0.0, %v1086
        %1088 = vdwg.mxu0
        %1089 = vmatprep.subr.mxu0 %v199
        %1090 = vmatpush1.msra.mxu0 %v198
        %1091 = vmatprep.subr.mxu0 0.0
        %1092 = vmatpush1.msra.mxu0 0.0
        %1093 = vmatprep.subr.mxu0 0.0
        %1094 = vmatpush1.msra.mxu0 0.0
        %1095 = vmatprep.subr.mxu0 0.0
        %1096 = vmatpush1.msra.mxu0 0.0
        %1097 = vmatprep.subr.mxu0 0.0
        %1098 = vmatpush1.msra.mxu0 0.0
        %1099 = vmatprep.subr.mxu0 0.0
        %1100 = vmatpush1.msra.mxu0 0.0
        %1101 = vmatprep.subr.mxu0 0.0
        %1102 = vmatpush1.msra.mxu0 0.0
        %1103 = vmatprep.subr.mxu0 0.0
        %1104 = vmatpush1.msra.mxu0 0.0
        %1105 = vmatprep.subr.mxu0 0.0
        %1106 = vmatpush1.msra.mxu0 0.0
        %1107 = vmatprep.subr.mxu0 0.0
        %1108 = vmatpush1.msra.mxu0 0.0
        %1109 = vmatprep.subr.mxu0 0.0
        %1110 = vmatpush1.msra.mxu0 0.0
        %1111 = vmatprep.subr.mxu0 0.0
        %1112 = vmatpush1.msra.mxu0 0.0
        %1113 = vmatprep.subr.mxu0 0.0
        %1114 = vmatpush1.msra.mxu0 0.0
        %1115 = vmatprep.subr.mxu0 0.0
        %1116 = vmatpush1.msra.mxu0 0.0
        %1117 = vmatprep.subr.mxu0 0.0
        %1118 = vmatpush1.msra.mxu0 0.0
        %1119 = vmatprep.subr.mxu0 0.0
        %1120 = vmatpush1.msra.mxu0 0.0
        %1121 = vmatprep.subr.mxu0 0.0
        %1122 = vmatpush1.msra.mxu0 0.0
        %1123 = vmatprep.subr.mxu0 0.0
        %1124 = vmatpush1.msra.mxu0 0.0
        %1125 = vmatprep.subr.mxu0 0.0
        %1126 = vmatpush1.msra.mxu0 0.0
        %1127 = vmatprep.subr.mxu0 0.0
        %1128 = vmatpush1.msra.mxu0 0.0
        %1129 = vmatprep.subr.mxu0 0.0
        %1130 = vmatpush1.msra.mxu0 0.0
        %1131 = vmatprep.subr.mxu0 0.0
        %1132 = vmatpush1.msra.mxu0 0.0
        %1133 = vmatprep.subr.mxu0 0.0
        %1134 = vmatpush1.msra.mxu0 0.0
        %1135 = vmatprep.subr.mxu0 0.0
        %1136 = vmatpush1.msra.mxu0 0.0
        %1137 = vmatprep.subr.mxu0 0.0
        %1138 = vmatpush1.msra.mxu0 0.0
        %1139 = vmatprep.subr.mxu0 0.0
        %1140 = vmatpush1.msra.mxu0 0.0
        %1141 = vmatprep.subr.mxu0 0.0
        %1142 = vmatpush1.msra.mxu0 0.0
        %1143 = vmatprep.subr.mxu0 0.0
        %1144 = vmatpush1.msra.mxu0 0.0
        %1145 = vmatprep.subr.mxu0 0.0
        %1146 = vmatpush1.msra.mxu0 0.0
        %1147 = vmatprep.subr.mxu0 0.0
        %1148 = vmatpush1.msra.mxu0 0.0
        %1149 = vmatprep.subr.mxu0 0.0
        %1150 = vmatpush1.msra.mxu0 0.0
        %1151 = vmatprep.subr.mxu0 0.0
        %1152 = vmatpush1.msra.mxu0 0.0
        %1153 = vmatprep.mubr.f32.mxu0 0.0
        %1154 = vmatmul.mubr.f32.gmra.mrb[0].mxu0 %v306
        %v1155 = vpop.f32.mrb[0].mxu0
        %v1156 = vadd.f32 0.0, %v1155
        %v1157 = vpop.f32.mrb[0].mxu0
        %v1158 = vadd.f32 0.0, %v1157
        %1159 = vdwg.mxu0
        %1160 = vmatprep.subr.mxu0 %v201
        %1161 = vmatpush1.msra.mxu0 %v200
        %1162 = vmatprep.subr.mxu0 0.0
        %1163 = vmatpush1.msra.mxu0 0.0
        %1164 = vmatprep.subr.mxu0 0.0
        %1165 = vmatpush1.msra.mxu0 0.0
        %1166 = vmatprep.subr.mxu0 0.0
        %1167 = vmatpush1.msra.mxu0 0.0
        %1168 = vmatprep.subr.mxu0 0.0
        %1169 = vmatpush1.msra.mxu0 0.0
        %1170 = vmatprep.subr.mxu0 0.0
        %1171 = vmatpush1.msra.mxu0 0.0
        %1172 = vmatprep.subr.mxu0 0.0
        %1173 = vmatpush1.msra.mxu0 0.0
        %1174 = vmatprep.subr.mxu0 0.0
        %1175 = vmatpush1.msra.mxu0 0.0
        %1176 = vmatprep.subr.mxu0 0.0
        %1177 = vmatpush1.msra.mxu0 0.0
        %1178 = vmatprep.subr.mxu0 0.0
        %1179 = vmatpush1.msra.mxu0 0.0
        %1180 = vmatprep.subr.mxu0 0.0
        %1181 = vmatpush1.msra.mxu0 0.0
        %1182 = vmatprep.subr.mxu0 0.0
        %1183 = vmatpush1.msra.mxu0 0.0
        %1184 = vmatprep.subr.mxu0 0.0
        %1185 = vmatpush1.msra.mxu0 0.0
        %1186 = vmatprep.subr.mxu0 0.0
        %1187 = vmatpush1.msra.mxu0 0.0
        %1188 = vmatprep.subr.mxu0 0.0
        %1189 = vmatpush1.msra.mxu0 0.0
        %1190 = vmatprep.subr.mxu0 0.0
        %1191 = vmatpush1.msra.mxu0 0.0
        %1192 = vmatprep.subr.mxu0 0.0
        %1193 = vmatpush1.msra.mxu0 0.0
        %1194 = vmatprep.subr.mxu0 0.0
        %1195 = vmatpush1.msra.mxu0 0.0
        %1196 = vmatprep.subr.mxu0 0.0
        %1197 = vmatpush1.msra.mxu0 0.0
        %1198 = vmatprep.subr.mxu0 0.0
        %1199 = vmatpush1.msra.mxu0 0.0
        %1200 = vmatprep.subr.mxu0 0.0
        %1201 = vmatpush1.msra.mxu0 0.0
        %1202 = vmatprep.subr.mxu0 0.0
        %1203 = vmatpush1.msra.mxu0 0.0
        %1204 = vmatprep.subr.mxu0 0.0
        %1205 = vmatpush1.msra.mxu0 0.0
        %1206 = vmatprep.subr.mxu0 0.0
        %1207 = vmatpush1.msra.mxu0 0.0
        %1208 = vmatprep.subr.mxu0 0.0
        %1209 = vmatpush1.msra.mxu0 0.0
        %1210 = vmatprep.subr.mxu0 0.0
        %1211 = vmatpush1.msra.mxu0 0.0
        %1212 = vmatprep.subr.mxu0 0.0
        %1213 = vmatpush1.msra.mxu0 0.0
        %1214 = vmatprep.subr.mxu0 0.0
        %1215 = vmatpush1.msra.mxu0 0.0
        %1216 = vmatprep.subr.mxu0 0.0
        %1217 = vmatpush1.msra.mxu0 0.0
        %1218 = vmatprep.subr.mxu0 0.0
        %1219 = vmatpush1.msra.mxu0 0.0
        %1220 = vmatprep.subr.mxu0 0.0
        %1221 = vmatpush1.msra.mxu0 0.0
        %1222 = vmatprep.subr.mxu0 0.0
        %1223 = vmatpush1.msra.mxu0 0.0
        %1224 = vmatprep.mubr.f32.mxu0 0.0
        %1225 = vmatmul.mubr.f32.gmra.mrb[0].mxu0 %v306
        %v1226 = vpop.f32.mrb[0].mxu0
        %v1227 = vadd.f32 0.0, %v1226
        %v1228 = vpop.f32.mrb[0].mxu0
        %v1229 = vadd.f32 0.0, %v1228
        %1230 = vdwg.mxu0
        %1231 = vmatprep.subr.mxu0 %v203
        %1232 = vmatpush1.msra.mxu0 %v202
        %1233 = vmatprep.subr.mxu0 0.0
        %1234 = vmatpush1.msra.mxu0 0.0
        %1235 = vmatprep.subr.mxu0 0.0
        %1236 = vmatpush1.msra.mxu0 0.0
        %1237 = vmatprep.subr.mxu0 0.0
        %1238 = vmatpush1.msra.mxu0 0.0
        %1239 = vmatprep.subr.mxu0 0.0
        %1240 = vmatpush1.msra.mxu0 0.0
        %1241 = vmatprep.subr.mxu0 0.0
        %1242 = vmatpush1.msra.mxu0 0.0
        %1243 = vmatprep.subr.mxu0 0.0
        %1244 = vmatpush1.msra.mxu0 0.0
        %1245 = vmatprep.subr.mxu0 0.0
        %1246 = vmatpush1.msra.mxu0 0.0
        %1247 = vmatprep.subr.mxu0 0.0
        %1248 = vmatpush1.msra.mxu0 0.0
        %1249 = vmatprep.subr.mxu0 0.0
        %1250 = vmatpush1.msra.mxu0 0.0
        %1251 = vmatprep.subr.mxu0 0.0
        %1252 = vmatpush1.msra.mxu0 0.0
        %1253 = vmatprep.subr.mxu0 0.0
        %1254 = vmatpush1.msra.mxu0 0.0
        %1255 = vmatprep.subr.mxu0 0.0
        %1256 = vmatpush1.msra.mxu0 0.0
        %1257 = vmatprep.subr.mxu0 0.0
        %1258 = vmatpush1.msra.mxu0 0.0
        %1259 = vmatprep.subr.mxu0 0.0
        %1260 = vmatpush1.msra.mxu0 0.0
        %1261 = vmatprep.subr.mxu0 0.0
        %1262 = vmatpush1.msra.mxu0 0.0
        %1263 = vmatprep.subr.mxu0 0.0
        %1264 = vmatpush1.msra.mxu0 0.0
        %1265 = vmatprep.subr.mxu0 0.0
        %1266 = vmatpush1.msra.mxu0 0.0
        %1267 = vmatprep.subr.mxu0 0.0
        %1268 = vmatpush1.msra.mxu0 0.0
        %1269 = vmatprep.subr.mxu0 0.0
        %1270 = vmatpush1.msra.mxu0 0.0
        %1271 = vmatprep.subr.mxu0 0.0
        %1272 = vmatpush1.msra.mxu0 0.0
        %1273 = vmatprep.subr.mxu0 0.0
        %1274 = vmatpush1.msra.mxu0 0.0
        %1275 = vmatprep.subr.mxu0 0.0
        %1276 = vmatpush1.msra.mxu0 0.0
        %1277 = vmatprep.subr.mxu0 0.0
        %1278 = vmatpush1.msra.mxu0 0.0
        %1279 = vmatprep.subr.mxu0 0.0
        %1280 = vmatpush1.msra.mxu0 0.0
        %1281 = vmatprep.subr.mxu0 0.0
        %1282 = vmatpush1.msra.mxu0 0.0
        %1283 = vmatprep.subr.mxu0 0.0
        %1284 = vmatpush1.msra.mxu0 0.0
        %1285 = vmatprep.subr.mxu0 0.0
        %1286 = vmatpush1.msra.mxu0 0.0
        %1287 = vmatprep.subr.mxu0 0.0
        %1288 = vmatpush1.msra.mxu0 0.0
        %1289 = vmatprep.subr.mxu0 0.0
        %1290 = vmatpush1.msra.mxu0 0.0
        %1291 = vmatprep.subr.mxu0 0.0
        %1292 = vmatpush1.msra.mxu0 0.0
        %1293 = vmatprep.subr.mxu0 0.0
        %1294 = vmatpush1.msra.mxu0 0.0
        %1295 = vmatprep.mubr.f32.mxu0 0.0
        %1296 = vmatmul.mubr.f32.gmra.mrb[0].mxu0 %v306
        %v1297 = vpop.f32.mrb[0].mxu0
        %v1298 = vadd.f32 0.0, %v1297
        %v1299 = vpop.f32.mrb[0].mxu0
        %v1300 = vadd.f32 0.0, %v1299
        %1301 = vdwg.mxu0
        %1302 = vmatprep.subr.mxu0 %v205
        %1303 = vmatpush1.msra.mxu0 %v204
        %1304 = vmatprep.subr.mxu0 0.0
        %1305 = vmatpush1.msra.mxu0 0.0
        %1306 = vmatprep.subr.mxu0 0.0
        %1307 = vmatpush1.msra.mxu0 0.0
        %1308 = vmatprep.subr.mxu0 0.0
        %1309 = vmatpush1.msra.mxu0 0.0
        %1310 = vmatprep.subr.mxu0 0.0
        %1311 = vmatpush1.msra.mxu0 0.0
        %1312 = vmatprep.subr.mxu0 0.0
        %1313 = vmatpush1.msra.mxu0 0.0
        %1314 = vmatprep.subr.mxu0 0.0
        %1315 = vmatpush1.msra.mxu0 0.0
        %1316 = vmatprep.subr.mxu0 0.0
        %1317 = vmatpush1.msra.mxu0 0.0
        %1318 = vmatprep.subr.mxu0 0.0
        %1319 = vmatpush1.msra.mxu0 0.0
        %1320 = vmatprep.subr.mxu0 0.0
        %1321 = vmatpush1.msra.mxu0 0.0
        %1322 = vmatprep.subr.mxu0 0.0
        %1323 = vmatpush1.msra.mxu0 0.0
        %1324 = vmatprep.subr.mxu0 0.0
        %1325 = vmatpush1.msra.mxu0 0.0
        %1326 = vmatprep.subr.mxu0 0.0
        %1327 = vmatpush1.msra.mxu0 0.0
        %1328 = vmatprep.subr.mxu0 0.0
        %1329 = vmatpush1.msra.mxu0 0.0
        %1330 = vmatprep.subr.mxu0 0.0
        %1331 = vmatpush1.msra.mxu0 0.0
        %1332 = vmatprep.subr.mxu0 0.0
        %1333 = vmatpush1.msra.mxu0 0.0
        %1334 = vmatprep.subr.mxu0 0.0
        %1335 = vmatpush1.msra.mxu0 0.0
        %1336 = vmatprep.subr.mxu0 0.0
        %1337 = vmatpush1.msra.mxu0 0.0
        %1338 = vmatprep.subr.mxu0 0.0
        %1339 = vmatpush1.msra.mxu0 0.0
        %1340 = vmatprep.subr.mxu0 0.0
        %1341 = vmatpush1.msra.mxu0 0.0
        %1342 = vmatprep.subr.mxu0 0.0
        %1343 = vmatpush1.msra.mxu0 0.0
        %1344 = vmatprep.subr.mxu0 0.0
        %1345 = vmatpush1.msra.mxu0 0.0
        %1346 = vmatprep.subr.mxu0 0.0
        %1347 = vmatpush1.msra.mxu0 0.0
        %1348 = vmatprep.subr.mxu0 0.0
        %1349 = vmatpush1.msra.mxu0 0.0
        %1350 = vmatprep.subr.mxu0 0.0
        %1351 = vmatpush1.msra.mxu0 0.0
        %1352 = vmatprep.subr.mxu0 0.0
        %1353 = vmatpush1.msra.mxu0 0.0
        %1354 = vmatprep.subr.mxu0 0.0
        %1355 = vmatpush1.msra.mxu0 0.0
        %1356 = vmatprep.subr.mxu0 0.0
        %1357 = vmatpush1.msra.mxu0 0.0
        %1358 = vmatprep.subr.mxu0 0.0
        %1359 = vmatpush1.msra.mxu0 0.0
        %1360 = vmatprep.subr.mxu0 0.0
        %1361 = vmatpush1.msra.mxu0 0.0
        %1362 = vmatprep.subr.mxu0 0.0
        %1363 = vmatpush1.msra.mxu0 0.0
        %1364 = vmatprep.subr.mxu0 0.0
        %1365 = vmatpush1.msra.mxu0 0.0
        %1366 = vmatprep.mubr.f32.mxu0 0.0
        %1367 = vmatmul.mubr.f32.gmra.mrb[0].mxu0 %v306
        %v1368 = vpop.f32.mrb[0].mxu0
        %v1369 = vadd.f32 0.0, %v1368
        %v1370 = vpop.f32.mrb[0].mxu0
        %v1371 = vadd.f32 0.0, %v1370
        %1372 = vdwg.mxu0
        %1373 = vmatprep.subr.mxu0 %v207
        %1374 = vmatpush1.msra.mxu0 %v206
        %1375 = vmatprep.subr.mxu0 0.0
        %1376 = vmatpush1.msra.mxu0 0.0
        %1377 = vmatprep.subr.mxu0 0.0
        %1378 = vmatpush1.msra.mxu0 0.0
        %1379 = vmatprep.subr.mxu0 0.0
        %1380 = vmatpush1.msra.mxu0 0.0
        %1381 = vmatprep.subr.mxu0 0.0
        %1382 = vmatpush1.msra.mxu0 0.0
        %1383 = vmatprep.subr.mxu0 0.0
        %1384 = vmatpush1.msra.mxu0 0.0
        %1385 = vmatprep.subr.mxu0 0.0
        %1386 = vmatpush1.msra.mxu0 0.0
        %1387 = vmatprep.subr.mxu0 0.0
        %1388 = vmatpush1.msra.mxu0 0.0
        %1389 = vmatprep.subr.mxu0 0.0
        %1390 = vmatpush1.msra.mxu0 0.0
        %1391 = vmatprep.subr.mxu0 0.0
        %1392 = vmatpush1.msra.mxu0 0.0
        %1393 = vmatprep.subr.mxu0 0.0
        %1394 = vmatpush1.msra.mxu0 0.0
        %1395 = vmatprep.subr.mxu0 0.0
        %1396 = vmatpush1.msra.mxu0 0.0
        %1397 = vmatprep.subr.mxu0 0.0
        %1398 = vmatpush1.msra.mxu0 0.0
        %1399 = vmatprep.subr.mxu0 0.0
        %1400 = vmatpush1.msra.mxu0 0.0
        %1401 = vmatprep.subr.mxu0 0.0
        %1402 = vmatpush1.msra.mxu0 0.0
        %1403 = vmatprep.subr.mxu0 0.0
        %1404 = vmatpush1.msra.mxu0 0.0
        %1405 = vmatprep.subr.mxu0 0.0
        %1406 = vmatpush1.msra.mxu0 0.0
        %1407 = vmatprep.subr.mxu0 0.0
        %1408 = vmatpush1.msra.mxu0 0.0
        %1409 = vmatprep.subr.mxu0 0.0
        %1410 = vmatpush1.msra.mxu0 0.0
        %1411 = vmatprep.subr.mxu0 0.0
        %1412 = vmatpush1.msra.mxu0 0.0
        %1413 = vmatprep.subr.mxu0 0.0
        %1414 = vmatpush1.msra.mxu0 0.0
        %1415 = vmatprep.subr.mxu0 0.0
        %1416 = vmatpush1.msra.mxu0 0.0
        %1417 = vmatprep.subr.mxu0 0.0
        %1418 = vmatpush1.msra.mxu0 0.0
        %1419 = vmatprep.subr.mxu0 0.0
        %1420 = vmatpush1.msra.mxu0 0.0
        %1421 = vmatprep.subr.mxu0 0.0
        %1422 = vmatpush1.msra.mxu0 0.0
        %1423 = vmatprep.subr.mxu0 0.0
        %1424 = vmatpush1.msra.mxu0 0.0
        %1425 = vmatprep.subr.mxu0 0.0
        %1426 = vmatpush1.msra.mxu0 0.0
        %1427 = vmatprep.subr.mxu0 0.0
        %1428 = vmatpush1.msra.mxu0 0.0
        %1429 = vmatprep.subr.mxu0 0.0
        %1430 = vmatpush1.msra.mxu0 0.0
        %1431 = vmatprep.subr.mxu0 0.0
        %1432 = vmatpush1.msra.mxu0 0.0
        %1433 = vmatprep.subr.mxu0 0.0
        %1434 = vmatpush1.msra.mxu0 0.0
        %1435 = vmatprep.subr.mxu0 0.0
        %1436 = vmatpush1.msra.mxu0 0.0
        %1437 = vmatprep.mubr.f32.mxu0 0.0
        %1438 = vmatmul.mubr.f32.gmra.mrb[0].mxu0 %v306
        %v1439 = vpop.f32.mrb[0].mxu0
        %v1440 = vadd.f32 0.0, %v1439
        %v1441 = vpop.f32.mrb[0].mxu0
        %v1442 = vadd.f32 0.0, %v1441
        %1443 = vdwg.mxu0
        %1444 = vmatprep.subr.mxu0 %v209
        %1445 = vmatpush1.msra.mxu0 %v208
        %1446 = vmatprep.subr.mxu0 0.0
        %1447 = vmatpush1.msra.mxu0 0.0
        %1448 = vmatprep.subr.mxu0 0.0
        %1449 = vmatpush1.msra.mxu0 0.0
        %1450 = vmatprep.subr.mxu0 0.0
        %1451 = vmatpush1.msra.mxu0 0.0
        %1452 = vmatprep.subr.mxu0 0.0
        %1453 = vmatpush1.msra.mxu0 0.0
        %1454 = vmatprep.subr.mxu0 0.0
        %1455 = vmatpush1.msra.mxu0 0.0
        %1456 = vmatprep.subr.mxu0 0.0
        %1457 = vmatpush1.msra.mxu0 0.0
        %1458 = vmatprep.subr.mxu0 0.0
        %1459 = vmatpush1.msra.mxu0 0.0
        %1460 = vmatprep.subr.mxu0 0.0
        %1461 = vmatpush1.msra.mxu0 0.0
        %1462 = vmatprep.subr.mxu0 0.0
        %1463 = vmatpush1.msra.mxu0 0.0
        %1464 = vmatprep.subr.mxu0 0.0
        %1465 = vmatpush1.msra.mxu0 0.0
        %1466 = vmatprep.subr.mxu0 0.0
        %1467 = vmatpush1.msra.mxu0 0.0
        %1468 = vmatprep.subr.mxu0 0.0
        %1469 = vmatpush1.msra.mxu0 0.0
        %1470 = vmatprep.subr.mxu0 0.0
        %1471 = vmatpush1.msra.mxu0 0.0
        %1472 = vmatprep.subr.mxu0 0.0
        %1473 = vmatpush1.msra.mxu0 0.0
        %1474 = vmatprep.subr.mxu0 0.0
        %1475 = vmatpush1.msra.mxu0 0.0
        %1476 = vmatprep.subr.mxu0 0.0
        %1477 = vmatpush1.msra.mxu0 0.0
        %1478 = vmatprep.subr.mxu0 0.0
        %1479 = vmatpush1.msra.mxu0 0.0
        %1480 = vmatprep.subr.mxu0 0.0
        %1481 = vmatpush1.msra.mxu0 0.0
        %1482 = vmatprep.subr.mxu0 0.0
        %1483 = vmatpush1.msra.mxu0 0.0
        %1484 = vmatprep.subr.mxu0 0.0
        %1485 = vmatpush1.msra.mxu0 0.0
        %1486 = vmatprep.subr.mxu0 0.0
        %1487 = vmatpush1.msra.mxu0 0.0
        %1488 = vmatprep.subr.mxu0 0.0
        %1489 = vmatpush1.msra.mxu0 0.0
        %1490 = vmatprep.subr.mxu0 0.0
        %1491 = vmatpush1.msra.mxu0 0.0
        %1492 = vmatprep.subr.mxu0 0.0
        %1493 = vmatpush1.msra.mxu0 0.0
        %1494 = vmatprep.subr.mxu0 0.0
        %1495 = vmatpush1.msra.mxu0 0.0
        %1496 = vmatprep.subr.mxu0 0.0
        %1497 = vmatpush1.msra.mxu0 0.0
        %1498 = vmatprep.subr.mxu0 0.0
        %1499 = vmatpush1.msra.mxu0 0.0
        %1500 = vmatprep.subr.mxu0 0.0
        %1501 = vmatpush1.msra.mxu0 0.0
        %1502 = vmatprep.subr.mxu0 0.0
        %1503 = vmatpush1.msra.mxu0 0.0
        %1504 = vmatprep.subr.mxu0 0.0
        %1505 = vmatpush1.msra.mxu0 0.0
        %1506 = vmatprep.subr.mxu0 0.0
        %1507 = vmatpush1.msra.mxu0 0.0
        %1508 = vmatprep.mubr.f32.mxu0 0.0
        %1509 = vmatmul.mubr.f32.gmra.mrb[0].mxu0 %v306
        %v1510 = vpop.f32.mrb[0].mxu0
        %v1511 = vadd.f32 0.0, %v1510
        %v1512 = vpop.f32.mrb[0].mxu0
        %v1513 = vadd.f32 0.0, %v1512
        %1514 = vdwg.mxu0
        %1515 = vmatprep.subr.mxu0 %v211
        %1516 = vmatpush1.msra.mxu0 %v210
        %1517 = vmatprep.subr.mxu0 0.0
        %1518 = vmatpush1.msra.mxu0 0.0
        %1519 = vmatprep.subr.mxu0 0.0
        %1520 = vmatpush1.msra.mxu0 0.0
        %1521 = vmatprep.subr.mxu0 0.0
        %1522 = vmatpush1.msra.mxu0 0.0
        %1523 = vmatprep.subr.mxu0 0.0
        %1524 = vmatpush1.msra.mxu0 0.0
        %1525 = vmatprep.subr.mxu0 0.0
        %1526 = vmatpush1.msra.mxu0 0.0
        %1527 = vmatprep.subr.mxu0 0.0
        %1528 = vmatpush1.msra.mxu0 0.0
        %1529 = vmatprep.subr.mxu0 0.0
        %1530 = vmatpush1.msra.mxu0 0.0
        %1531 = vmatprep.subr.mxu0 0.0
        %1532 = vmatpush1.msra.mxu0 0.0
        %1533 = vmatprep.subr.mxu0 0.0
        %1534 = vmatpush1.msra.mxu0 0.0
        %1535 = vmatprep.subr.mxu0 0.0
        %1536 = vmatpush1.msra.mxu0 0.0
        %1537 = vmatprep.subr.mxu0 0.0
        %1538 = vmatpush1.msra.mxu0 0.0
        %1539 = vmatprep.subr.mxu0 0.0
        %1540 = vmatpush1.msra.mxu0 0.0
        %1541 = vmatprep.subr.mxu0 0.0
        %1542 = vmatpush1.msra.mxu0 0.0
        %1543 = vmatprep.subr.mxu0 0.0
        %1544 = vmatpush1.msra.mxu0 0.0
        %1545 = vmatprep.subr.mxu0 0.0
        %1546 = vmatpush1.msra.mxu0 0.0
        %1547 = vmatprep.subr.mxu0 0.0
        %1548 = vmatpush1.msra.mxu0 0.0
        %1549 = vmatprep.subr.mxu0 0.0
        %1550 = vmatpush1.msra.mxu0 0.0
        %1551 = vmatprep.subr.mxu0 0.0
        %1552 = vmatpush1.msra.mxu0 0.0
        %1553 = vmatprep.subr.mxu0 0.0
        %1554 = vmatpush1.msra.mxu0 0.0
        %1555 = vmatprep.subr.mxu0 0.0
        %1556 = vmatpush1.msra.mxu0 0.0
        %1557 = vmatprep.subr.mxu0 0.0
        %1558 = vmatpush1.msra.mxu0 0.0
        %1559 = vmatprep.subr.mxu0 0.0
        %1560 = vmatpush1.msra.mxu0 0.0
        %1561 = vmatprep.subr.mxu0 0.0
        %1562 = vmatpush1.msra.mxu0 0.0
        %1563 = vmatprep.subr.mxu0 0.0
        %1564 = vmatpush1.msra.mxu0 0.0
        %1565 = vmatprep.subr.mxu0 0.0
        %1566 = vmatpush1.msra.mxu0 0.0
        %1567 = vmatprep.subr.mxu0 0.0
        %1568 = vmatpush1.msra.mxu0 0.0
        %1569 = vmatprep.subr.mxu0 0.0
        %1570 = vmatpush1.msra.mxu0 0.0
        %1571 = vmatprep.subr.mxu0 0.0
        %1572 = vmatpush1.msra.mxu0 0.0
        %1573 = vmatprep.subr.mxu0 0.0
        %1574 = vmatpush1.msra.mxu0 0.0
        %1575 = vmatprep.subr.mxu0 0.0
        %1576 = vmatpush1.msra.mxu0 0.0
        %1577 = vmatprep.subr.mxu0 0.0
        %1578 = vmatpush1.msra.mxu0 0.0
        %1579 = vmatprep.mubr.f32.mxu0 0.0
        %1580 = vmatmul.mubr.f32.gmra.mrb[0].mxu0 %v306
        %v1581 = vpop.f32.mrb[0].mxu0
        %v1582 = vadd.f32 0.0, %v1581
        %v1583 = vpop.f32.mrb[0].mxu0
        %v1584 = vadd.f32 0.0, %v1583
        %1585 = vdwg.mxu0
        %1586 = vmatprep.subr.mxu0 %v213
        %1587 = vmatpush1.msra.mxu0 %v212
        %1588 = vmatprep.subr.mxu0 0.0
        %1589 = vmatpush1.msra.mxu0 0.0
        %1590 = vmatprep.subr.mxu0 0.0
        %1591 = vmatpush1.msra.mxu0 0.0
        %1592 = vmatprep.subr.mxu0 0.0
        %1593 = vmatpush1.msra.mxu0 0.0
        %1594 = vmatprep.subr.mxu0 0.0
        %1595 = vmatpush1.msra.mxu0 0.0
        %1596 = vmatprep.subr.mxu0 0.0
        %1597 = vmatpush1.msra.mxu0 0.0
        %1598 = vmatprep.subr.mxu0 0.0
        %1599 = vmatpush1.msra.mxu0 0.0
        %1600 = vmatprep.subr.mxu0 0.0
        %1601 = vmatpush1.msra.mxu0 0.0
        %1602 = vmatprep.subr.mxu0 0.0
        %1603 = vmatpush1.msra.mxu0 0.0
        %1604 = vmatprep.subr.mxu0 0.0
        %1605 = vmatpush1.msra.mxu0 0.0
        %1606 = vmatprep.subr.mxu0 0.0
        %1607 = vmatpush1.msra.mxu0 0.0
        %1608 = vmatprep.subr.mxu0 0.0
        %1609 = vmatpush1.msra.mxu0 0.0
        %1610 = vmatprep.subr.mxu0 0.0
        %1611 = vmatpush1.msra.mxu0 0.0
        %1612 = vmatprep.subr.mxu0 0.0
        %1613 = vmatpush1.msra.mxu0 0.0
        %1614 = vmatprep.subr.mxu0 0.0
        %1615 = vmatpush1.msra.mxu0 0.0
        %1616 = vmatprep.subr.mxu0 0.0
        %1617 = vmatpush1.msra.mxu0 0.0
        %1618 = vmatprep.subr.mxu0 0.0
        %1619 = vmatpush1.msra.mxu0 0.0
        %1620 = vmatprep.subr.mxu0 0.0
        %1621 = vmatpush1.msra.mxu0 0.0
        %1622 = vmatprep.subr.mxu0 0.0
        %1623 = vmatpush1.msra.mxu0 0.0
        %1624 = vmatprep.subr.mxu0 0.0
        %1625 = vmatpush1.msra.mxu0 0.0
        %1626 = vmatprep.subr.mxu0 0.0
        %1627 = vmatpush1.msra.mxu0 0.0
        %1628 = vmatprep.subr.mxu0 0.0
        %1629 = vmatpush1.msra.mxu0 0.0
        %1630 = vmatprep.subr.mxu0 0.0
        %1631 = vmatpush1.msra.mxu0 0.0
        %1632 = vmatprep.subr.mxu0 0.0
        %1633 = vmatpush1.msra.mxu0 0.0
        %1634 = vmatprep.subr.mxu0 0.0
        %1635 = vmatpush1.msra.mxu0 0.0
        %1636 = vmatprep.subr.mxu0 0.0
        %1637 = vmatpush1.msra.mxu0 0.0
        %1638 = vmatprep.subr.mxu0 0.0
        %1639 = vmatpush1.msra.mxu0 0.0
        %1640 = vmatprep.subr.mxu0 0.0
        %1641 = vmatpush1.msra.mxu0 0.0
        %1642 = vmatprep.subr.mxu0 0.0
        %1643 = vmatpush1.msra.mxu0 0.0
        %1644 = vmatprep.subr.mxu0 0.0
        %1645 = vmatpush1.msra.mxu0 0.0
        %1646 = vmatprep.subr.mxu0 0.0
        %1647 = vmatpush1.msra.mxu0 0.0
        %1648 = vmatprep.subr.mxu0 0.0
        %1649 = vmatpush1.msra.mxu0 0.0
        %1650 = vmatprep.mubr.f32.mxu0 0.0
        %1651 = vmatmul.mubr.f32.gmra.mrb[0].mxu0 %v306
        %v1652 = vpop.f32.mrb[0].mxu0
        %v1653 = vadd.f32 0.0, %v1652
        %v1654 = vpop.f32.mrb[0].mxu0
        %v1655 = vadd.f32 0.0, %v1654
        %1656 = vdwg.mxu0
        %1657 = vmatprep.subr.mxu0 %v215
        %1658 = vmatpush1.msra.mxu0 %v214
        %1659 = vmatprep.subr.mxu0 0.0
        %1660 = vmatpush1.msra.mxu0 0.0
        %1661 = vmatprep.subr.mxu0 0.0
        %1662 = vmatpush1.msra.mxu0 0.0
        %1663 = vmatprep.subr.mxu0 0.0
        %1664 = vmatpush1.msra.mxu0 0.0
        %1665 = vmatprep.subr.mxu0 0.0
        %1666 = vmatpush1.msra.mxu0 0.0
        %1667 = vmatprep.subr.mxu0 0.0
        %1668 = vmatpush1.msra.mxu0 0.0
        %1669 = vmatprep.subr.mxu0 0.0
        %1670 = vmatpush1.msra.mxu0 0.0
        %1671 = vmatprep.subr.mxu0 0.0
        %1672 = vmatpush1.msra.mxu0 0.0
        %1673 = vmatprep.subr.mxu0 0.0
        %1674 = vmatpush1.msra.mxu0 0.0
        %1675 = vmatprep.subr.mxu0 0.0
        %1676 = vmatpush1.msra.mxu0 0.0
        %1677 = vmatprep.subr.mxu0 0.0
        %1678 = vmatpush1.msra.mxu0 0.0
        %1679 = vmatprep.subr.mxu0 0.0
        %1680 = vmatpush1.msra.mxu0 0.0
        %1681 = vmatprep.subr.mxu0 0.0
        %1682 = vmatpush1.msra.mxu0 0.0
        %1683 = vmatprep.subr.mxu0 0.0
        %1684 = vmatpush1.msra.mxu0 0.0
        %1685 = vmatprep.subr.mxu0 0.0
        %1686 = vmatpush1.msra.mxu0 0.0
        %1687 = vmatprep.subr.mxu0 0.0
        %1688 = vmatpush1.msra.mxu0 0.0
        %1689 = vmatprep.subr.mxu0 0.0
        %1690 = vmatpush1.msra.mxu0 0.0
        %1691 = vmatprep.subr.mxu0 0.0
        %1692 = vmatpush1.msra.mxu0 0.0
        %1693 = vmatprep.subr.mxu0 0.0
        %1694 = vmatpush1.msra.mxu0 0.0
        %1695 = vmatprep.subr.mxu0 0.0
        %1696 = vmatpush1.msra.mxu0 0.0
        %1697 = vmatprep.subr.mxu0 0.0
        %1698 = vmatpush1.msra.mxu0 0.0
        %1699 = vmatprep.subr.mxu0 0.0
        %1700 = vmatpush1.msra.mxu0 0.0
        %1701 = vmatprep.subr.mxu0 0.0
        %1702 = vmatpush1.msra.mxu0 0.0
        %1703 = vmatprep.subr.mxu0 0.0
        %1704 = vmatpush1.msra.mxu0 0.0
        %1705 = vmatprep.subr.mxu0 0.0
        %1706 = vmatpush1.msra.mxu0 0.0
        %1707 = vmatprep.subr.mxu0 0.0
        %1708 = vmatpush1.msra.mxu0 0.0
        %1709 = vmatprep.subr.mxu0 0.0
        %1710 = vmatpush1.msra.mxu0 0.0
        %1711 = vmatprep.subr.mxu0 0.0
        %1712 = vmatpush1.msra.mxu0 0.0
        %1713 = vmatprep.subr.mxu0 0.0
        %1714 = vmatpush1.msra.mxu0 0.0
        %1715 = vmatprep.subr.mxu0 0.0
        %1716 = vmatpush1.msra.mxu0 0.0
        %1717 = vmatprep.subr.mxu0 0.0
        %1718 = vmatpush1.msra.mxu0 0.0
        %1719 = vmatprep.subr.mxu0 0.0
        %1720 = vmatpush1.msra.mxu0 0.0
        %1721 = vmatprep.mubr.f32.mxu0 0.0
        %1722 = vmatmul.mubr.f32.gmra.mrb[0].mxu0 %v306
        %v1723 = vpop.f32.mrb[0].mxu0
        %v1724 = vadd.f32 0.0, %v1723
        %v1725 = vpop.f32.mrb[0].mxu0
        %v1726 = vadd.f32 0.0, %v1725
        %1727 = vdwg.mxu0
        %1728 = vmatprep.subr.mxu0 %v217
        %1729 = vmatpush1.msra.mxu0 %v216
        %1730 = vmatprep.subr.mxu0 0.0
        %1731 = vmatpush1.msra.mxu0 0.0
        %1732 = vmatprep.subr.mxu0 0.0
        %1733 = vmatpush1.msra.mxu0 0.0
        %1734 = vmatprep.subr.mxu0 0.0
        %1735 = vmatpush1.msra.mxu0 0.0
        %1736 = vmatprep.subr.mxu0 0.0
        %1737 = vmatpush1.msra.mxu0 0.0
        %1738 = vmatprep.subr.mxu0 0.0
        %1739 = vmatpush1.msra.mxu0 0.0
        %1740 = vmatprep.subr.mxu0 0.0
        %1741 = vmatpush1.msra.mxu0 0.0
        %1742 = vmatprep.subr.mxu0 0.0
        %1743 = vmatpush1.msra.mxu0 0.0
        %1744 = vmatprep.subr.mxu0 0.0
        %1745 = vmatpush1.msra.mxu0 0.0
        %1746 = vmatprep.subr.mxu0 0.0
        %1747 = vmatpush1.msra.mxu0 0.0
        %1748 = vmatprep.subr.mxu0 0.0
        %1749 = vmatpush1.msra.mxu0 0.0
        %1750 = vmatprep.subr.mxu0 0.0
        %1751 = vmatpush1.msra.mxu0 0.0
        %1752 = vmatprep.subr.mxu0 0.0
        %1753 = vmatpush1.msra.mxu0 0.0
        %1754 = vmatprep.subr.mxu0 0.0
        %1755 = vmatpush1.msra.mxu0 0.0
        %1756 = vmatprep.subr.mxu0 0.0
        %1757 = vmatpush1.msra.mxu0 0.0
        %1758 = vmatprep.subr.mxu0 0.0
        %1759 = vmatpush1.msra.mxu0 0.0
        %1760 = vmatprep.subr.mxu0 0.0
        %1761 = vmatpush1.msra.mxu0 0.0
        %1762 = vmatprep.subr.mxu0 0.0
        %1763 = vmatpush1.msra.mxu0 0.0
        %1764 = vmatprep.subr.mxu0 0.0
        %1765 = vmatpush1.msra.mxu0 0.0
        %1766 = vmatprep.subr.mxu0 0.0
        %1767 = vmatpush1.msra.mxu0 0.0
        %1768 = vmatprep.subr.mxu0 0.0
        %1769 = vmatpush1.msra.mxu0 0.0
        %1770 = vmatprep.subr.mxu0 0.0
        %1771 = vmatpush1.msra.mxu0 0.0
        %1772 = vmatprep.subr.mxu0 0.0
        %1773 = vmatpush1.msra.mxu0 0.0
        %1774 = vmatprep.subr.mxu0 0.0
        %1775 = vmatpush1.msra.mxu0 0.0
        %1776 = vmatprep.subr.mxu0 0.0
        %1777 = vmatpush1.msra.mxu0 0.0
        %1778 = vmatprep.subr.mxu0 0.0
        %1779 = vmatpush1.msra.mxu0 0.0
        %1780 = vmatprep.subr.mxu0 0.0
        %1781 = vmatpush1.msra.mxu0 0.0
        %1782 = vmatprep.subr.mxu0 0.0
        %1783 = vmatpush1.msra.mxu0 0.0
        %1784 = vmatprep.subr.mxu0 0.0
        %1785 = vmatpush1.msra.mxu0 0.0
        %1786 = vmatprep.subr.mxu0 0.0
        %1787 = vmatpush1.msra.mxu0 0.0
        %1788 = vmatprep.subr.mxu0 0.0
        %1789 = vmatpush1.msra.mxu0 0.0
        %1790 = vmatprep.subr.mxu0 0.0
        %1791 = vmatpush1.msra.mxu0 0.0
        %1792 = vmatprep.mubr.f32.mxu0 0.0
        %1793 = vmatmul.mubr.f32.gmra.mrb[0].mxu0 %v306
        %v1794 = vpop.f32.mrb[0].mxu0
        %v1795 = vadd.f32 0.0, %v1794
        %v1796 = vpop.f32.mrb[0].mxu0
        %v1797 = vadd.f32 0.0, %v1796
        %1798 = vdwg.mxu0
        %1799 = vmatprep.subr.mxu0 %v219
        %1800 = vmatpush1.msra.mxu0 %v218
        %1801 = vmatprep.subr.mxu0 0.0
        %1802 = vmatpush1.msra.mxu0 0.0
        %1803 = vmatprep.subr.mxu0 0.0
        %1804 = vmatpush1.msra.mxu0 0.0
        %1805 = vmatprep.subr.mxu0 0.0
        %1806 = vmatpush1.msra.mxu0 0.0
        %1807 = vmatprep.subr.mxu0 0.0
        %1808 = vmatpush1.msra.mxu0 0.0
        %1809 = vmatprep.subr.mxu0 0.0
        %1810 = vmatpush1.msra.mxu0 0.0
        %1811 = vmatprep.subr.mxu0 0.0
        %1812 = vmatpush1.msra.mxu0 0.0
        %1813 = vmatprep.subr.mxu0 0.0
        %1814 = vmatpush1.msra.mxu0 0.0
        %1815 = vmatprep.subr.mxu0 0.0
        %1816 = vmatpush1.msra.mxu0 0.0
        %1817 = vmatprep.subr.mxu0 0.0
        %1818 = vmatpush1.msra.mxu0 0.0
        %1819 = vmatprep.subr.mxu0 0.0
        %1820 = vmatpush1.msra.mxu0 0.0
        %1821 = vmatprep.subr.mxu0 0.0
        %1822 = vmatpush1.msra.mxu0 0.0
        %1823 = vmatprep.subr.mxu0 0.0
        %1824 = vmatpush1.msra.mxu0 0.0
        %1825 = vmatprep.subr.mxu0 0.0
        %1826 = vmatpush1.msra.mxu0 0.0
        %1827 = vmatprep.subr.mxu0 0.0
        %1828 = vmatpush1.msra.mxu0 0.0
        %1829 = vmatprep.subr.mxu0 0.0
        %1830 = vmatpush1.msra.mxu0 0.0
        %1831 = vmatprep.subr.mxu0 0.0
        %1832 = vmatpush1.msra.mxu0 0.0
        %1833 = vmatprep.subr.mxu0 0.0
        %1834 = vmatpush1.msra.mxu0 0.0
        %1835 = vmatprep.subr.mxu0 0.0
        %1836 = vmatpush1.msra.mxu0 0.0
        %1837 = vmatprep.subr.mxu0 0.0
        %1838 = vmatpush1.msra.mxu0 0.0
        %1839 = vmatprep.subr.mxu0 0.0
        %1840 = vmatpush1.msra.mxu0 0.0
        %1841 = vmatprep.subr.mxu0 0.0
        %1842 = vmatpush1.msra.mxu0 0.0
        %1843 = vmatprep.subr.mxu0 0.0
        %1844 = vmatpush1.msra.mxu0 0.0
        %1845 = vmatprep.subr.mxu0 0.0
        %1846 = vmatpush1.msra.mxu0 0.0
        %1847 = vmatprep.subr.mxu0 0.0
        %1848 = vmatpush1.msra.mxu0 0.0
        %1849 = vmatprep.subr.mxu0 0.0
        %1850 = vmatpush1.msra.mxu0 0.0
        %1851 = vmatprep.subr.mxu0 0.0
        %1852 = vmatpush1.msra.mxu0 0.0
        %1853 = vmatprep.subr.mxu0 0.0
        %1854 = vmatpush1.msra.mxu0 0.0
        %1855 = vmatprep.subr.mxu0 0.0
        %1856 = vmatpush1.msra.mxu0 0.0
        %1857 = vmatprep.subr.mxu0 0.0
        %1858 = vmatpush1.msra.mxu0 0.0
        %1859 = vmatprep.subr.mxu0 0.0
        %1860 = vmatpush1.msra.mxu0 0.0
        %1861 = vmatprep.subr.mxu0 0.0
        %1862 = vmatpush1.msra.mxu0 0.0
        %1863 = vmatprep.mubr.f32.mxu0 0.0
        %1864 = vmatmul.mubr.f32.gmra.mrb[0].mxu0 %v306
        %v1865 = vpop.f32.mrb[0].mxu0
        %v1866 = vadd.f32 0.0, %v1865
        %v1867 = vpop.f32.mrb[0].mxu0
        %v1868 = vadd.f32 0.0, %v1867
        %1869 = vdwg.mxu0
        %1870 = vmatprep.subr.mxu0 %v221
        %1871 = vmatpush1.msra.mxu0 %v220
        %1872 = vmatprep.subr.mxu0 0.0
        %1873 = vmatpush1.msra.mxu0 0.0
        %1874 = vmatprep.subr.mxu0 0.0
        %1875 = vmatpush1.msra.mxu0 0.0
        %1876 = vmatprep.subr.mxu0 0.0
        %1877 = vmatpush1.msra.mxu0 0.0
        %1878 = vmatprep.subr.mxu0 0.0
        %1879 = vmatpush1.msra.mxu0 0.0
        %1880 = vmatprep.subr.mxu0 0.0
        %1881 = vmatpush1.msra.mxu0 0.0
        %1882 = vmatprep.subr.mxu0 0.0
        %1883 = vmatpush1.msra.mxu0 0.0
        %1884 = vmatprep.subr.mxu0 0.0
        %1885 = vmatpush1.msra.mxu0 0.0
        %1886 = vmatprep.subr.mxu0 0.0
        %1887 = vmatpush1.msra.mxu0 0.0
        %1888 = vmatprep.subr.mxu0 0.0
        %1889 = vmatpush1.msra.mxu0 0.0
        %1890 = vmatprep.subr.mxu0 0.0
        %1891 = vmatpush1.msra.mxu0 0.0
        %1892 = vmatprep.subr.mxu0 0.0
        %1893 = vmatpush1.msra.mxu0 0.0
        %1894 = vmatprep.subr.mxu0 0.0
        %1895 = vmatpush1.msra.mxu0 0.0
        %1896 = vmatprep.subr.mxu0 0.0
        %1897 = vmatpush1.msra.mxu0 0.0
        %1898 = vmatprep.subr.mxu0 0.0
        %1899 = vmatpush1.msra.mxu0 0.0
        %1900 = vmatprep.subr.mxu0 0.0
        %1901 = vmatpush1.msra.mxu0 0.0
        %1902 = vmatprep.subr.mxu0 0.0
        %1903 = vmatpush1.msra.mxu0 0.0
        %1904 = vmatprep.subr.mxu0 0.0
        %1905 = vmatpush1.msra.mxu0 0.0
        %1906 = vmatprep.subr.mxu0 0.0
        %1907 = vmatpush1.msra.mxu0 0.0
        %1908 = vmatprep.subr.mxu0 0.0
        %1909 = vmatpush1.msra.mxu0 0.0
        %1910 = vmatprep.subr.mxu0 0.0
        %1911 = vmatpush1.msra.mxu0 0.0
        %1912 = vmatprep.subr.mxu0 0.0
        %1913 = vmatpush1.msra.mxu0 0.0
        %1914 = vmatprep.subr.mxu0 0.0
        %1915 = vmatpush1.msra.mxu0 0.0
        %1916 = vmatprep.subr.mxu0 0.0
        %1917 = vmatpush1.msra.mxu0 0.0
        %1918 = vmatprep.subr.mxu0 0.0
        %1919 = vmatpush1.msra.mxu0 0.0
        %1920 = vmatprep.subr.mxu0 0.0
        %1921 = vmatpush1.msra.mxu0 0.0
        %1922 = vmatprep.subr.mxu0 0.0
        %1923 = vmatpush1.msra.mxu0 0.0
        %1924 = vmatprep.subr.mxu0 0.0
        %1925 = vmatpush1.msra.mxu0 0.0
        %1926 = vmatprep.subr.mxu0 0.0
        %1927 = vmatpush1.msra.mxu0 0.0
        %1928 = vmatprep.subr.mxu0 0.0
        %1929 = vmatpush1.msra.mxu0 0.0
        %1930 = vmatprep.subr.mxu0 0.0
        %1931 = vmatpush1.msra.mxu0 0.0
        %1932 = vmatprep.subr.mxu0 0.0
        %1933 = vmatpush1.msra.mxu0 0.0
        %1934 = vmatprep.mubr.f32.mxu0 0.0
        %1935 = vmatmul.mubr.f32.gmra.mrb[0].mxu0 %v306
        %v1936 = vpop.f32.mrb[0].mxu0
        %v1937 = vadd.f32 0.0, %v1936
        %v1938 = vpop.f32.mrb[0].mxu0
        %v1939 = vadd.f32 0.0, %v1938
        %1940 = vdwg.mxu0
        %1941 = vmatprep.subr.mxu0 %v223
        %1942 = vmatpush1.msra.mxu0 %v222
        %1943 = vmatprep.subr.mxu0 0.0
        %1944 = vmatpush1.msra.mxu0 0.0
        %1945 = vmatprep.subr.mxu0 0.0
        %1946 = vmatpush1.msra.mxu0 0.0
        %1947 = vmatprep.subr.mxu0 0.0
        %1948 = vmatpush1.msra.mxu0 0.0
        %1949 = vmatprep.subr.mxu0 0.0
        %1950 = vmatpush1.msra.mxu0 0.0
        %1951 = vmatprep.subr.mxu0 0.0
        %1952 = vmatpush1.msra.mxu0 0.0
        %1953 = vmatprep.subr.mxu0 0.0
        %1954 = vmatpush1.msra.mxu0 0.0
        %1955 = vmatprep.subr.mxu0 0.0
        %1956 = vmatpush1.msra.mxu0 0.0
        %1957 = vmatprep.subr.mxu0 0.0
        %1958 = vmatpush1.msra.mxu0 0.0
        %1959 = vmatprep.subr.mxu0 0.0
        %1960 = vmatpush1.msra.mxu0 0.0
        %1961 = vmatprep.subr.mxu0 0.0
        %1962 = vmatpush1.msra.mxu0 0.0
        %1963 = vmatprep.subr.mxu0 0.0
        %1964 = vmatpush1.msra.mxu0 0.0
        %1965 = vmatprep.subr.mxu0 0.0
        %1966 = vmatpush1.msra.mxu0 0.0
        %1967 = vmatprep.subr.mxu0 0.0
        %1968 = vmatpush1.msra.mxu0 0.0
        %1969 = vmatprep.subr.mxu0 0.0
        %1970 = vmatpush1.msra.mxu0 0.0
        %1971 = vmatprep.subr.mxu0 0.0
        %1972 = vmatpush1.msra.mxu0 0.0
        %1973 = vmatprep.subr.mxu0 0.0
        %1974 = vmatpush1.msra.mxu0 0.0
        %1975 = vmatprep.subr.mxu0 0.0
        %1976 = vmatpush1.msra.mxu0 0.0
        %1977 = vmatprep.subr.mxu0 0.0
        %1978 = vmatpush1.msra.mxu0 0.0
        %1979 = vmatprep.subr.mxu0 0.0
        %1980 = vmatpush1.msra.mxu0 0.0
        %1981 = vmatprep.subr.mxu0 0.0
        %1982 = vmatpush1.msra.mxu0 0.0
        %1983 = vmatprep.subr.mxu0 0.0
        %1984 = vmatpush1.msra.mxu0 0.0
        %1985 = vmatprep.subr.mxu0 0.0
        %1986 = vmatpush1.msra.mxu0 0.0
        %1987 = vmatprep.subr.mxu0 0.0
        %1988 = vmatpush1.msra.mxu0 0.0
        %1989 = vmatprep.subr.mxu0 0.0
        %1990 = vmatpush1.msra.mxu0 0.0
        %1991 = vmatprep.subr.mxu0 0.0
        %1992 = vmatpush1.msra.mxu0 0.0
        %1993 = vmatprep.subr.mxu0 0.0
        %1994 = vmatpush1.msra.mxu0 0.0
        %1995 = vmatprep.subr.mxu0 0.0
        %1996 = vmatpush1.msra.mxu0 0.0
        %1997 = vmatprep.subr.mxu0 0.0
        %1998 = vmatpush1.msra.mxu0 0.0
        %1999 = vmatprep.subr.mxu0 0.0
        %2000 = vmatpush1.msra.mxu0 0.0
        %2001 = vmatprep.subr.mxu0 0.0
        %2002 = vmatpush1.msra.mxu0 0.0
        %2003 = vmatprep.subr.mxu0 0.0
        %2004 = vmatpush1.msra.mxu0 0.0
        %2005 = vmatprep.mubr.f32.mxu0 0.0
        %2006 = vmatmul.mubr.f32.gmra.mrb[0].mxu0 %v306
        %v2007 = vpop.f32.mrb[0].mxu0
        %v2008 = vadd.f32 0.0, %v2007
        %v2009 = vpop.f32.mrb[0].mxu0
        %v2010 = vadd.f32 0.0, %v2009
        %2011 = vdwg.mxu0
        %2012 = vmatprep.subr.mxu0 %v225
        %2013 = vmatpush1.msra.mxu0 %v224
        %2014 = vmatprep.subr.mxu0 0.0
        %2015 = vmatpush1.msra.mxu0 0.0
        %2016 = vmatprep.subr.mxu0 0.0
        %2017 = vmatpush1.msra.mxu0 0.0
        %2018 = vmatprep.subr.mxu0 0.0
        %2019 = vmatpush1.msra.mxu0 0.0
        %2020 = vmatprep.subr.mxu0 0.0
        %2021 = vmatpush1.msra.mxu0 0.0
        %2022 = vmatprep.subr.mxu0 0.0
        %2023 = vmatpush1.msra.mxu0 0.0
        %2024 = vmatprep.subr.mxu0 0.0
        %2025 = vmatpush1.msra.mxu0 0.0
        %2026 = vmatprep.subr.mxu0 0.0
        %2027 = vmatpush1.msra.mxu0 0.0
        %2028 = vmatprep.subr.mxu0 0.0
        %2029 = vmatpush1.msra.mxu0 0.0
        %2030 = vmatprep.subr.mxu0 0.0
        %2031 = vmatpush1.msra.mxu0 0.0
        %2032 = vmatprep.subr.mxu0 0.0
        %2033 = vmatpush1.msra.mxu0 0.0
        %2034 = vmatprep.subr.mxu0 0.0
        %2035 = vmatpush1.msra.mxu0 0.0
        %2036 = vmatprep.subr.mxu0 0.0
        %2037 = vmatpush1.msra.mxu0 0.0
        %2038 = vmatprep.subr.mxu0 0.0
        %2039 = vmatpush1.msra.mxu0 0.0
        %2040 = vmatprep.subr.mxu0 0.0
        %2041 = vmatpush1.msra.mxu0 0.0
        %2042 = vmatprep.subr.mxu0 0.0
        %2043 = vmatpush1.msra.mxu0 0.0
        %2044 = vmatprep.subr.mxu0 0.0
        %2045 = vmatpush1.msra.mxu0 0.0
        %2046 = vmatprep.subr.mxu0 0.0
        %2047 = vmatpush1.msra.mxu0 0.0
        %2048 = vmatprep.subr.mxu0 0.0
        %2049 = vmatpush1.msra.mxu0 0.0
        %2050 = vmatprep.subr.mxu0 0.0
        %2051 = vmatpush1.msra.mxu0 0.0
        %2052 = vmatprep.subr.mxu0 0.0
        %2053 = vmatpush1.msra.mxu0 0.0
        %2054 = vmatprep.subr.mxu0 0.0
        %2055 = vmatpush1.msra.mxu0 0.0
        %2056 = vmatprep.subr.mxu0 0.0
        %2057 = vmatpush1.msra.mxu0 0.0
        %2058 = vmatprep.subr.mxu0 0.0
        %2059 = vmatpush1.msra.mxu0 0.0
        %2060 = vmatprep.subr.mxu0 0.0
        %2061 = vmatpush1.msra.mxu0 0.0
        %2062 = vmatprep.subr.mxu0 0.0
        %2063 = vmatpush1.msra.mxu0 0.0
        %2064 = vmatprep.subr.mxu0 0.0
        %2065 = vmatpush1.msra.mxu0 0.0
        %2066 = vmatprep.subr.mxu0 0.0
        %2067 = vmatpush1.msra.mxu0 0.0
        %2068 = vmatprep.subr.mxu0 0.0
        %2069 = vmatpush1.msra.mxu0 0.0
        %2070 = vmatprep.subr.mxu0 0.0
        %2071 = vmatpush1.msra.mxu0 0.0
        %2072 = vmatprep.subr.mxu0 0.0
        %2073 = vmatpush1.msra.mxu0 0.0
        %2074 = vmatprep.subr.mxu0 0.0
        %2075 = vmatpush1.msra.mxu0 0.0
        %2076 = vmatprep.mubr.f32.mxu0 0.0
        %2077 = vmatmul.mubr.f32.gmra.mrb[0].mxu0 %v306
        %v2078 = vpop.f32.mrb[0].mxu0
        %v2079 = vadd.f32 0.0, %v2078
        %v2080 = vpop.f32.mrb[0].mxu0
        %v2081 = vadd.f32 0.0, %v2080
        %2082 = vdwg.mxu0
        %2083 = vmatprep.subr.mxu0 %v227
        %2084 = vmatpush1.msra.mxu0 %v226
        %2085 = vmatprep.subr.mxu0 0.0
        %2086 = vmatpush1.msra.mxu0 0.0
        %2087 = vmatprep.subr.mxu0 0.0
        %2088 = vmatpush1.msra.mxu0 0.0
        %2089 = vmatprep.subr.mxu0 0.0
        %2090 = vmatpush1.msra.mxu0 0.0
        %2091 = vmatprep.subr.mxu0 0.0
        %2092 = vmatpush1.msra.mxu0 0.0
        %2093 = vmatprep.subr.mxu0 0.0
        %2094 = vmatpush1.msra.mxu0 0.0
        %2095 = vmatprep.subr.mxu0 0.0
        %2096 = vmatpush1.msra.mxu0 0.0
        %2097 = vmatprep.subr.mxu0 0.0
        %2098 = vmatpush1.msra.mxu0 0.0
        %2099 = vmatprep.subr.mxu0 0.0
        %2100 = vmatpush1.msra.mxu0 0.0
        %2101 = vmatprep.subr.mxu0 0.0
        %2102 = vmatpush1.msra.mxu0 0.0
        %2103 = vmatprep.subr.mxu0 0.0
        %2104 = vmatpush1.msra.mxu0 0.0
        %2105 = vmatprep.subr.mxu0 0.0
        %2106 = vmatpush1.msra.mxu0 0.0
        %2107 = vmatprep.subr.mxu0 0.0
        %2108 = vmatpush1.msra.mxu0 0.0
        %2109 = vmatprep.subr.mxu0 0.0
        %2110 = vmatpush1.msra.mxu0 0.0
        %2111 = vmatprep.subr.mxu0 0.0
        %2112 = vmatpush1.msra.mxu0 0.0
        %2113 = vmatprep.subr.mxu0 0.0
        %2114 = vmatpush1.msra.mxu0 0.0
        %2115 = vmatprep.subr.mxu0 0.0
        %2116 = vmatpush1.msra.mxu0 0.0
        %2117 = vmatprep.subr.mxu0 0.0
        %2118 = vmatpush1.msra.mxu0 0.0
        %2119 = vmatprep.subr.mxu0 0.0
        %2120 = vmatpush1.msra.mxu0 0.0
        %2121 = vmatprep.subr.mxu0 0.0
        %2122 = vmatpush1.msra.mxu0 0.0
        %2123 = vmatprep.subr.mxu0 0.0
        %2124 = vmatpush1.msra.mxu0 0.0
        %2125 = vmatprep.subr.mxu0 0.0
        %2126 = vmatpush1.msra.mxu0 0.0
        %2127 = vmatprep.subr.mxu0 0.0
        %2128 = vmatpush1.msra.mxu0 0.0
        %2129 = vmatprep.subr.mxu0 0.0
        %2130 = vmatpush1.msra.mxu0 0.0
        %2131 = vmatprep.subr.mxu0 0.0
        %2132 = vmatpush1.msra.mxu0 0.0
        %2133 = vmatprep.subr.mxu0 0.0
        %2134 = vmatpush1.msra.mxu0 0.0
        %2135 = vmatprep.subr.mxu0 0.0
        %2136 = vmatpush1.msra.mxu0 0.0
        %2137 = vmatprep.subr.mxu0 0.0
        %2138 = vmatpush1.msra.mxu0 0.0
        %2139 = vmatprep.subr.mxu0 0.0
        %2140 = vmatpush1.msra.mxu0 0.0
        %2141 = vmatprep.subr.mxu0 0.0
        %2142 = vmatpush1.msra.mxu0 0.0
        %2143 = vmatprep.subr.mxu0 0.0
        %2144 = vmatpush1.msra.mxu0 0.0
        %2145 = vmatprep.subr.mxu0 0.0
        %2146 = vmatpush1.msra.mxu0 0.0
        %2147 = vmatprep.mubr.f32.mxu0 0.0
        %2148 = vmatmul.mubr.f32.gmra.mrb[0].mxu0 %v306
        %v2149 = vpop.f32.mrb[0].mxu0
        %v2150 = vadd.f32 0.0, %v2149
        %v2151 = vpop.f32.mrb[0].mxu0
        %v2152 = vadd.f32 0.0, %v2151
        %2153 = vdwg.mxu0
        %2154 = vmatprep.subr.mxu0 %v229
        %2155 = vmatpush1.msra.mxu0 %v228
        %2156 = vmatprep.subr.mxu0 0.0
        %2157 = vmatpush1.msra.mxu0 0.0
        %2158 = vmatprep.subr.mxu0 0.0
        %2159 = vmatpush1.msra.mxu0 0.0
        %2160 = vmatprep.subr.mxu0 0.0
        %2161 = vmatpush1.msra.mxu0 0.0
        %2162 = vmatprep.subr.mxu0 0.0
        %2163 = vmatpush1.msra.mxu0 0.0
        %2164 = vmatprep.subr.mxu0 0.0
        %2165 = vmatpush1.msra.mxu0 0.0
        %2166 = vmatprep.subr.mxu0 0.0
        %2167 = vmatpush1.msra.mxu0 0.0
        %2168 = vmatprep.subr.mxu0 0.0
        %2169 = vmatpush1.msra.mxu0 0.0
        %2170 = vmatprep.subr.mxu0 0.0
        %2171 = vmatpush1.msra.mxu0 0.0
        %2172 = vmatprep.subr.mxu0 0.0
        %2173 = vmatpush1.msra.mxu0 0.0
        %2174 = vmatprep.subr.mxu0 0.0
        %2175 = vmatpush1.msra.mxu0 0.0
        %2176 = vmatprep.subr.mxu0 0.0
        %2177 = vmatpush1.msra.mxu0 0.0
        %2178 = vmatprep.subr.mxu0 0.0
        %2179 = vmatpush1.msra.mxu0 0.0
        %2180 = vmatprep.subr.mxu0 0.0
        %2181 = vmatpush1.msra.mxu0 0.0
        %2182 = vmatprep.subr.mxu0 0.0
        %2183 = vmatpush1.msra.mxu0 0.0
        %2184 = vmatprep.subr.mxu0 0.0
        %2185 = vmatpush1.msra.mxu0 0.0
        %2186 = vmatprep.subr.mxu0 0.0
        %2187 = vmatpush1.msra.mxu0 0.0
        %2188 = vmatprep.subr.mxu0 0.0
        %2189 = vmatpush1.msra.mxu0 0.0
        %2190 = vmatprep.subr.mxu0 0.0
        %2191 = vmatpush1.msra.mxu0 0.0
        %2192 = vmatprep.subr.mxu0 0.0
        %2193 = vmatpush1.msra.mxu0 0.0
        %2194 = vmatprep.subr.mxu0 0.0
        %2195 = vmatpush1.msra.mxu0 0.0
        %2196 = vmatprep.subr.mxu0 0.0
        %2197 = vmatpush1.msra.mxu0 0.0
        %2198 = vmatprep.subr.mxu0 0.0
        %2199 = vmatpush1.msra.mxu0 0.0
        %2200 = vmatprep.subr.mxu0 0.0
        %2201 = vmatpush1.msra.mxu0 0.0
        %2202 = vmatprep.subr.mxu0 0.0
        %2203 = vmatpush1.msra.mxu0 0.0
        %2204 = vmatprep.subr.mxu0 0.0
        %2205 = vmatpush1.msra.mxu0 0.0
        %2206 = vmatprep.subr.mxu0 0.0
        %2207 = vmatpush1.msra.mxu0 0.0
        %2208 = vmatprep.subr.mxu0 0.0
        %2209 = vmatpush1.msra.mxu0 0.0
        %2210 = vmatprep.subr.mxu0 0.0
        %2211 = vmatpush1.msra.mxu0 0.0
        %2212 = vmatprep.subr.mxu0 0.0
        %2213 = vmatpush1.msra.mxu0 0.0
        %2214 = vmatprep.subr.mxu0 0.0
        %2215 = vmatpush1.msra.mxu0 0.0
        %2216 = vmatprep.subr.mxu0 0.0
        %2217 = vmatpush1.msra.mxu0 0.0
        %2218 = vmatprep.mubr.f32.mxu0 0.0
        %2219 = vmatmul.mubr.f32.gmra.mrb[0].mxu0 %v306
        %v2220 = vpop.f32.mrb[0].mxu0
        %v2221 = vadd.f32 0.0, %v2220
        %v2222 = vpop.f32.mrb[0].mxu0
        %v2223 = vadd.f32 0.0, %v2222
        %2224 = vdwg.mxu0
        %2225 = vmatprep.subr.mxu0 %v231
        %2226 = vmatpush1.msra.mxu0 %v230
        %2227 = vmatprep.subr.mxu0 0.0
        %2228 = vmatpush1.msra.mxu0 0.0
        %2229 = vmatprep.subr.mxu0 0.0
        %2230 = vmatpush1.msra.mxu0 0.0
        %2231 = vmatprep.subr.mxu0 0.0
        %2232 = vmatpush1.msra.mxu0 0.0
        %2233 = vmatprep.subr.mxu0 0.0
        %2234 = vmatpush1.msra.mxu0 0.0
        %2235 = vmatprep.subr.mxu0 0.0
        %2236 = vmatpush1.msra.mxu0 0.0
        %2237 = vmatprep.subr.mxu0 0.0
        %2238 = vmatpush1.msra.mxu0 0.0
        %2239 = vmatprep.subr.mxu0 0.0
        %2240 = vmatpush1.msra.mxu0 0.0
        %2241 = vmatprep.subr.mxu0 0.0
        %2242 = vmatpush1.msra.mxu0 0.0
        %2243 = vmatprep.subr.mxu0 0.0
        %2244 = vmatpush1.msra.mxu0 0.0
        %2245 = vmatprep.subr.mxu0 0.0
        %2246 = vmatpush1.msra.mxu0 0.0
        %2247 = vmatprep.subr.mxu0 0.0
        %2248 = vmatpush1.msra.mxu0 0.0
        %2249 = vmatprep.subr.mxu0 0.0
        %2250 = vmatpush1.msra.mxu0 0.0
        %2251 = vmatprep.subr.mxu0 0.0
        %2252 = vmatpush1.msra.mxu0 0.0
        %2253 = vmatprep.subr.mxu0 0.0
        %2254 = vmatpush1.msra.mxu0 0.0
        %2255 = vmatprep.subr.mxu0 0.0
        %2256 = vmatpush1.msra.mxu0 0.0
        %2257 = vmatprep.subr.mxu0 0.0
        %2258 = vmatpush1.msra.mxu0 0.0
        %2259 = vmatprep.subr.mxu0 0.0
        %2260 = vmatpush1.msra.mxu0 0.0
        %2261 = vmatprep.subr.mxu0 0.0
        %2262 = vmatpush1.msra.mxu0 0.0
        %2263 = vmatprep.subr.mxu0 0.0
        %2264 = vmatpush1.msra.mxu0 0.0
        %2265 = vmatprep.subr.mxu0 0.0
        %2266 = vmatpush1.msra.mxu0 0.0
        %2267 = vmatprep.subr.mxu0 0.0
        %2268 = vmatpush1.msra.mxu0 0.0
        %2269 = vmatprep.subr.mxu0 0.0
        %2270 = vmatpush1.msra.mxu0 0.0
        %2271 = vmatprep.subr.mxu0 0.0
        %2272 = vmatpush1.msra.mxu0 0.0
        %2273 = vmatprep.subr.mxu0 0.0
        %2274 = vmatpush1.msra.mxu0 0.0
        %2275 = vmatprep.subr.mxu0 0.0
        %2276 = vmatpush1.msra.mxu0 0.0
        %2277 = vmatprep.subr.mxu0 0.0
        %2278 = vmatpush1.msra.mxu0 0.0
        %2279 = vmatprep.subr.mxu0 0.0
        %2280 = vmatpush1.msra.mxu0 0.0
        %2281 = vmatprep.subr.mxu0 0.0
        %2282 = vmatpush1.msra.mxu0 0.0
        %2283 = vmatprep.subr.mxu0 0.0
        %2284 = vmatpush1.msra.mxu0 0.0
        %2285 = vmatprep.subr.mxu0 0.0
        %2286 = vmatpush1.msra.mxu0 0.0
        %2287 = vmatprep.subr.mxu0 0.0
        %2288 = vmatpush1.msra.mxu0 0.0
        %2289 = vmatprep.mubr.f32.mxu0 0.0
        %2290 = vmatmul.mubr.f32.gmra.mrb[0].mxu0 %v306
        %v2291 = vpop.f32.mrb[0].mxu0
        %v2292 = vadd.f32 0.0, %v2291
        %v2293 = vpop.f32.mrb[0].mxu0
        %v2294 = vadd.f32 0.0, %v2293
        %2295 = vdwg.mxu0
        %2296 = vmatprep.subr.mxu0 %v233
        %2297 = vmatpush1.msra.mxu0 %v232
        %2298 = vmatprep.subr.mxu0 0.0
        %2299 = vmatpush1.msra.mxu0 0.0
        %2300 = vmatprep.subr.mxu0 0.0
        %2301 = vmatpush1.msra.mxu0 0.0
        %2302 = vmatprep.subr.mxu0 0.0
        %2303 = vmatpush1.msra.mxu0 0.0
        %2304 = vmatprep.subr.mxu0 0.0
        %2305 = vmatpush1.msra.mxu0 0.0
        %2306 = vmatprep.subr.mxu0 0.0
        %2307 = vmatpush1.msra.mxu0 0.0
        %2308 = vmatprep.subr.mxu0 0.0
        %2309 = vmatpush1.msra.mxu0 0.0
        %2310 = vmatprep.subr.mxu0 0.0
        %2311 = vmatpush1.msra.mxu0 0.0
        %2312 = vmatprep.subr.mxu0 0.0
        %2313 = vmatpush1.msra.mxu0 0.0
        %2314 = vmatprep.subr.mxu0 0.0
        %2315 = vmatpush1.msra.mxu0 0.0
        %2316 = vmatprep.subr.mxu0 0.0
        %2317 = vmatpush1.msra.mxu0 0.0
        %2318 = vmatprep.subr.mxu0 0.0
        %2319 = vmatpush1.msra.mxu0 0.0
        %2320 = vmatprep.subr.mxu0 0.0
        %2321 = vmatpush1.msra.mxu0 0.0
        %2322 = vmatprep.subr.mxu0 0.0
        %2323 = vmatpush1.msra.mxu0 0.0
        %2324 = vmatprep.subr.mxu0 0.0
        %2325 = vmatpush1.msra.mxu0 0.0
        %2326 = vmatprep.subr.mxu0 0.0
        %2327 = vmatpush1.msra.mxu0 0.0
        %2328 = vmatprep.subr.mxu0 0.0
        %2329 = vmatpush1.msra.mxu0 0.0
        %2330 = vmatprep.subr.mxu0 0.0
        %2331 = vmatpush1.msra.mxu0 0.0
        %2332 = vmatprep.subr.mxu0 0.0
        %2333 = vmatpush1.msra.mxu0 0.0
        %2334 = vmatprep.subr.mxu0 0.0
        %2335 = vmatpush1.msra.mxu0 0.0
        %2336 = vmatprep.subr.mxu0 0.0
        %2337 = vmatpush1.msra.mxu0 0.0
        %2338 = vmatprep.subr.mxu0 0.0
        %2339 = vmatpush1.msra.mxu0 0.0
        %2340 = vmatprep.subr.mxu0 0.0
        %2341 = vmatpush1.msra.mxu0 0.0
        %2342 = vmatprep.subr.mxu0 0.0
        %2343 = vmatpush1.msra.mxu0 0.0
        %2344 = vmatprep.subr.mxu0 0.0
        %2345 = vmatpush1.msra.mxu0 0.0
        %2346 = vmatprep.subr.mxu0 0.0
        %2347 = vmatpush1.msra.mxu0 0.0
        %2348 = vmatprep.subr.mxu0 0.0
        %2349 = vmatpush1.msra.mxu0 0.0
        %2350 = vmatprep.subr.mxu0 0.0
        %2351 = vmatpush1.msra.mxu0 0.0
        %2352 = vmatprep.subr.mxu0 0.0
        %2353 = vmatpush1.msra.mxu0 0.0
        %2354 = vmatprep.subr.mxu0 0.0
        %2355 = vmatpush1.msra.mxu0 0.0
        %2356 = vmatprep.subr.mxu0 0.0
        %2357 = vmatpush1.msra.mxu0 0.0
        %2358 = vmatprep.subr.mxu0 0.0
        %2359 = vmatpush1.msra.mxu0 0.0
        %2360 = vmatprep.mubr.f32.mxu0 0.0
        %2361 = vmatmul.mubr.f32.gmra.mrb[0].mxu0 %v306
        %v2362 = vpop.f32.mrb[0].mxu0
        %v2363 = vadd.f32 0.0, %v2362
        %v2364 = vpop.f32.mrb[0].mxu0
        %v2365 = vadd.f32 0.0, %v2364
        %2366 = vdwg.mxu0
        %2367 = vmatprep.subr.mxu0 %v235
        %2368 = vmatpush1.msra.mxu0 %v234
        %2369 = vmatprep.subr.mxu0 0.0
        %2370 = vmatpush1.msra.mxu0 0.0
        %2371 = vmatprep.subr.mxu0 0.0
        %2372 = vmatpush1.msra.mxu0 0.0
        %2373 = vmatprep.subr.mxu0 0.0
        %2374 = vmatpush1.msra.mxu0 0.0
        %2375 = vmatprep.subr.mxu0 0.0
        %2376 = vmatpush1.msra.mxu0 0.0
        %2377 = vmatprep.subr.mxu0 0.0
        %2378 = vmatpush1.msra.mxu0 0.0
        %2379 = vmatprep.subr.mxu0 0.0
        %2380 = vmatpush1.msra.mxu0 0.0
        %2381 = vmatprep.subr.mxu0 0.0
        %2382 = vmatpush1.msra.mxu0 0.0
        %2383 = vmatprep.subr.mxu0 0.0
        %2384 = vmatpush1.msra.mxu0 0.0
        %2385 = vmatprep.subr.mxu0 0.0
        %2386 = vmatpush1.msra.mxu0 0.0
        %2387 = vmatprep.subr.mxu0 0.0
        %2388 = vmatpush1.msra.mxu0 0.0
        %2389 = vmatprep.subr.mxu0 0.0
        %2390 = vmatpush1.msra.mxu0 0.0
        %2391 = vmatprep.subr.mxu0 0.0
        %2392 = vmatpush1.msra.mxu0 0.0
        %2393 = vmatprep.subr.mxu0 0.0
        %2394 = vmatpush1.msra.mxu0 0.0
        %2395 = vmatprep.subr.mxu0 0.0
        %2396 = vmatpush1.msra.mxu0 0.0
        %2397 = vmatprep.subr.mxu0 0.0
        %2398 = vmatpush1.msra.mxu0 0.0
        %2399 = vmatprep.subr.mxu0 0.0
        %2400 = vmatpush1.msra.mxu0 0.0
        %2401 = vmatprep.subr.mxu0 0.0
        %2402 = vmatpush1.msra.mxu0 0.0
        %2403 = vmatprep.subr.mxu0 0.0
        %2404 = vmatpush1.msra.mxu0 0.0
        %2405 = vmatprep.subr.mxu0 0.0
        %2406 = vmatpush1.msra.mxu0 0.0
        %2407 = vmatprep.subr.mxu0 0.0
        %2408 = vmatpush1.msra.mxu0 0.0
        %2409 = vmatprep.subr.mxu0 0.0
        %2410 = vmatpush1.msra.mxu0 0.0
        %2411 = vmatprep.subr.mxu0 0.0
        %2412 = vmatpush1.msra.mxu0 0.0
        %2413 = vmatprep.subr.mxu0 0.0
        %2414 = vmatpush1.msra.mxu0 0.0
        %2415 = vmatprep.subr.mxu0 0.0
        %2416 = vmatpush1.msra.mxu0 0.0
        %2417 = vmatprep.subr.mxu0 0.0
        %2418 = vmatpush1.msra.mxu0 0.0
        %2419 = vmatprep.subr.mxu0 0.0
        %2420 = vmatpush1.msra.mxu0 0.0
        %2421 = vmatprep.subr.mxu0 0.0
        %2422 = vmatpush1.msra.mxu0 0.0
        %2423 = vmatprep.subr.mxu0 0.0
        %2424 = vmatpush1.msra.mxu0 0.0
        %2425 = vmatprep.subr.mxu0 0.0
        %2426 = vmatpush1.msra.mxu0 0.0
        %2427 = vmatprep.subr.mxu0 0.0
        %2428 = vmatpush1.msra.mxu0 0.0
        %2429 = vmatprep.subr.mxu0 0.0
        %2430 = vmatpush1.msra.mxu0 0.0
        %2431 = vmatprep.mubr.f32.mxu0 0.0
        %2432 = vmatmul.mubr.f32.gmra.mrb[0].mxu0 %v306
        %v2433 = vpop.f32.mrb[0].mxu0
        %v2434 = vadd.f32 0.0, %v2433
        %v2435 = vpop.f32.mrb[0].mxu0
        %v2436 = vadd.f32 0.0, %v2435
        %2437 = vdwg.mxu0
        %2438 = vmatprep.subr.mxu0 %v237
        %2439 = vmatpush1.msra.mxu0 %v236
        %2440 = vmatprep.subr.mxu0 0.0
        %2441 = vmatpush1.msra.mxu0 0.0
        %2442 = vmatprep.subr.mxu0 0.0
        %2443 = vmatpush1.msra.mxu0 0.0
        %2444 = vmatprep.subr.mxu0 0.0
        %2445 = vmatpush1.msra.mxu0 0.0
        %2446 = vmatprep.subr.mxu0 0.0
        %2447 = vmatpush1.msra.mxu0 0.0
        %2448 = vmatprep.subr.mxu0 0.0
        %2449 = vmatpush1.msra.mxu0 0.0
        %2450 = vmatprep.subr.mxu0 0.0
        %2451 = vmatpush1.msra.mxu0 0.0
        %2452 = vmatprep.subr.mxu0 0.0
        %2453 = vmatpush1.msra.mxu0 0.0
        %2454 = vmatprep.subr.mxu0 0.0
        %2455 = vmatpush1.msra.mxu0 0.0
        %2456 = vmatprep.subr.mxu0 0.0
        %2457 = vmatpush1.msra.mxu0 0.0
        %2458 = vmatprep.subr.mxu0 0.0
        %2459 = vmatpush1.msra.mxu0 0.0
        %2460 = vmatprep.subr.mxu0 0.0
        %2461 = vmatpush1.msra.mxu0 0.0
        %2462 = vmatprep.subr.mxu0 0.0
        %2463 = vmatpush1.msra.mxu0 0.0
        %2464 = vmatprep.subr.mxu0 0.0
        %2465 = vmatpush1.msra.mxu0 0.0
        %2466 = vmatprep.subr.mxu0 0.0
        %2467 = vmatpush1.msra.mxu0 0.0
        %2468 = vmatprep.subr.mxu0 0.0
        %2469 = vmatpush1.msra.mxu0 0.0
        %2470 = vmatprep.subr.mxu0 0.0
        %2471 = vmatpush1.msra.mxu0 0.0
        %2472 = vmatprep.subr.mxu0 0.0
        %2473 = vmatpush1.msra.mxu0 0.0
        %2474 = vmatprep.subr.mxu0 0.0
        %2475 = vmatpush1.msra.mxu0 0.0
        %2476 = vmatprep.subr.mxu0 0.0
        %2477 = vmatpush1.msra.mxu0 0.0
        %2478 = vmatprep.subr.mxu0 0.0
        %2479 = vmatpush1.msra.mxu0 0.0
        %2480 = vmatprep.subr.mxu0 0.0
        %2481 = vmatpush1.msra.mxu0 0.0
        %2482 = vmatprep.subr.mxu0 0.0
        %2483 = vmatpush1.msra.mxu0 0.0
        %2484 = vmatprep.subr.mxu0 0.0
        %2485 = vmatpush1.msra.mxu0 0.0
        %2486 = vmatprep.subr.mxu0 0.0
        %2487 = vmatpush1.msra.mxu0 0.0
        %2488 = vmatprep.subr.mxu0 0.0
        %2489 = vmatpush1.msra.mxu0 0.0
        %2490 = vmatprep.subr.mxu0 0.0
        %2491 = vmatpush1.msra.mxu0 0.0
        %2492 = vmatprep.subr.mxu0 0.0
        %2493 = vmatpush1.msra.mxu0 0.0
        %2494 = vmatprep.subr.mxu0 0.0
        %2495 = vmatpush1.msra.mxu0 0.0
        %2496 = vmatprep.subr.mxu0 0.0
        %2497 = vmatpush1.msra.mxu0 0.0
        %2498 = vmatprep.subr.mxu0 0.0
        %2499 = vmatpush1.msra.mxu0 0.0
        %2500 = vmatprep.subr.mxu0 0.0
        %2501 = vmatpush1.msra.mxu0 0.0
        %2502 = vmatprep.mubr.f32.mxu0 0.0
        %2503 = vmatmul.mubr.f32.gmra.mrb[0].mxu0 %v306
        %v2504 = vpop.f32.mrb[0].mxu0
        %v2505 = vadd.f32 0.0, %v2504
        %v2506 = vpop.f32.mrb[0].mxu0
        %v2507 = vadd.f32 0.0, %v2506
        %2508 = vdwg.mxu0
        %2509 = vmatprep.subr.mxu0 %v239
        %2510 = vmatpush1.msra.mxu0 %v238
        %2511 = vmatprep.subr.mxu0 0.0
        %2512 = vmatpush1.msra.mxu0 0.0
        %2513 = vmatprep.subr.mxu0 0.0
        %2514 = vmatpush1.msra.mxu0 0.0
        %2515 = vmatprep.subr.mxu0 0.0
        %2516 = vmatpush1.msra.mxu0 0.0
        %2517 = vmatprep.subr.mxu0 0.0
        %2518 = vmatpush1.msra.mxu0 0.0
        %2519 = vmatprep.subr.mxu0 0.0
        %2520 = vmatpush1.msra.mxu0 0.0
        %2521 = vmatprep.subr.mxu0 0.0
        %2522 = vmatpush1.msra.mxu0 0.0
        %2523 = vmatprep.subr.mxu0 0.0
        %2524 = vmatpush1.msra.mxu0 0.0
        %2525 = vmatprep.subr.mxu0 0.0
        %2526 = vmatpush1.msra.mxu0 0.0
        %2527 = vmatprep.subr.mxu0 0.0
        %2528 = vmatpush1.msra.mxu0 0.0
        %2529 = vmatprep.subr.mxu0 0.0
        %2530 = vmatpush1.msra.mxu0 0.0
        %2531 = vmatprep.subr.mxu0 0.0
        %2532 = vmatpush1.msra.mxu0 0.0
        %2533 = vmatprep.subr.mxu0 0.0
        %2534 = vmatpush1.msra.mxu0 0.0
        %2535 = vmatprep.subr.mxu0 0.0
        %2536 = vmatpush1.msra.mxu0 0.0
        %2537 = vmatprep.subr.mxu0 0.0
        %2538 = vmatpush1.msra.mxu0 0.0
        %2539 = vmatprep.subr.mxu0 0.0
        %2540 = vmatpush1.msra.mxu0 0.0
        %2541 = vmatprep.subr.mxu0 0.0
        %2542 = vmatpush1.msra.mxu0 0.0
        %2543 = vmatprep.subr.mxu0 0.0
        %2544 = vmatpush1.msra.mxu0 0.0
        %2545 = vmatprep.subr.mxu0 0.0
        %2546 = vmatpush1.msra.mxu0 0.0
        %2547 = vmatprep.subr.mxu0 0.0
        %2548 = vmatpush1.msra.mxu0 0.0
        %2549 = vmatprep.subr.mxu0 0.0
        %2550 = vmatpush1.msra.mxu0 0.0
        %2551 = vmatprep.subr.mxu0 0.0
        %2552 = vmatpush1.msra.mxu0 0.0
        %2553 = vmatprep.subr.mxu0 0.0
        %2554 = vmatpush1.msra.mxu0 0.0
        %2555 = vmatprep.subr.mxu0 0.0
        %2556 = vmatpush1.msra.mxu0 0.0
        %2557 = vmatprep.subr.mxu0 0.0
        %2558 = vmatpush1.msra.mxu0 0.0
        %2559 = vmatprep.subr.mxu0 0.0
        %2560 = vmatpush1.msra.mxu0 0.0
        %2561 = vmatprep.subr.mxu0 0.0
        %2562 = vmatpush1.msra.mxu0 0.0
        %2563 = vmatprep.subr.mxu0 0.0
        %2564 = vmatpush1.msra.mxu0 0.0
        %2565 = vmatprep.subr.mxu0 0.0
        %2566 = vmatpush1.msra.mxu0 0.0
        %2567 = vmatprep.subr.mxu0 0.0
        %2568 = vmatpush1.msra.mxu0 0.0
        %2569 = vmatprep.subr.mxu0 0.0
        %2570 = vmatpush1.msra.mxu0 0.0
        %2571 = vmatprep.subr.mxu0 0.0
        %2572 = vmatpush1.msra.mxu0 0.0
        %2573 = vmatprep.mubr.f32.mxu0 0.0
        %2574 = vmatmul.mubr.f32.gmra.mrb[0].mxu0 %v306
        %v2575 = vpop.f32.mrb[0].mxu0
        %v2576 = vadd.f32 0.0, %v2575
        %v2577 = vpop.f32.mrb[0].mxu0
        %v2578 = vadd.f32 0.0, %v2577
        %2579 = vdwg.mxu0
        %2580 = vmatprep.subr.mxu0 %v241
        %2581 = vmatpush1.msra.mxu0 %v240
        %2582 = vmatprep.subr.mxu0 0.0
        %2583 = vmatpush1.msra.mxu0 0.0
        %2584 = vmatprep.subr.mxu0 0.0
        %2585 = vmatpush1.msra.mxu0 0.0
        %2586 = vmatprep.subr.mxu0 0.0
        %2587 = vmatpush1.msra.mxu0 0.0
        %2588 = vmatprep.subr.mxu0 0.0
        %2589 = vmatpush1.msra.mxu0 0.0
        %2590 = vmatprep.subr.mxu0 0.0
        %2591 = vmatpush1.msra.mxu0 0.0
        %2592 = vmatprep.subr.mxu0 0.0
        %2593 = vmatpush1.msra.mxu0 0.0
        %2594 = vmatprep.subr.mxu0 0.0
        %2595 = vmatpush1.msra.mxu0 0.0
        %2596 = vmatprep.subr.mxu0 0.0
        %2597 = vmatpush1.msra.mxu0 0.0
        %2598 = vmatprep.subr.mxu0 0.0
        %2599 = vmatpush1.msra.mxu0 0.0
        %2600 = vmatprep.subr.mxu0 0.0
        %2601 = vmatpush1.msra.mxu0 0.0
        %2602 = vmatprep.subr.mxu0 0.0
        %2603 = vmatpush1.msra.mxu0 0.0
        %2604 = vmatprep.subr.mxu0 0.0
        %2605 = vmatpush1.msra.mxu0 0.0
        %2606 = vmatprep.subr.mxu0 0.0
        %2607 = vmatpush1.msra.mxu0 0.0
        %2608 = vmatprep.subr.mxu0 0.0
        %2609 = vmatpush1.msra.mxu0 0.0
        %2610 = vmatprep.subr.mxu0 0.0
        %2611 = vmatpush1.msra.mxu0 0.0
        %2612 = vmatprep.subr.mxu0 0.0
        %2613 = vmatpush1.msra.mxu0 0.0
        %2614 = vmatprep.subr.mxu0 0.0
        %2615 = vmatpush1.msra.mxu0 0.0
        %2616 = vmatprep.subr.mxu0 0.0
        %2617 = vmatpush1.msra.mxu0 0.0
        %2618 = vmatprep.subr.mxu0 0.0
        %2619 = vmatpush1.msra.mxu0 0.0
        %2620 = vmatprep.subr.mxu0 0.0
        %2621 = vmatpush1.msra.mxu0 0.0
        %2622 = vmatprep.subr.mxu0 0.0
        %2623 = vmatpush1.msra.mxu0 0.0
        %2624 = vmatprep.subr.mxu0 0.0
        %2625 = vmatpush1.msra.mxu0 0.0
        %2626 = vmatprep.subr.mxu0 0.0
        %2627 = vmatpush1.msra.mxu0 0.0
        %2628 = vmatprep.subr.mxu0 0.0
        %2629 = vmatpush1.msra.mxu0 0.0
        %2630 = vmatprep.subr.mxu0 0.0
        %2631 = vmatpush1.msra.mxu0 0.0
        %2632 = vmatprep.subr.mxu0 0.0
        %2633 = vmatpush1.msra.mxu0 0.0
        %2634 = vmatprep.subr.mxu0 0.0
        %2635 = vmatpush1.msra.mxu0 0.0
        %2636 = vmatprep.subr.mxu0 0.0
        %2637 = vmatpush1.msra.mxu0 0.0
        %2638 = vmatprep.subr.mxu0 0.0
        %2639 = vmatpush1.msra.mxu0 0.0
        %2640 = vmatprep.subr.mxu0 0.0
        %2641 = vmatpush1.msra.mxu0 0.0
        %2642 = vmatprep.subr.mxu0 0.0
        %2643 = vmatpush1.msra.mxu0 0.0
        %2644 = vmatprep.mubr.f32.mxu0 0.0
        %2645 = vmatmul.mubr.f32.gmra.mrb[0].mxu0 %v306
        %v2646 = vpop.f32.mrb[0].mxu0
        %v2647 = vadd.f32 0.0, %v2646
        %v2648 = vpop.f32.mrb[0].mxu0
        %v2649 = vadd.f32 0.0, %v2648
        %2650 = vdwg.mxu0
        %2651 = vmatprep.subr.mxu0 %v243
        %2652 = vmatpush1.msra.mxu0 %v242
        %2653 = vmatprep.subr.mxu0 0.0
        %2654 = vmatpush1.msra.mxu0 0.0
        %2655 = vmatprep.subr.mxu0 0.0
        %2656 = vmatpush1.msra.mxu0 0.0
        %2657 = vmatprep.subr.mxu0 0.0
        %2658 = vmatpush1.msra.mxu0 0.0
        %2659 = vmatprep.subr.mxu0 0.0
        %2660 = vmatpush1.msra.mxu0 0.0
        %2661 = vmatprep.subr.mxu0 0.0
        %2662 = vmatpush1.msra.mxu0 0.0
        %2663 = vmatprep.subr.mxu0 0.0
        %2664 = vmatpush1.msra.mxu0 0.0
        %2665 = vmatprep.subr.mxu0 0.0
        %2666 = vmatpush1.msra.mxu0 0.0
        %2667 = vmatprep.subr.mxu0 0.0
        %2668 = vmatpush1.msra.mxu0 0.0
        %2669 = vmatprep.subr.mxu0 0.0
        %2670 = vmatpush1.msra.mxu0 0.0
        %2671 = vmatprep.subr.mxu0 0.0
        %2672 = vmatpush1.msra.mxu0 0.0
        %2673 = vmatprep.subr.mxu0 0.0
        %2674 = vmatpush1.msra.mxu0 0.0
        %2675 = vmatprep.subr.mxu0 0.0
        %2676 = vmatpush1.msra.mxu0 0.0
        %2677 = vmatprep.subr.mxu0 0.0
        %2678 = vmatpush1.msra.mxu0 0.0
        %2679 = vmatprep.subr.mxu0 0.0
        %2680 = vmatpush1.msra.mxu0 0.0
        %2681 = vmatprep.subr.mxu0 0.0
        %2682 = vmatpush1.msra.mxu0 0.0
        %2683 = vmatprep.subr.mxu0 0.0
        %2684 = vmatpush1.msra.mxu0 0.0
        %2685 = vmatprep.subr.mxu0 0.0
        %2686 = vmatpush1.msra.mxu0 0.0
        %2687 = vmatprep.subr.mxu0 0.0
        %2688 = vmatpush1.msra.mxu0 0.0
        %2689 = vmatprep.subr.mxu0 0.0
        %2690 = vmatpush1.msra.mxu0 0.0
        %2691 = vmatprep.subr.mxu0 0.0
        %2692 = vmatpush1.msra.mxu0 0.0
        %2693 = vmatprep.subr.mxu0 0.0
        %2694 = vmatpush1.msra.mxu0 0.0
        %2695 = vmatprep.subr.mxu0 0.0
        %2696 = vmatpush1.msra.mxu0 0.0
        %2697 = vmatprep.subr.mxu0 0.0
        %2698 = vmatpush1.msra.mxu0 0.0
        %2699 = vmatprep.subr.mxu0 0.0
        %2700 = vmatpush1.msra.mxu0 0.0
        %2701 = vmatprep.subr.mxu0 0.0
        %2702 = vmatpush1.msra.mxu0 0.0
        %2703 = vmatprep.subr.mxu0 0.0
        %2704 = vmatpush1.msra.mxu0 0.0
        %2705 = vmatprep.subr.mxu0 0.0
        %2706 = vmatpush1.msra.mxu0 0.0
        %2707 = vmatprep.subr.mxu0 0.0
        %2708 = vmatpush1.msra.mxu0 0.0
        %2709 = vmatprep.subr.mxu0 0.0
        %2710 = vmatpush1.msra.mxu0 0.0
        %2711 = vmatprep.subr.mxu0 0.0
        %2712 = vmatpush1.msra.mxu0 0.0
        %2713 = vmatprep.subr.mxu0 0.0
        %2714 = vmatpush1.msra.mxu0 0.0
        %2715 = vmatprep.mubr.f32.mxu0 0.0
        %2716 = vmatmul.mubr.f32.gmra.mrb[0].mxu0 %v306
        %v2717 = vpop.f32.mrb[0].mxu0
        %v2718 = vadd.f32 0.0, %v2717
        %v2719 = vpop.f32.mrb[0].mxu0
        %v2720 = vadd.f32 0.0, %v2719
        %2721 = vdwg.mxu0
        %2722 = vmatprep.subr.mxu0 %v245
        %2723 = vmatpush1.msra.mxu0 %v244
        %2724 = vmatprep.subr.mxu0 0.0
        %2725 = vmatpush1.msra.mxu0 0.0
        %2726 = vmatprep.subr.mxu0 0.0
        %2727 = vmatpush1.msra.mxu0 0.0
        %2728 = vmatprep.subr.mxu0 0.0
        %2729 = vmatpush1.msra.mxu0 0.0
        %2730 = vmatprep.subr.mxu0 0.0
        %2731 = vmatpush1.msra.mxu0 0.0
        %2732 = vmatprep.subr.mxu0 0.0
        %2733 = vmatpush1.msra.mxu0 0.0
        %2734 = vmatprep.subr.mxu0 0.0
        %2735 = vmatpush1.msra.mxu0 0.0
        %2736 = vmatprep.subr.mxu0 0.0
        %2737 = vmatpush1.msra.mxu0 0.0
        %2738 = vmatprep.subr.mxu0 0.0
        %2739 = vmatpush1.msra.mxu0 0.0
        %2740 = vmatprep.subr.mxu0 0.0
        %2741 = vmatpush1.msra.mxu0 0.0
        %2742 = vmatprep.subr.mxu0 0.0
        %2743 = vmatpush1.msra.mxu0 0.0
        %2744 = vmatprep.subr.mxu0 0.0
        %2745 = vmatpush1.msra.mxu0 0.0
        %2746 = vmatprep.subr.mxu0 0.0
        %2747 = vmatpush1.msra.mxu0 0.0
        %2748 = vmatprep.subr.mxu0 0.0
        %2749 = vmatpush1.msra.mxu0 0.0
        %2750 = vmatprep.subr.mxu0 0.0
        %2751 = vmatpush1.msra.mxu0 0.0
        %2752 = vmatprep.subr.mxu0 0.0
        %2753 = vmatpush1.msra.mxu0 0.0
        %2754 = vmatprep.subr.mxu0 0.0
        %2755 = vmatpush1.msra.mxu0 0.0
        %2756 = vmatprep.subr.mxu0 0.0
        %2757 = vmatpush1.msra.mxu0 0.0
        %2758 = vmatprep.subr.mxu0 0.0
        %2759 = vmatpush1.msra.mxu0 0.0
        %2760 = vmatprep.subr.mxu0 0.0
        %2761 = vmatpush1.msra.mxu0 0.0
        %2762 = vmatprep.subr.mxu0 0.0
        %2763 = vmatpush1.msra.mxu0 0.0
        %2764 = vmatprep.subr.mxu0 0.0
        %2765 = vmatpush1.msra.mxu0 0.0
        %2766 = vmatprep.subr.mxu0 0.0
        %2767 = vmatpush1.msra.mxu0 0.0
        %2768 = vmatprep.subr.mxu0 0.0
        %2769 = vmatpush1.msra.mxu0 0.0
        %2770 = vmatprep.subr.mxu0 0.0
        %2771 = vmatpush1.msra.mxu0 0.0
        %2772 = vmatprep.subr.mxu0 0.0
        %2773 = vmatpush1.msra.mxu0 0.0
        %2774 = vmatprep.subr.mxu0 0.0
        %2775 = vmatpush1.msra.mxu0 0.0
        %2776 = vmatprep.subr.mxu0 0.0
        %2777 = vmatpush1.msra.mxu0 0.0
        %2778 = vmatprep.subr.mxu0 0.0
        %2779 = vmatpush1.msra.mxu0 0.0
        %2780 = vmatprep.subr.mxu0 0.0
        %2781 = vmatpush1.msra.mxu0 0.0
        %2782 = vmatprep.subr.mxu0 0.0
        %2783 = vmatpush1.msra.mxu0 0.0
        %2784 = vmatprep.subr.mxu0 0.0
        %2785 = vmatpush1.msra.mxu0 0.0
        %2786 = vmatprep.mubr.f32.mxu0 0.0
        %2787 = vmatmul.mubr.f32.gmra.mrb[0].mxu0 %v306
        %v2788 = vpop.f32.mrb[0].mxu0
        %v2789 = vadd.f32 0.0, %v2788
        %v2790 = vpop.f32.mrb[0].mxu0
        %v2791 = vadd.f32 0.0, %v2790
        %2792 = vdwg.mxu0
        %2793 = vmatprep.subr.mxu0 %v247
        %2794 = vmatpush1.msra.mxu0 %v246
        %2795 = vmatprep.subr.mxu0 0.0
        %2796 = vmatpush1.msra.mxu0 0.0
        %2797 = vmatprep.subr.mxu0 0.0
        %2798 = vmatpush1.msra.mxu0 0.0
        %2799 = vmatprep.subr.mxu0 0.0
        %2800 = vmatpush1.msra.mxu0 0.0
        %2801 = vmatprep.subr.mxu0 0.0
        %2802 = vmatpush1.msra.mxu0 0.0
        %2803 = vmatprep.subr.mxu0 0.0
        %2804 = vmatpush1.msra.mxu0 0.0
        %2805 = vmatprep.subr.mxu0 0.0
        %2806 = vmatpush1.msra.mxu0 0.0
        %2807 = vmatprep.subr.mxu0 0.0
        %2808 = vmatpush1.msra.mxu0 0.0
        %2809 = vmatprep.subr.mxu0 0.0
        %2810 = vmatpush1.msra.mxu0 0.0
        %2811 = vmatprep.subr.mxu0 0.0
        %2812 = vmatpush1.msra.mxu0 0.0
        %2813 = vmatprep.subr.mxu0 0.0
        %2814 = vmatpush1.msra.mxu0 0.0
        %2815 = vmatprep.subr.mxu0 0.0
        %2816 = vmatpush1.msra.mxu0 0.0
        %2817 = vmatprep.subr.mxu0 0.0
        %2818 = vmatpush1.msra.mxu0 0.0
        %2819 = vmatprep.subr.mxu0 0.0
        %2820 = vmatpush1.msra.mxu0 0.0
        %2821 = vmatprep.subr.mxu0 0.0
        %2822 = vmatpush1.msra.mxu0 0.0
        %2823 = vmatprep.subr.mxu0 0.0
        %2824 = vmatpush1.msra.mxu0 0.0
        %2825 = vmatprep.subr.mxu0 0.0
        %2826 = vmatpush1.msra.mxu0 0.0
        %2827 = vmatprep.subr.mxu0 0.0
        %2828 = vmatpush1.msra.mxu0 0.0
        %2829 = vmatprep.subr.mxu0 0.0
        %2830 = vmatpush1.msra.mxu0 0.0
        %2831 = vmatprep.subr.mxu0 0.0
        %2832 = vmatpush1.msra.mxu0 0.0
        %2833 = vmatprep.subr.mxu0 0.0
        %2834 = vmatpush1.msra.mxu0 0.0
        %2835 = vmatprep.subr.mxu0 0.0
        %2836 = vmatpush1.msra.mxu0 0.0
        %2837 = vmatprep.subr.mxu0 0.0
        %2838 = vmatpush1.msra.mxu0 0.0
        %2839 = vmatprep.subr.mxu0 0.0
        %2840 = vmatpush1.msra.mxu0 0.0
        %2841 = vmatprep.subr.mxu0 0.0
        %2842 = vmatpush1.msra.mxu0 0.0
        %2843 = vmatprep.subr.mxu0 0.0
        %2844 = vmatpush1.msra.mxu0 0.0
        %2845 = vmatprep.subr.mxu0 0.0
        %2846 = vmatpush1.msra.mxu0 0.0
        %2847 = vmatprep.subr.mxu0 0.0
        %2848 = vmatpush1.msra.mxu0 0.0
        %2849 = vmatprep.subr.mxu0 0.0
        %2850 = vmatpush1.msra.mxu0 0.0
        %2851 = vmatprep.subr.mxu0 0.0
        %2852 = vmatpush1.msra.mxu0 0.0
        %2853 = vmatprep.subr.mxu0 0.0
        %2854 = vmatpush1.msra.mxu0 0.0
        %2855 = vmatprep.subr.mxu0 0.0
        %2856 = vmatpush1.msra.mxu0 0.0
        %2857 = vmatprep.mubr.f32.mxu0 0.0
        %2858 = vmatmul.mubr.f32.gmra.mrb[0].mxu0 %v306
        %v2859 = vpop.f32.mrb[0].mxu0
        %v2860 = vadd.f32 0.0, %v2859
        %v2861 = vpop.f32.mrb[0].mxu0
        %v2862 = vadd.f32 0.0, %v2861
        %2863 = vdwg.mxu0
        %2864 = vmatprep.subr.mxu0 %v249
        %2865 = vmatpush1.msra.mxu0 %v248
        %2866 = vmatprep.subr.mxu0 0.0
        %2867 = vmatpush1.msra.mxu0 0.0
        %2868 = vmatprep.subr.mxu0 0.0
        %2869 = vmatpush1.msra.mxu0 0.0
        %2870 = vmatprep.subr.mxu0 0.0
        %2871 = vmatpush1.msra.mxu0 0.0
        %2872 = vmatprep.subr.mxu0 0.0
        %2873 = vmatpush1.msra.mxu0 0.0
        %2874 = vmatprep.subr.mxu0 0.0
        %2875 = vmatpush1.msra.mxu0 0.0
        %2876 = vmatprep.subr.mxu0 0.0
        %2877 = vmatpush1.msra.mxu0 0.0
        %2878 = vmatprep.subr.mxu0 0.0
        %2879 = vmatpush1.msra.mxu0 0.0
        %2880 = vmatprep.subr.mxu0 0.0
        %2881 = vmatpush1.msra.mxu0 0.0
        %2882 = vmatprep.subr.mxu0 0.0
        %2883 = vmatpush1.msra.mxu0 0.0
        %2884 = vmatprep.subr.mxu0 0.0
        %2885 = vmatpush1.msra.mxu0 0.0
        %2886 = vmatprep.subr.mxu0 0.0
        %2887 = vmatpush1.msra.mxu0 0.0
        %2888 = vmatprep.subr.mxu0 0.0
        %2889 = vmatpush1.msra.mxu0 0.0
        %2890 = vmatprep.subr.mxu0 0.0
        %2891 = vmatpush1.msra.mxu0 0.0
        %2892 = vmatprep.subr.mxu0 0.0
        %2893 = vmatpush1.msra.mxu0 0.0
        %2894 = vmatprep.subr.mxu0 0.0
        %2895 = vmatpush1.msra.mxu0 0.0
        %2896 = vmatprep.subr.mxu0 0.0
        %2897 = vmatpush1.msra.mxu0 0.0
        %2898 = vmatprep.subr.mxu0 0.0
        %2899 = vmatpush1.msra.mxu0 0.0
        %2900 = vmatprep.subr.mxu0 0.0
        %2901 = vmatpush1.msra.mxu0 0.0
        %2902 = vmatprep.subr.mxu0 0.0
        %2903 = vmatpush1.msra.mxu0 0.0
        %2904 = vmatprep.subr.mxu0 0.0
        %2905 = vmatpush1.msra.mxu0 0.0
        %2906 = vmatprep.subr.mxu0 0.0
        %2907 = vmatpush1.msra.mxu0 0.0
        %2908 = vmatprep.subr.mxu0 0.0
        %2909 = vmatpush1.msra.mxu0 0.0
        %2910 = vmatprep.subr.mxu0 0.0
        %2911 = vmatpush1.msra.mxu0 0.0
        %2912 = vmatprep.subr.mxu0 0.0
        %2913 = vmatpush1.msra.mxu0 0.0
        %2914 = vmatprep.subr.mxu0 0.0
        %2915 = vmatpush1.msra.mxu0 0.0
        %2916 = vmatprep.subr.mxu0 0.0
        %2917 = vmatpush1.msra.mxu0 0.0
        %2918 = vmatprep.subr.mxu0 0.0
        %2919 = vmatpush1.msra.mxu0 0.0
        %2920 = vmatprep.subr.mxu0 0.0
        %2921 = vmatpush1.msra.mxu0 0.0
        %2922 = vmatprep.subr.mxu0 0.0
        %2923 = vmatpush1.msra.mxu0 0.0
        %2924 = vmatprep.subr.mxu0 0.0
        %2925 = vmatpush1.msra.mxu0 0.0
        %2926 = vmatprep.subr.mxu0 0.0
        %2927 = vmatpush1.msra.mxu0 0.0
        %2928 = vmatprep.mubr.f32.mxu0 0.0
        %2929 = vmatmul.mubr.f32.gmra.mrb[0].mxu0 %v306
        %v2930 = vpop.f32.mrb[0].mxu0
        %v2931 = vadd.f32 0.0, %v2930
        %v2932 = vpop.f32.mrb[0].mxu0
        %v2933 = vadd.f32 0.0, %v2932
        %2934 = vdwg.mxu0
        %2935 = vmatprep.subr.mxu0 %v251
        %2936 = vmatpush1.msra.mxu0 %v250
        %2937 = vmatprep.subr.mxu0 0.0
        %2938 = vmatpush1.msra.mxu0 0.0
        %2939 = vmatprep.subr.mxu0 0.0
        %2940 = vmatpush1.msra.mxu0 0.0
        %2941 = vmatprep.subr.mxu0 0.0
        %2942 = vmatpush1.msra.mxu0 0.0
        %2943 = vmatprep.subr.mxu0 0.0
        %2944 = vmatpush1.msra.mxu0 0.0
        %2945 = vmatprep.subr.mxu0 0.0
        %2946 = vmatpush1.msra.mxu0 0.0
        %2947 = vmatprep.subr.mxu0 0.0
        %2948 = vmatpush1.msra.mxu0 0.0
        %2949 = vmatprep.subr.mxu0 0.0
        %2950 = vmatpush1.msra.mxu0 0.0
        %2951 = vmatprep.subr.mxu0 0.0
        %2952 = vmatpush1.msra.mxu0 0.0
        %2953 = vmatprep.subr.mxu0 0.0
        %2954 = vmatpush1.msra.mxu0 0.0
        %2955 = vmatprep.subr.mxu0 0.0
        %2956 = vmatpush1.msra.mxu0 0.0
        %2957 = vmatprep.subr.mxu0 0.0
        %2958 = vmatpush1.msra.mxu0 0.0
        %2959 = vmatprep.subr.mxu0 0.0
        %2960 = vmatpush1.msra.mxu0 0.0
        %2961 = vmatprep.subr.mxu0 0.0
        %2962 = vmatpush1.msra.mxu0 0.0
        %2963 = vmatprep.subr.mxu0 0.0
        %2964 = vmatpush1.msra.mxu0 0.0
        %2965 = vmatprep.subr.mxu0 0.0
        %2966 = vmatpush1.msra.mxu0 0.0
        %2967 = vmatprep.subr.mxu0 0.0
        %2968 = vmatpush1.msra.mxu0 0.0
        %2969 = vmatprep.subr.mxu0 0.0
        %2970 = vmatpush1.msra.mxu0 0.0
        %2971 = vmatprep.subr.mxu0 0.0
        %2972 = vmatpush1.msra.mxu0 0.0
        %2973 = vmatprep.subr.mxu0 0.0
        %2974 = vmatpush1.msra.mxu0 0.0
        %2975 = vmatprep.subr.mxu0 0.0
        %2976 = vmatpush1.msra.mxu0 0.0
        %2977 = vmatprep.subr.mxu0 0.0
        %2978 = vmatpush1.msra.mxu0 0.0
        %2979 = vmatprep.subr.mxu0 0.0
        %2980 = vmatpush1.msra.mxu0 0.0
        %2981 = vmatprep.subr.mxu0 0.0
        %2982 = vmatpush1.msra.mxu0 0.0
        %2983 = vmatprep.subr.mxu0 0.0
        %2984 = vmatpush1.msra.mxu0 0.0
        %2985 = vmatprep.subr.mxu0 0.0
        %2986 = vmatpush1.msra.mxu0 0.0
        %2987 = vmatprep.subr.mxu0 0.0
        %2988 = vmatpush1.msra.mxu0 0.0
        %2989 = vmatprep.subr.mxu0 0.0
        %2990 = vmatpush1.msra.mxu0 0.0
        %2991 = vmatprep.subr.mxu0 0.0
        %2992 = vmatpush1.msra.mxu0 0.0
        %2993 = vmatprep.subr.mxu0 0.0
        %2994 = vmatpush1.msra.mxu0 0.0
        %2995 = vmatprep.subr.mxu0 0.0
        %2996 = vmatpush1.msra.mxu0 0.0
        %2997 = vmatprep.subr.mxu0 0.0
        %2998 = vmatpush1.msra.mxu0 0.0
        %2999 = vmatprep.mubr.f32.mxu0 0.0
        %3000 = vmatmul.mubr.f32.gmra.mrb[0].mxu0 %v306
        %v3001 = vpop.f32.mrb[0].mxu0
        %v3002 = vadd.f32 0.0, %v3001
        %v3003 = vpop.f32.mrb[0].mxu0
        %v3004 = vadd.f32 0.0, %v3003
        %3005 = vdwg.mxu0
        %3006 = vmatprep.subr.mxu0 %v253
        %3007 = vmatpush1.msra.mxu0 %v252
        %3008 = vmatprep.subr.mxu0 0.0
        %3009 = vmatpush1.msra.mxu0 0.0
        %3010 = vmatprep.subr.mxu0 0.0
        %3011 = vmatpush1.msra.mxu0 0.0
        %3012 = vmatprep.subr.mxu0 0.0
        %3013 = vmatpush1.msra.mxu0 0.0
        %3014 = vmatprep.subr.mxu0 0.0
        %3015 = vmatpush1.msra.mxu0 0.0
        %3016 = vmatprep.subr.mxu0 0.0
        %3017 = vmatpush1.msra.mxu0 0.0
        %3018 = vmatprep.subr.mxu0 0.0
        %3019 = vmatpush1.msra.mxu0 0.0
        %3020 = vmatprep.subr.mxu0 0.0
        %3021 = vmatpush1.msra.mxu0 0.0
        %3022 = vmatprep.subr.mxu0 0.0
        %3023 = vmatpush1.msra.mxu0 0.0
        %3024 = vmatprep.subr.mxu0 0.0
        %3025 = vmatpush1.msra.mxu0 0.0
        %3026 = vmatprep.subr.mxu0 0.0
        %3027 = vmatpush1.msra.mxu0 0.0
        %3028 = vmatprep.subr.mxu0 0.0
        %3029 = vmatpush1.msra.mxu0 0.0
        %3030 = vmatprep.subr.mxu0 0.0
        %3031 = vmatpush1.msra.mxu0 0.0
        %3032 = vmatprep.subr.mxu0 0.0
        %3033 = vmatpush1.msra.mxu0 0.0
        %3034 = vmatprep.subr.mxu0 0.0
        %3035 = vmatpush1.msra.mxu0 0.0
        %3036 = vmatprep.subr.mxu0 0.0
        %3037 = vmatpush1.msra.mxu0 0.0
        %3038 = vmatprep.subr.mxu0 0.0
        %3039 = vmatpush1.msra.mxu0 0.0
        %3040 = vmatprep.subr.mxu0 0.0
        %3041 = vmatpush1.msra.mxu0 0.0
        %3042 = vmatprep.subr.mxu0 0.0
        %3043 = vmatpush1.msra.mxu0 0.0
        %3044 = vmatprep.subr.mxu0 0.0
        %3045 = vmatpush1.msra.mxu0 0.0
        %3046 = vmatprep.subr.mxu0 0.0
        %3047 = vmatpush1.msra.mxu0 0.0
        %3048 = vmatprep.subr.mxu0 0.0
        %3049 = vmatpush1.msra.mxu0 0.0
        %3050 = vmatprep.subr.mxu0 0.0
        %3051 = vmatpush1.msra.mxu0 0.0
        %3052 = vmatprep.subr.mxu0 0.0
        %3053 = vmatpush1.msra.mxu0 0.0
        %3054 = vmatprep.subr.mxu0 0.0
        %3055 = vmatpush1.msra.mxu0 0.0
        %3056 = vmatprep.subr.mxu0 0.0
        %3057 = vmatpush1.msra.mxu0 0.0
        %3058 = vmatprep.subr.mxu0 0.0
        %3059 = vmatpush1.msra.mxu0 0.0
        %3060 = vmatprep.subr.mxu0 0.0
        %3061 = vmatpush1.msra.mxu0 0.0
        %3062 = vmatprep.subr.mxu0 0.0
        %3063 = vmatpush1.msra.mxu0 0.0
        %3064 = vmatprep.subr.mxu0 0.0
        %3065 = vmatpush1.msra.mxu0 0.0
        %3066 = vmatprep.subr.mxu0 0.0
        %3067 = vmatpush1.msra.mxu0 0.0
        %3068 = vmatprep.subr.mxu0 0.0
        %3069 = vmatpush1.msra.mxu0 0.0
        %3070 = vmatprep.mubr.f32.mxu0 0.0
        %3071 = vmatmul.mubr.f32.gmra.mrb[0].mxu0 %v306
        %v3072 = vpop.f32.mrb[0].mxu0
        %v3073 = vadd.f32 0.0, %v3072
        %v3074 = vpop.f32.mrb[0].mxu0
        %v3075 = vadd.f32 0.0, %v3074
        %3076 = vdwg.mxu0
        %3077 = vmatprep.subr.mxu0 %v255
        %3078 = vmatpush1.msra.mxu0 %v254
        %3079 = vmatprep.subr.mxu0 0.0
        %3080 = vmatpush1.msra.mxu0 0.0
        %3081 = vmatprep.subr.mxu0 0.0
        %3082 = vmatpush1.msra.mxu0 0.0
        %3083 = vmatprep.subr.mxu0 0.0
        %3084 = vmatpush1.msra.mxu0 0.0
        %3085 = vmatprep.subr.mxu0 0.0
        %3086 = vmatpush1.msra.mxu0 0.0
        %3087 = vmatprep.subr.mxu0 0.0
        %3088 = vmatpush1.msra.mxu0 0.0
        %3089 = vmatprep.subr.mxu0 0.0
        %3090 = vmatpush1.msra.mxu0 0.0
        %3091 = vmatprep.subr.mxu0 0.0
        %3092 = vmatpush1.msra.mxu0 0.0
        %3093 = vmatprep.subr.mxu0 0.0
        %3094 = vmatpush1.msra.mxu0 0.0
        %3095 = vmatprep.subr.mxu0 0.0
        %3096 = vmatpush1.msra.mxu0 0.0
        %3097 = vmatprep.subr.mxu0 0.0
        %3098 = vmatpush1.msra.mxu0 0.0
        %3099 = vmatprep.subr.mxu0 0.0
        %3100 = vmatpush1.msra.mxu0 0.0
        %3101 = vmatprep.subr.mxu0 0.0
        %3102 = vmatpush1.msra.mxu0 0.0
        %3103 = vmatprep.subr.mxu0 0.0
        %3104 = vmatpush1.msra.mxu0 0.0
        %3105 = vmatprep.subr.mxu0 0.0
        %3106 = vmatpush1.msra.mxu0 0.0
        %3107 = vmatprep.subr.mxu0 0.0
        %3108 = vmatpush1.msra.mxu0 0.0
        %3109 = vmatprep.subr.mxu0 0.0
        %3110 = vmatpush1.msra.mxu0 0.0
        %3111 = vmatprep.subr.mxu0 0.0
        %3112 = vmatpush1.msra.mxu0 0.0
        %3113 = vmatprep.subr.mxu0 0.0
        %3114 = vmatpush1.msra.mxu0 0.0
        %3115 = vmatprep.subr.mxu0 0.0
        %3116 = vmatpush1.msra.mxu0 0.0
        %3117 = vmatprep.subr.mxu0 0.0
        %3118 = vmatpush1.msra.mxu0 0.0
        %3119 = vmatprep.subr.mxu0 0.0
        %3120 = vmatpush1.msra.mxu0 0.0
        %3121 = vmatprep.subr.mxu0 0.0
        %3122 = vmatpush1.msra.mxu0 0.0
        %3123 = vmatprep.subr.mxu0 0.0
        %3124 = vmatpush1.msra.mxu0 0.0
        %3125 = vmatprep.subr.mxu0 0.0
        %3126 = vmatpush1.msra.mxu0 0.0
        %3127 = vmatprep.subr.mxu0 0.0
        %3128 = vmatpush1.msra.mxu0 0.0
        %3129 = vmatprep.subr.mxu0 0.0
        %3130 = vmatpush1.msra.mxu0 0.0
        %3131 = vmatprep.subr.mxu0 0.0
        %3132 = vmatpush1.msra.mxu0 0.0
        %3133 = vmatprep.subr.mxu0 0.0
        %3134 = vmatpush1.msra.mxu0 0.0
        %3135 = vmatprep.subr.mxu0 0.0
        %3136 = vmatpush1.msra.mxu0 0.0
        %3137 = vmatprep.subr.mxu0 0.0
        %3138 = vmatpush1.msra.mxu0 0.0
        %3139 = vmatprep.subr.mxu0 0.0
        %3140 = vmatpush1.msra.mxu0 0.0
        %3141 = vmatprep.mubr.f32.mxu0 0.0
        %3142 = vmatmul.mubr.f32.gmra.mrb[0].mxu0 %v306
        %v3143 = vpop.f32.mrb[0].mxu0
        %v3144 = vadd.f32 0.0, %v3143
        %v3145 = vpop.f32.mrb[0].mxu0
        %v3146 = vadd.f32 0.0, %v3145
        %3147 = vdwg.mxu0
        %3148 = vmatprep.subr.mxu0 %v257
        %3149 = vmatpush1.msra.mxu0 %v256
        %3150 = vmatprep.subr.mxu0 0.0
        %3151 = vmatpush1.msra.mxu0 0.0
        %3152 = vmatprep.subr.mxu0 0.0
        %3153 = vmatpush1.msra.mxu0 0.0
        %3154 = vmatprep.subr.mxu0 0.0
        %3155 = vmatpush1.msra.mxu0 0.0
        %3156 = vmatprep.subr.mxu0 0.0
        %3157 = vmatpush1.msra.mxu0 0.0
        %3158 = vmatprep.subr.mxu0 0.0
        %3159 = vmatpush1.msra.mxu0 0.0
        %3160 = vmatprep.subr.mxu0 0.0
        %3161 = vmatpush1.msra.mxu0 0.0
        %3162 = vmatprep.subr.mxu0 0.0
        %3163 = vmatpush1.msra.mxu0 0.0
        %3164 = vmatprep.subr.mxu0 0.0
        %3165 = vmatpush1.msra.mxu0 0.0
        %3166 = vmatprep.subr.mxu0 0.0
        %3167 = vmatpush1.msra.mxu0 0.0
        %3168 = vmatprep.subr.mxu0 0.0
        %3169 = vmatpush1.msra.mxu0 0.0
        %3170 = vmatprep.subr.mxu0 0.0
        %3171 = vmatpush1.msra.mxu0 0.0
        %3172 = vmatprep.subr.mxu0 0.0
        %3173 = vmatpush1.msra.mxu0 0.0
        %3174 = vmatprep.subr.mxu0 0.0
        %3175 = vmatpush1.msra.mxu0 0.0
        %3176 = vmatprep.subr.mxu0 0.0
        %3177 = vmatpush1.msra.mxu0 0.0
        %3178 = vmatprep.subr.mxu0 0.0
        %3179 = vmatpush1.msra.mxu0 0.0
        %3180 = vmatprep.subr.mxu0 0.0
        %3181 = vmatpush1.msra.mxu0 0.0
        %3182 = vmatprep.subr.mxu0 0.0
        %3183 = vmatpush1.msra.mxu0 0.0
        %3184 = vmatprep.subr.mxu0 0.0
        %3185 = vmatpush1.msra.mxu0 0.0
        %3186 = vmatprep.subr.mxu0 0.0
        %3187 = vmatpush1.msra.mxu0 0.0
        %3188 = vmatprep.subr.mxu0 0.0
        %3189 = vmatpush1.msra.mxu0 0.0
        %3190 = vmatprep.subr.mxu0 0.0
        %3191 = vmatpush1.msra.mxu0 0.0
        %3192 = vmatprep.subr.mxu0 0.0
        %3193 = vmatpush1.msra.mxu0 0.0
        %3194 = vmatprep.subr.mxu0 0.0
        %3195 = vmatpush1.msra.mxu0 0.0
        %3196 = vmatprep.subr.mxu0 0.0
        %3197 = vmatpush1.msra.mxu0 0.0
        %3198 = vmatprep.subr.mxu0 0.0
        %3199 = vmatpush1.msra.mxu0 0.0
        %3200 = vmatprep.subr.mxu0 0.0
        %3201 = vmatpush1.msra.mxu0 0.0
        %3202 = vmatprep.subr.mxu0 0.0
        %3203 = vmatpush1.msra.mxu0 0.0
        %3204 = vmatprep.subr.mxu0 0.0
        %3205 = vmatpush1.msra.mxu0 0.0
        %3206 = vmatprep.subr.mxu0 0.0
        %3207 = vmatpush1.msra.mxu0 0.0
        %3208 = vmatprep.subr.mxu0 0.0
        %3209 = vmatpush1.msra.mxu0 0.0
        %3210 = vmatprep.subr.mxu0 0.0
        %3211 = vmatpush1.msra.mxu0 0.0
        %3212 = vmatprep.mubr.f32.mxu0 0.0
        %3213 = vmatmul.mubr.f32.gmra.mrb[0].mxu0 %v306
        %v3214 = vpop.f32.mrb[0].mxu0
        %v3215 = vadd.f32 0.0, %v3214
        %v3216 = vpop.f32.mrb[0].mxu0
        %v3217 = vadd.f32 0.0, %v3216
        %3218 = vdwg.mxu0
        %3219 = vmatprep.subr.mxu0 %v259
        %3220 = vmatpush1.msra.mxu0 %v258
        %3221 = vmatprep.subr.mxu0 0.0
        %3222 = vmatpush1.msra.mxu0 0.0
        %3223 = vmatprep.subr.mxu0 0.0
        %3224 = vmatpush1.msra.mxu0 0.0
        %3225 = vmatprep.subr.mxu0 0.0
        %3226 = vmatpush1.msra.mxu0 0.0
        %3227 = vmatprep.subr.mxu0 0.0
        %3228 = vmatpush1.msra.mxu0 0.0
        %3229 = vmatprep.subr.mxu0 0.0
        %3230 = vmatpush1.msra.mxu0 0.0
        %3231 = vmatprep.subr.mxu0 0.0
        %3232 = vmatpush1.msra.mxu0 0.0
        %3233 = vmatprep.subr.mxu0 0.0
        %3234 = vmatpush1.msra.mxu0 0.0
        %3235 = vmatprep.subr.mxu0 0.0
        %3236 = vmatpush1.msra.mxu0 0.0
        %3237 = vmatprep.subr.mxu0 0.0
        %3238 = vmatpush1.msra.mxu0 0.0
        %3239 = vmatprep.subr.mxu0 0.0
        %3240 = vmatpush1.msra.mxu0 0.0
        %3241 = vmatprep.subr.mxu0 0.0
        %3242 = vmatpush1.msra.mxu0 0.0
        %3243 = vmatprep.subr.mxu0 0.0
        %3244 = vmatpush1.msra.mxu0 0.0
        %3245 = vmatprep.subr.mxu0 0.0
        %3246 = vmatpush1.msra.mxu0 0.0
        %3247 = vmatprep.subr.mxu0 0.0
        %3248 = vmatpush1.msra.mxu0 0.0
        %3249 = vmatprep.subr.mxu0 0.0
        %3250 = vmatpush1.msra.mxu0 0.0
        %3251 = vmatprep.subr.mxu0 0.0
        %3252 = vmatpush1.msra.mxu0 0.0
        %3253 = vmatprep.subr.mxu0 0.0
        %3254 = vmatpush1.msra.mxu0 0.0
        %3255 = vmatprep.subr.mxu0 0.0
        %3256 = vmatpush1.msra.mxu0 0.0
        %3257 = vmatprep.subr.mxu0 0.0
        %3258 = vmatpush1.msra.mxu0 0.0
        %3259 = vmatprep.subr.mxu0 0.0
        %3260 = vmatpush1.msra.mxu0 0.0
        %3261 = vmatprep.subr.mxu0 0.0
        %3262 = vmatpush1.msra.mxu0 0.0
        %3263 = vmatprep.subr.mxu0 0.0
        %3264 = vmatpush1.msra.mxu0 0.0
        %3265 = vmatprep.subr.mxu0 0.0
        %3266 = vmatpush1.msra.mxu0 0.0
        %3267 = vmatprep.subr.mxu0 0.0
        %3268 = vmatpush1.msra.mxu0 0.0
        %3269 = vmatprep.subr.mxu0 0.0
        %3270 = vmatpush1.msra.mxu0 0.0
        %3271 = vmatprep.subr.mxu0 0.0
        %3272 = vmatpush1.msra.mxu0 0.0
        %3273 = vmatprep.subr.mxu0 0.0
        %3274 = vmatpush1.msra.mxu0 0.0
        %3275 = vmatprep.subr.mxu0 0.0
        %3276 = vmatpush1.msra.mxu0 0.0
        %3277 = vmatprep.subr.mxu0 0.0
        %3278 = vmatpush1.msra.mxu0 0.0
        %3279 = vmatprep.subr.mxu0 0.0
        %3280 = vmatpush1.msra.mxu0 0.0
        %3281 = vmatprep.subr.mxu0 0.0
        %3282 = vmatpush1.msra.mxu0 0.0
        %3283 = vmatprep.mubr.f32.mxu0 0.0
        %3284 = vmatmul.mubr.f32.gmra.mrb[0].mxu0 %v306
        %v3285 = vpop.f32.mrb[0].mxu0
        %v3286 = vadd.f32 0.0, %v3285
        %v3287 = vpop.f32.mrb[0].mxu0
        %v3288 = vadd.f32 0.0, %v3287
        %3289 = vdwg.mxu0
        %3290 = vmatprep.subr.mxu0 %v261
        %3291 = vmatpush1.msra.mxu0 %v260
        %3292 = vmatprep.subr.mxu0 0.0
        %3293 = vmatpush1.msra.mxu0 0.0
        %3294 = vmatprep.subr.mxu0 0.0
        %3295 = vmatpush1.msra.mxu0 0.0
        %3296 = vmatprep.subr.mxu0 0.0
        %3297 = vmatpush1.msra.mxu0 0.0
        %3298 = vmatprep.subr.mxu0 0.0
        %3299 = vmatpush1.msra.mxu0 0.0
        %3300 = vmatprep.subr.mxu0 0.0
        %3301 = vmatpush1.msra.mxu0 0.0
        %3302 = vmatprep.subr.mxu0 0.0
        %3303 = vmatpush1.msra.mxu0 0.0
        %3304 = vmatprep.subr.mxu0 0.0
        %3305 = vmatpush1.msra.mxu0 0.0
        %3306 = vmatprep.subr.mxu0 0.0
        %3307 = vmatpush1.msra.mxu0 0.0
        %3308 = vmatprep.subr.mxu0 0.0
        %3309 = vmatpush1.msra.mxu0 0.0
        %3310 = vmatprep.subr.mxu0 0.0
        %3311 = vmatpush1.msra.mxu0 0.0
        %3312 = vmatprep.subr.mxu0 0.0
        %3313 = vmatpush1.msra.mxu0 0.0
        %3314 = vmatprep.subr.mxu0 0.0
        %3315 = vmatpush1.msra.mxu0 0.0
        %3316 = vmatprep.subr.mxu0 0.0
        %3317 = vmatpush1.msra.mxu0 0.0
        %3318 = vmatprep.subr.mxu0 0.0
        %3319 = vmatpush1.msra.mxu0 0.0
        %3320 = vmatprep.subr.mxu0 0.0
        %3321 = vmatpush1.msra.mxu0 0.0
        %3322 = vmatprep.subr.mxu0 0.0
        %3323 = vmatpush1.msra.mxu0 0.0
        %3324 = vmatprep.subr.mxu0 0.0
        %3325 = vmatpush1.msra.mxu0 0.0
        %3326 = vmatprep.subr.mxu0 0.0
        %3327 = vmatpush1.msra.mxu0 0.0
        %3328 = vmatprep.subr.mxu0 0.0
        %3329 = vmatpush1.msra.mxu0 0.0
        %3330 = vmatprep.subr.mxu0 0.0
        %3331 = vmatpush1.msra.mxu0 0.0
        %3332 = vmatprep.subr.mxu0 0.0
        %3333 = vmatpush1.msra.mxu0 0.0
        %3334 = vmatprep.subr.mxu0 0.0
        %3335 = vmatpush1.msra.mxu0 0.0
        %3336 = vmatprep.subr.mxu0 0.0
        %3337 = vmatpush1.msra.mxu0 0.0
        %3338 = vmatprep.subr.mxu0 0.0
        %3339 = vmatpush1.msra.mxu0 0.0
        %3340 = vmatprep.subr.mxu0 0.0
        %3341 = vmatpush1.msra.mxu0 0.0
        %3342 = vmatprep.subr.mxu0 0.0
        %3343 = vmatpush1.msra.mxu0 0.0
        %3344 = vmatprep.subr.mxu0 0.0
        %3345 = vmatpush1.msra.mxu0 0.0
        %3346 = vmatprep.subr.mxu0 0.0
        %3347 = vmatpush1.msra.mxu0 0.0
        %3348 = vmatprep.subr.mxu0 0.0
        %3349 = vmatpush1.msra.mxu0 0.0
        %3350 = vmatprep.subr.mxu0 0.0
        %3351 = vmatpush1.msra.mxu0 0.0
        %3352 = vmatprep.subr.mxu0 0.0
        %3353 = vmatpush1.msra.mxu0 0.0
        %3354 = vmatprep.mubr.f32.mxu0 0.0
        %3355 = vmatmul.mubr.f32.gmra.mrb[0].mxu0 %v306
        %v3356 = vpop.f32.mrb[0].mxu0
        %v3357 = vadd.f32 0.0, %v3356
        %v3358 = vpop.f32.mrb[0].mxu0
        %v3359 = vadd.f32 0.0, %v3358
        %3360 = vdwg.mxu0
        %3361 = vmatprep.subr.mxu0 %v263
        %3362 = vmatpush1.msra.mxu0 %v262
        %3363 = vmatprep.subr.mxu0 0.0
        %3364 = vmatpush1.msra.mxu0 0.0
        %3365 = vmatprep.subr.mxu0 0.0
        %3366 = vmatpush1.msra.mxu0 0.0
        %3367 = vmatprep.subr.mxu0 0.0
        %3368 = vmatpush1.msra.mxu0 0.0
        %3369 = vmatprep.subr.mxu0 0.0
        %3370 = vmatpush1.msra.mxu0 0.0
        %3371 = vmatprep.subr.mxu0 0.0
        %3372 = vmatpush1.msra.mxu0 0.0
        %3373 = vmatprep.subr.mxu0 0.0
        %3374 = vmatpush1.msra.mxu0 0.0
        %3375 = vmatprep.subr.mxu0 0.0
        %3376 = vmatpush1.msra.mxu0 0.0
        %3377 = vmatprep.subr.mxu0 0.0
        %3378 = vmatpush1.msra.mxu0 0.0
        %3379 = vmatprep.subr.mxu0 0.0
        %3380 = vmatpush1.msra.mxu0 0.0
        %3381 = vmatprep.subr.mxu0 0.0
        %3382 = vmatpush1.msra.mxu0 0.0
        %3383 = vmatprep.subr.mxu0 0.0
        %3384 = vmatpush1.msra.mxu0 0.0
        %3385 = vmatprep.subr.mxu0 0.0
        %3386 = vmatpush1.msra.mxu0 0.0
        %3387 = vmatprep.subr.mxu0 0.0
        %3388 = vmatpush1.msra.mxu0 0.0
        %3389 = vmatprep.subr.mxu0 0.0
        %3390 = vmatpush1.msra.mxu0 0.0
        %3391 = vmatprep.subr.mxu0 0.0
        %3392 = vmatpush1.msra.mxu0 0.0
        %3393 = vmatprep.subr.mxu0 0.0
        %3394 = vmatpush1.msra.mxu0 0.0
        %3395 = vmatprep.subr.mxu0 0.0
        %3396 = vmatpush1.msra.mxu0 0.0
        %3397 = vmatprep.subr.mxu0 0.0
        %3398 = vmatpush1.msra.mxu0 0.0
        %3399 = vmatprep.subr.mxu0 0.0
        %3400 = vmatpush1.msra.mxu0 0.0
        %3401 = vmatprep.subr.mxu0 0.0
        %3402 = vmatpush1.msra.mxu0 0.0
        %3403 = vmatprep.subr.mxu0 0.0
        %3404 = vmatpush1.msra.mxu0 0.0
        %3405 = vmatprep.subr.mxu0 0.0
        %3406 = vmatpush1.msra.mxu0 0.0
        %3407 = vmatprep.subr.mxu0 0.0
        %3408 = vmatpush1.msra.mxu0 0.0
        %3409 = vmatprep.subr.mxu0 0.0
        %3410 = vmatpush1.msra.mxu0 0.0
        %3411 = vmatprep.subr.mxu0 0.0
        %3412 = vmatpush1.msra.mxu0 0.0
        %3413 = vmatprep.subr.mxu0 0.0
        %3414 = vmatpush1.msra.mxu0 0.0
        %3415 = vmatprep.subr.mxu0 0.0
        %3416 = vmatpush1.msra.mxu0 0.0
        %3417 = vmatprep.subr.mxu0 0.0
        %3418 = vmatpush1.msra.mxu0 0.0
        %3419 = vmatprep.subr.mxu0 0.0
        %3420 = vmatpush1.msra.mxu0 0.0
        %3421 = vmatprep.subr.mxu0 0.0
        %3422 = vmatpush1.msra.mxu0 0.0
        %3423 = vmatprep.subr.mxu0 0.0
        %3424 = vmatpush1.msra.mxu0 0.0
        %3425 = vmatprep.mubr.f32.mxu0 0.0
        %3426 = vmatmul.mubr.f32.gmra.mrb[0].mxu0 %v306
        %v3427 = vpop.f32.mrb[0].mxu0
        %v3428 = vadd.f32 0.0, %v3427
        %v3429 = vpop.f32.mrb[0].mxu0
        %v3430 = vadd.f32 0.0, %v3429
        %3431 = vdwg.mxu0
        %3432 = vmatprep.subr.mxu0 %v265
        %3433 = vmatpush1.msra.mxu0 %v264
        %3434 = vmatprep.subr.mxu0 0.0
        %3435 = vmatpush1.msra.mxu0 0.0
        %3436 = vmatprep.subr.mxu0 0.0
        %3437 = vmatpush1.msra.mxu0 0.0
        %3438 = vmatprep.subr.mxu0 0.0
        %3439 = vmatpush1.msra.mxu0 0.0
        %3440 = vmatprep.subr.mxu0 0.0
        %3441 = vmatpush1.msra.mxu0 0.0
        %3442 = vmatprep.subr.mxu0 0.0
        %3443 = vmatpush1.msra.mxu0 0.0
        %3444 = vmatprep.subr.mxu0 0.0
        %3445 = vmatpush1.msra.mxu0 0.0
        %3446 = vmatprep.subr.mxu0 0.0
        %3447 = vmatpush1.msra.mxu0 0.0
        %3448 = vmatprep.subr.mxu0 0.0
        %3449 = vmatpush1.msra.mxu0 0.0
        %3450 = vmatprep.subr.mxu0 0.0
        %3451 = vmatpush1.msra.mxu0 0.0
        %3452 = vmatprep.subr.mxu0 0.0
        %3453 = vmatpush1.msra.mxu0 0.0
        %3454 = vmatprep.subr.mxu0 0.0
        %3455 = vmatpush1.msra.mxu0 0.0
        %3456 = vmatprep.subr.mxu0 0.0
        %3457 = vmatpush1.msra.mxu0 0.0
        %3458 = vmatprep.subr.mxu0 0.0
        %3459 = vmatpush1.msra.mxu0 0.0
        %3460 = vmatprep.subr.mxu0 0.0
        %3461 = vmatpush1.msra.mxu0 0.0
        %3462 = vmatprep.subr.mxu0 0.0
        %3463 = vmatpush1.msra.mxu0 0.0
        %3464 = vmatprep.subr.mxu0 0.0
        %3465 = vmatpush1.msra.mxu0 0.0
        %3466 = vmatprep.subr.mxu0 0.0
        %3467 = vmatpush1.msra.mxu0 0.0
        %3468 = vmatprep.subr.mxu0 0.0
        %3469 = vmatpush1.msra.mxu0 0.0
        %3470 = vmatprep.subr.mxu0 0.0
        %3471 = vmatpush1.msra.mxu0 0.0
        %3472 = vmatprep.subr.mxu0 0.0
        %3473 = vmatpush1.msra.mxu0 0.0
        %3474 = vmatprep.subr.mxu0 0.0
        %3475 = vmatpush1.msra.mxu0 0.0
        %3476 = vmatprep.subr.mxu0 0.0
        %3477 = vmatpush1.msra.mxu0 0.0
        %3478 = vmatprep.subr.mxu0 0.0
        %3479 = vmatpush1.msra.mxu0 0.0
        %3480 = vmatprep.subr.mxu0 0.0
        %3481 = vmatpush1.msra.mxu0 0.0
        %3482 = vmatprep.subr.mxu0 0.0
        %3483 = vmatpush1.msra.mxu0 0.0
        %3484 = vmatprep.subr.mxu0 0.0
        %3485 = vmatpush1.msra.mxu0 0.0
        %3486 = vmatprep.subr.mxu0 0.0
        %3487 = vmatpush1.msra.mxu0 0.0
        %3488 = vmatprep.subr.mxu0 0.0
        %3489 = vmatpush1.msra.mxu0 0.0
        %3490 = vmatprep.subr.mxu0 0.0
        %3491 = vmatpush1.msra.mxu0 0.0
        %3492 = vmatprep.subr.mxu0 0.0
        %3493 = vmatpush1.msra.mxu0 0.0
        %3494 = vmatprep.subr.mxu0 0.0
        %3495 = vmatpush1.msra.mxu0 0.0
        %3496 = vmatprep.mubr.f32.mxu0 0.0
        %3497 = vmatmul.mubr.f32.gmra.mrb[0].mxu0 %v306
        %v3498 = vpop.f32.mrb[0].mxu0
        %v3499 = vadd.f32 0.0, %v3498
        %v3500 = vpop.f32.mrb[0].mxu0
        %v3501 = vadd.f32 0.0, %v3500
        %3502 = vdwg.mxu0
        %3503 = vmatprep.subr.mxu0 %v267
        %3504 = vmatpush1.msra.mxu0 %v266
        %3505 = vmatprep.subr.mxu0 0.0
        %3506 = vmatpush1.msra.mxu0 0.0
        %3507 = vmatprep.subr.mxu0 0.0
        %3508 = vmatpush1.msra.mxu0 0.0
        %3509 = vmatprep.subr.mxu0 0.0
        %3510 = vmatpush1.msra.mxu0 0.0
        %3511 = vmatprep.subr.mxu0 0.0
        %3512 = vmatpush1.msra.mxu0 0.0
        %3513 = vmatprep.subr.mxu0 0.0
        %3514 = vmatpush1.msra.mxu0 0.0
        %3515 = vmatprep.subr.mxu0 0.0
        %3516 = vmatpush1.msra.mxu0 0.0
        %3517 = vmatprep.subr.mxu0 0.0
        %3518 = vmatpush1.msra.mxu0 0.0
        %3519 = vmatprep.subr.mxu0 0.0
        %3520 = vmatpush1.msra.mxu0 0.0
        %3521 = vmatprep.subr.mxu0 0.0
        %3522 = vmatpush1.msra.mxu0 0.0
        %3523 = vmatprep.subr.mxu0 0.0
        %3524 = vmatpush1.msra.mxu0 0.0
        %3525 = vmatprep.subr.mxu0 0.0
        %3526 = vmatpush1.msra.mxu0 0.0
        %3527 = vmatprep.subr.mxu0 0.0
        %3528 = vmatpush1.msra.mxu0 0.0
        %3529 = vmatprep.subr.mxu0 0.0
        %3530 = vmatpush1.msra.mxu0 0.0
        %3531 = vmatprep.subr.mxu0 0.0
        %3532 = vmatpush1.msra.mxu0 0.0
        %3533 = vmatprep.subr.mxu0 0.0
        %3534 = vmatpush1.msra.mxu0 0.0
        %3535 = vmatprep.subr.mxu0 0.0
        %3536 = vmatpush1.msra.mxu0 0.0
        %3537 = vmatprep.subr.mxu0 0.0
        %3538 = vmatpush1.msra.mxu0 0.0
        %3539 = vmatprep.subr.mxu0 0.0
        %3540 = vmatpush1.msra.mxu0 0.0
        %3541 = vmatprep.subr.mxu0 0.0
        %3542 = vmatpush1.msra.mxu0 0.0
        %3543 = vmatprep.subr.mxu0 0.0
        %3544 = vmatpush1.msra.mxu0 0.0
        %3545 = vmatprep.subr.mxu0 0.0
        %3546 = vmatpush1.msra.mxu0 0.0
        %3547 = vmatprep.subr.mxu0 0.0
        %3548 = vmatpush1.msra.mxu0 0.0
        %3549 = vmatprep.subr.mxu0 0.0
        %3550 = vmatpush1.msra.mxu0 0.0
        %3551 = vmatprep.subr.mxu0 0.0
        %3552 = vmatpush1.msra.mxu0 0.0
        %3553 = vmatprep.subr.mxu0 0.0
        %3554 = vmatpush1.msra.mxu0 0.0
        %3555 = vmatprep.subr.mxu0 0.0
        %3556 = vmatpush1.msra.mxu0 0.0
        %3557 = vmatprep.subr.mxu0 0.0
        %3558 = vmatpush1.msra.mxu0 0.0
        %3559 = vmatprep.subr.mxu0 0.0
        %3560 = vmatpush1.msra.mxu0 0.0
        %3561 = vmatprep.subr.mxu0 0.0
        %3562 = vmatpush1.msra.mxu0 0.0
        %3563 = vmatprep.subr.mxu0 0.0
        %3564 = vmatpush1.msra.mxu0 0.0
        %3565 = vmatprep.subr.mxu0 0.0
        %3566 = vmatpush1.msra.mxu0 0.0
        %3567 = vmatprep.mubr.f32.mxu0 0.0
        %3568 = vmatmul.mubr.f32.gmra.mrb[0].mxu0 %v306
        %v3569 = vpop.f32.mrb[0].mxu0
        %v3570 = vadd.f32 0.0, %v3569
        %v3571 = vpop.f32.mrb[0].mxu0
        %v3572 = vadd.f32 0.0, %v3571
        %3573 = vdwg.mxu0
        %3574 = vmatprep.subr.mxu0 %v269
        %3575 = vmatpush1.msra.mxu0 %v268
        %3576 = vmatprep.subr.mxu0 0.0
        %3577 = vmatpush1.msra.mxu0 0.0
        %3578 = vmatprep.subr.mxu0 0.0
        %3579 = vmatpush1.msra.mxu0 0.0
        %3580 = vmatprep.subr.mxu0 0.0
        %3581 = vmatpush1.msra.mxu0 0.0
        %3582 = vmatprep.subr.mxu0 0.0
        %3583 = vmatpush1.msra.mxu0 0.0
        %3584 = vmatprep.subr.mxu0 0.0
        %3585 = vmatpush1.msra.mxu0 0.0
        %3586 = vmatprep.subr.mxu0 0.0
        %3587 = vmatpush1.msra.mxu0 0.0
        %3588 = vmatprep.subr.mxu0 0.0
        %3589 = vmatpush1.msra.mxu0 0.0
        %3590 = vmatprep.subr.mxu0 0.0
        %3591 = vmatpush1.msra.mxu0 0.0
        %3592 = vmatprep.subr.mxu0 0.0
        %3593 = vmatpush1.msra.mxu0 0.0
        %3594 = vmatprep.subr.mxu0 0.0
        %3595 = vmatpush1.msra.mxu0 0.0
        %3596 = vmatprep.subr.mxu0 0.0
        %3597 = vmatpush1.msra.mxu0 0.0
        %3598 = vmatprep.subr.mxu0 0.0
        %3599 = vmatpush1.msra.mxu0 0.0
        %3600 = vmatprep.subr.mxu0 0.0
        %3601 = vmatpush1.msra.mxu0 0.0
        %3602 = vmatprep.subr.mxu0 0.0
        %3603 = vmatpush1.msra.mxu0 0.0
        %3604 = vmatprep.subr.mxu0 0.0
        %3605 = vmatpush1.msra.mxu0 0.0
        %3606 = vmatprep.subr.mxu0 0.0
        %3607 = vmatpush1.msra.mxu0 0.0
        %3608 = vmatprep.subr.mxu0 0.0
        %3609 = vmatpush1.msra.mxu0 0.0
        %3610 = vmatprep.subr.mxu0 0.0
        %3611 = vmatpush1.msra.mxu0 0.0
        %3612 = vmatprep.subr.mxu0 0.0
        %3613 = vmatpush1.msra.mxu0 0.0
        %3614 = vmatprep.subr.mxu0 0.0
        %3615 = vmatpush1.msra.mxu0 0.0
        %3616 = vmatprep.subr.mxu0 0.0
        %3617 = vmatpush1.msra.mxu0 0.0
        %3618 = vmatprep.subr.mxu0 0.0
        %3619 = vmatpush1.msra.mxu0 0.0
        %3620 = vmatprep.subr.mxu0 0.0
        %3621 = vmatpush1.msra.mxu0 0.0
        %3622 = vmatprep.subr.mxu0 0.0
        %3623 = vmatpush1.msra.mxu0 0.0
        %3624 = vmatprep.subr.mxu0 0.0
        %3625 = vmatpush1.msra.mxu0 0.0
        %3626 = vmatprep.subr.mxu0 0.0
        %3627 = vmatpush1.msra.mxu0 0.0
        %3628 = vmatprep.subr.mxu0 0.0
        %3629 = vmatpush1.msra.mxu0 0.0
        %3630 = vmatprep.subr.mxu0 0.0
        %3631 = vmatpush1.msra.mxu0 0.0
        %3632 = vmatprep.subr.mxu0 0.0
        %3633 = vmatpush1.msra.mxu0 0.0
        %3634 = vmatprep.subr.mxu0 0.0
        %3635 = vmatpush1.msra.mxu0 0.0
        %3636 = vmatprep.subr.mxu0 0.0
        %3637 = vmatpush1.msra.mxu0 0.0
        %3638 = vmatprep.mubr.f32.mxu0 0.0
        %3639 = vmatmul.mubr.f32.gmra.mrb[0].mxu0 %v306
        %v3640 = vpop.f32.mrb[0].mxu0
        %v3641 = vadd.f32 0.0, %v3640
        %v3642 = vpop.f32.mrb[0].mxu0
        %v3643 = vadd.f32 0.0, %v3642
        %3644 = vdwg.mxu0
        %3645 = vmatprep.subr.mxu0 %v271
        %3646 = vmatpush1.msra.mxu0 %v270
        %3647 = vmatprep.subr.mxu0 0.0
        %3648 = vmatpush1.msra.mxu0 0.0
        %3649 = vmatprep.subr.mxu0 0.0
        %3650 = vmatpush1.msra.mxu0 0.0
        %3651 = vmatprep.subr.mxu0 0.0
        %3652 = vmatpush1.msra.mxu0 0.0
        %3653 = vmatprep.subr.mxu0 0.0
        %3654 = vmatpush1.msra.mxu0 0.0
        %3655 = vmatprep.subr.mxu0 0.0
        %3656 = vmatpush1.msra.mxu0 0.0
        %3657 = vmatprep.subr.mxu0 0.0
        %3658 = vmatpush1.msra.mxu0 0.0
        %3659 = vmatprep.subr.mxu0 0.0
        %3660 = vmatpush1.msra.mxu0 0.0
        %3661 = vmatprep.subr.mxu0 0.0
        %3662 = vmatpush1.msra.mxu0 0.0
        %3663 = vmatprep.subr.mxu0 0.0
        %3664 = vmatpush1.msra.mxu0 0.0
        %3665 = vmatprep.subr.mxu0 0.0
        %3666 = vmatpush1.msra.mxu0 0.0
        %3667 = vmatprep.subr.mxu0 0.0
        %3668 = vmatpush1.msra.mxu0 0.0
        %3669 = vmatprep.subr.mxu0 0.0
        %3670 = vmatpush1.msra.mxu0 0.0
        %3671 = vmatprep.subr.mxu0 0.0
        %3672 = vmatpush1.msra.mxu0 0.0
        %3673 = vmatprep.subr.mxu0 0.0
        %3674 = vmatpush1.msra.mxu0 0.0
        %3675 = vmatprep.subr.mxu0 0.0
        %3676 = vmatpush1.msra.mxu0 0.0
        %3677 = vmatprep.subr.mxu0 0.0
        %3678 = vmatpush1.msra.mxu0 0.0
        %3679 = vmatprep.subr.mxu0 0.0
        %3680 = vmatpush1.msra.mxu0 0.0
        %3681 = vmatprep.subr.mxu0 0.0
        %3682 = vmatpush1.msra.mxu0 0.0
        %3683 = vmatprep.subr.mxu0 0.0
        %3684 = vmatpush1.msra.mxu0 0.0
        %3685 = vmatprep.subr.mxu0 0.0
        %3686 = vmatpush1.msra.mxu0 0.0
        %3687 = vmatprep.subr.mxu0 0.0
        %3688 = vmatpush1.msra.mxu0 0.0
        %3689 = vmatprep.subr.mxu0 0.0
        %3690 = vmatpush1.msra.mxu0 0.0
        %3691 = vmatprep.subr.mxu0 0.0
        %3692 = vmatpush1.msra.mxu0 0.0
        %3693 = vmatprep.subr.mxu0 0.0
        %3694 = vmatpush1.msra.mxu0 0.0
        %3695 = vmatprep.subr.mxu0 0.0
        %3696 = vmatpush1.msra.mxu0 0.0
        %3697 = vmatprep.subr.mxu0 0.0
        %3698 = vmatpush1.msra.mxu0 0.0
        %3699 = vmatprep.subr.mxu0 0.0
        %3700 = vmatpush1.msra.mxu0 0.0
        %3701 = vmatprep.subr.mxu0 0.0
        %3702 = vmatpush1.msra.mxu0 0.0
        %3703 = vmatprep.subr.mxu0 0.0
        %3704 = vmatpush1.msra.mxu0 0.0
        %3705 = vmatprep.subr.mxu0 0.0
        %3706 = vmatpush1.msra.mxu0 0.0
        %3707 = vmatprep.subr.mxu0 0.0
        %3708 = vmatpush1.msra.mxu0 0.0
        %3709 = vmatprep.mubr.f32.mxu0 0.0
        %3710 = vmatmul.mubr.f32.gmra.mrb[0].mxu0 %v306
        %v3711 = vpop.f32.mrb[0].mxu0
        %v3712 = vadd.f32 0.0, %v3711
        %v3713 = vpop.f32.mrb[0].mxu0
        %v3714 = vadd.f32 0.0, %v3713
        %3715 = vdwg.mxu0
        %3716 = vmatprep.subr.mxu0 %v273
        %3717 = vmatpush1.msra.mxu0 %v272
        %3718 = vmatprep.subr.mxu0 0.0
        %3719 = vmatpush1.msra.mxu0 0.0
        %3720 = vmatprep.subr.mxu0 0.0
        %3721 = vmatpush1.msra.mxu0 0.0
        %3722 = vmatprep.subr.mxu0 0.0
        %3723 = vmatpush1.msra.mxu0 0.0
        %3724 = vmatprep.subr.mxu0 0.0
        %3725 = vmatpush1.msra.mxu0 0.0
        %3726 = vmatprep.subr.mxu0 0.0
        %3727 = vmatpush1.msra.mxu0 0.0
        %3728 = vmatprep.subr.mxu0 0.0
        %3729 = vmatpush1.msra.mxu0 0.0
        %3730 = vmatprep.subr.mxu0 0.0
        %3731 = vmatpush1.msra.mxu0 0.0
        %3732 = vmatprep.subr.mxu0 0.0
        %3733 = vmatpush1.msra.mxu0 0.0
        %3734 = vmatprep.subr.mxu0 0.0
        %3735 = vmatpush1.msra.mxu0 0.0
        %3736 = vmatprep.subr.mxu0 0.0
        %3737 = vmatpush1.msra.mxu0 0.0
        %3738 = vmatprep.subr.mxu0 0.0
        %3739 = vmatpush1.msra.mxu0 0.0
        %3740 = vmatprep.subr.mxu0 0.0
        %3741 = vmatpush1.msra.mxu0 0.0
        %3742 = vmatprep.subr.mxu0 0.0
        %3743 = vmatpush1.msra.mxu0 0.0
        %3744 = vmatprep.subr.mxu0 0.0
        %3745 = vmatpush1.msra.mxu0 0.0
        %3746 = vmatprep.subr.mxu0 0.0
        %3747 = vmatpush1.msra.mxu0 0.0
        %3748 = vmatprep.subr.mxu0 0.0
        %3749 = vmatpush1.msra.mxu0 0.0
        %3750 = vmatprep.subr.mxu0 0.0
        %3751 = vmatpush1.msra.mxu0 0.0
        %3752 = vmatprep.subr.mxu0 0.0
        %3753 = vmatpush1.msra.mxu0 0.0
        %3754 = vmatprep.subr.mxu0 0.0
        %3755 = vmatpush1.msra.mxu0 0.0
        %3756 = vmatprep.subr.mxu0 0.0
        %3757 = vmatpush1.msra.mxu0 0.0
        %3758 = vmatprep.subr.mxu0 0.0
        %3759 = vmatpush1.msra.mxu0 0.0
        %3760 = vmatprep.subr.mxu0 0.0
        %3761 = vmatpush1.msra.mxu0 0.0
        %3762 = vmatprep.subr.mxu0 0.0
        %3763 = vmatpush1.msra.mxu0 0.0
        %3764 = vmatprep.subr.mxu0 0.0
        %3765 = vmatpush1.msra.mxu0 0.0
        %3766 = vmatprep.subr.mxu0 0.0
        %3767 = vmatpush1.msra.mxu0 0.0
        %3768 = vmatprep.subr.mxu0 0.0
        %3769 = vmatpush1.msra.mxu0 0.0
        %3770 = vmatprep.subr.mxu0 0.0
        %3771 = vmatpush1.msra.mxu0 0.0
        %3772 = vmatprep.subr.mxu0 0.0
        %3773 = vmatpush1.msra.mxu0 0.0
        %3774 = vmatprep.subr.mxu0 0.0
        %3775 = vmatpush1.msra.mxu0 0.0
        %3776 = vmatprep.subr.mxu0 0.0
        %3777 = vmatpush1.msra.mxu0 0.0
        %3778 = vmatprep.subr.mxu0 0.0
        %3779 = vmatpush1.msra.mxu0 0.0
        %3780 = vmatprep.mubr.f32.mxu0 0.0
        %3781 = vmatmul.mubr.f32.gmra.mrb[0].mxu0 %v306
        %v3782 = vpop.f32.mrb[0].mxu0
        %v3783 = vadd.f32 0.0, %v3782
        %v3784 = vpop.f32.mrb[0].mxu0
        %v3785 = vadd.f32 0.0, %v3784
        %3786 = vdwg.mxu0
        %3787 = vmatprep.subr.mxu0 %v275
        %3788 = vmatpush1.msra.mxu0 %v274
        %3789 = vmatprep.subr.mxu0 0.0
        %3790 = vmatpush1.msra.mxu0 0.0
        %3791 = vmatprep.subr.mxu0 0.0
        %3792 = vmatpush1.msra.mxu0 0.0
        %3793 = vmatprep.subr.mxu0 0.0
        %3794 = vmatpush1.msra.mxu0 0.0
        %3795 = vmatprep.subr.mxu0 0.0
        %3796 = vmatpush1.msra.mxu0 0.0
        %3797 = vmatprep.subr.mxu0 0.0
        %3798 = vmatpush1.msra.mxu0 0.0
        %3799 = vmatprep.subr.mxu0 0.0
        %3800 = vmatpush1.msra.mxu0 0.0
        %3801 = vmatprep.subr.mxu0 0.0
        %3802 = vmatpush1.msra.mxu0 0.0
        %3803 = vmatprep.subr.mxu0 0.0
        %3804 = vmatpush1.msra.mxu0 0.0
        %3805 = vmatprep.subr.mxu0 0.0
        %3806 = vmatpush1.msra.mxu0 0.0
        %3807 = vmatprep.subr.mxu0 0.0
        %3808 = vmatpush1.msra.mxu0 0.0
        %3809 = vmatprep.subr.mxu0 0.0
        %3810 = vmatpush1.msra.mxu0 0.0
        %3811 = vmatprep.subr.mxu0 0.0
        %3812 = vmatpush1.msra.mxu0 0.0
        %3813 = vmatprep.subr.mxu0 0.0
        %3814 = vmatpush1.msra.mxu0 0.0
        %3815 = vmatprep.subr.mxu0 0.0
        %3816 = vmatpush1.msra.mxu0 0.0
        %3817 = vmatprep.subr.mxu0 0.0
        %3818 = vmatpush1.msra.mxu0 0.0
        %3819 = vmatprep.subr.mxu0 0.0
        %3820 = vmatpush1.msra.mxu0 0.0
        %3821 = vmatprep.subr.mxu0 0.0
        %3822 = vmatpush1.msra.mxu0 0.0
        %3823 = vmatprep.subr.mxu0 0.0
        %3824 = vmatpush1.msra.mxu0 0.0
        %3825 = vmatprep.subr.mxu0 0.0
        %3826 = vmatpush1.msra.mxu0 0.0
        %3827 = vmatprep.subr.mxu0 0.0
        %3828 = vmatpush1.msra.mxu0 0.0
        %3829 = vmatprep.subr.mxu0 0.0
        %3830 = vmatpush1.msra.mxu0 0.0
        %3831 = vmatprep.subr.mxu0 0.0
        %3832 = vmatpush1.msra.mxu0 0.0
        %3833 = vmatprep.subr.mxu0 0.0
        %3834 = vmatpush1.msra.mxu0 0.0
        %3835 = vmatprep.subr.mxu0 0.0
        %3836 = vmatpush1.msra.mxu0 0.0
        %3837 = vmatprep.subr.mxu0 0.0
        %3838 = vmatpush1.msra.mxu0 0.0
        %3839 = vmatprep.subr.mxu0 0.0
        %3840 = vmatpush1.msra.mxu0 0.0
        %3841 = vmatprep.subr.mxu0 0.0
        %3842 = vmatpush1.msra.mxu0 0.0
        %3843 = vmatprep.subr.mxu0 0.0
        %3844 = vmatpush1.msra.mxu0 0.0
        %3845 = vmatprep.subr.mxu0 0.0
        %3846 = vmatpush1.msra.mxu0 0.0
        %3847 = vmatprep.subr.mxu0 0.0
        %3848 = vmatpush1.msra.mxu0 0.0
        %3849 = vmatprep.subr.mxu0 0.0
        %3850 = vmatpush1.msra.mxu0 0.0
        %3851 = vmatprep.mubr.f32.mxu0 0.0
        %3852 = vmatmul.mubr.f32.gmra.mrb[0].mxu0 %v306
        %v3853 = vpop.f32.mrb[0].mxu0
        %v3854 = vadd.f32 0.0, %v3853
        %v3855 = vpop.f32.mrb[0].mxu0
        %v3856 = vadd.f32 0.0, %v3855
        %3857 = vdwg.mxu0
        %3858 = vmatprep.subr.mxu0 %v277
        %3859 = vmatpush1.msra.mxu0 %v276
        %3860 = vmatprep.subr.mxu0 0.0
        %3861 = vmatpush1.msra.mxu0 0.0
        %3862 = vmatprep.subr.mxu0 0.0
        %3863 = vmatpush1.msra.mxu0 0.0
        %3864 = vmatprep.subr.mxu0 0.0
        %3865 = vmatpush1.msra.mxu0 0.0
        %3866 = vmatprep.subr.mxu0 0.0
        %3867 = vmatpush1.msra.mxu0 0.0
        %3868 = vmatprep.subr.mxu0 0.0
        %3869 = vmatpush1.msra.mxu0 0.0
        %3870 = vmatprep.subr.mxu0 0.0
        %3871 = vmatpush1.msra.mxu0 0.0
        %3872 = vmatprep.subr.mxu0 0.0
        %3873 = vmatpush1.msra.mxu0 0.0
        %3874 = vmatprep.subr.mxu0 0.0
        %3875 = vmatpush1.msra.mxu0 0.0
        %3876 = vmatprep.subr.mxu0 0.0
        %3877 = vmatpush1.msra.mxu0 0.0
        %3878 = vmatprep.subr.mxu0 0.0
        %3879 = vmatpush1.msra.mxu0 0.0
        %3880 = vmatprep.subr.mxu0 0.0
        %3881 = vmatpush1.msra.mxu0 0.0
        %3882 = vmatprep.subr.mxu0 0.0
        %3883 = vmatpush1.msra.mxu0 0.0
        %3884 = vmatprep.subr.mxu0 0.0
        %3885 = vmatpush1.msra.mxu0 0.0
        %3886 = vmatprep.subr.mxu0 0.0
        %3887 = vmatpush1.msra.mxu0 0.0
        %3888 = vmatprep.subr.mxu0 0.0
        %3889 = vmatpush1.msra.mxu0 0.0
        %3890 = vmatprep.subr.mxu0 0.0
        %3891 = vmatpush1.msra.mxu0 0.0
        %3892 = vmatprep.subr.mxu0 0.0
        %3893 = vmatpush1.msra.mxu0 0.0
        %3894 = vmatprep.subr.mxu0 0.0
        %3895 = vmatpush1.msra.mxu0 0.0
        %3896 = vmatprep.subr.mxu0 0.0
        %3897 = vmatpush1.msra.mxu0 0.0
        %3898 = vmatprep.subr.mxu0 0.0
        %3899 = vmatpush1.msra.mxu0 0.0
        %3900 = vmatprep.subr.mxu0 0.0
        %3901 = vmatpush1.msra.mxu0 0.0
        %3902 = vmatprep.subr.mxu0 0.0
        %3903 = vmatpush1.msra.mxu0 0.0
        %3904 = vmatprep.subr.mxu0 0.0
        %3905 = vmatpush1.msra.mxu0 0.0
        %3906 = vmatprep.subr.mxu0 0.0
        %3907 = vmatpush1.msra.mxu0 0.0
        %3908 = vmatprep.subr.mxu0 0.0
        %3909 = vmatpush1.msra.mxu0 0.0
        %3910 = vmatprep.subr.mxu0 0.0
        %3911 = vmatpush1.msra.mxu0 0.0
        %3912 = vmatprep.subr.mxu0 0.0
        %3913 = vmatpush1.msra.mxu0 0.0
        %3914 = vmatprep.subr.mxu0 0.0
        %3915 = vmatpush1.msra.mxu0 0.0
        %3916 = vmatprep.subr.mxu0 0.0
        %3917 = vmatpush1.msra.mxu0 0.0
        %3918 = vmatprep.subr.mxu0 0.0
        %3919 = vmatpush1.msra.mxu0 0.0
        %3920 = vmatprep.subr.mxu0 0.0
        %3921 = vmatpush1.msra.mxu0 0.0
        %3922 = vmatprep.mubr.f32.mxu0 0.0
        %3923 = vmatmul.mubr.f32.gmra.mrb[0].mxu0 %v306
        %v3924 = vpop.f32.mrb[0].mxu0
        %v3925 = vadd.f32 0.0, %v3924
        %v3926 = vpop.f32.mrb[0].mxu0
        %v3927 = vadd.f32 0.0, %v3926
        %3928 = vdwg.mxu0
        %3929 = vmatprep.subr.mxu0 %v279
        %3930 = vmatpush1.msra.mxu0 %v278
        %3931 = vmatprep.subr.mxu0 0.0
        %3932 = vmatpush1.msra.mxu0 0.0
        %3933 = vmatprep.subr.mxu0 0.0
        %3934 = vmatpush1.msra.mxu0 0.0
        %3935 = vmatprep.subr.mxu0 0.0
        %3936 = vmatpush1.msra.mxu0 0.0
        %3937 = vmatprep.subr.mxu0 0.0
        %3938 = vmatpush1.msra.mxu0 0.0
        %3939 = vmatprep.subr.mxu0 0.0
        %3940 = vmatpush1.msra.mxu0 0.0
        %3941 = vmatprep.subr.mxu0 0.0
        %3942 = vmatpush1.msra.mxu0 0.0
        %3943 = vmatprep.subr.mxu0 0.0
        %3944 = vmatpush1.msra.mxu0 0.0
        %3945 = vmatprep.subr.mxu0 0.0
        %3946 = vmatpush1.msra.mxu0 0.0
        %3947 = vmatprep.subr.mxu0 0.0
        %3948 = vmatpush1.msra.mxu0 0.0
        %3949 = vmatprep.subr.mxu0 0.0
        %3950 = vmatpush1.msra.mxu0 0.0
        %3951 = vmatprep.subr.mxu0 0.0
        %3952 = vmatpush1.msra.mxu0 0.0
        %3953 = vmatprep.subr.mxu0 0.0
        %3954 = vmatpush1.msra.mxu0 0.0
        %3955 = vmatprep.subr.mxu0 0.0
        %3956 = vmatpush1.msra.mxu0 0.0
        %3957 = vmatprep.subr.mxu0 0.0
        %3958 = vmatpush1.msra.mxu0 0.0
        %3959 = vmatprep.subr.mxu0 0.0
        %3960 = vmatpush1.msra.mxu0 0.0
        %3961 = vmatprep.subr.mxu0 0.0
        %3962 = vmatpush1.msra.mxu0 0.0
        %3963 = vmatprep.subr.mxu0 0.0
        %3964 = vmatpush1.msra.mxu0 0.0
        %3965 = vmatprep.subr.mxu0 0.0
        %3966 = vmatpush1.msra.mxu0 0.0
        %3967 = vmatprep.subr.mxu0 0.0
        %3968 = vmatpush1.msra.mxu0 0.0
        %3969 = vmatprep.subr.mxu0 0.0
        %3970 = vmatpush1.msra.mxu0 0.0
        %3971 = vmatprep.subr.mxu0 0.0
        %3972 = vmatpush1.msra.mxu0 0.0
        %3973 = vmatprep.subr.mxu0 0.0
        %3974 = vmatpush1.msra.mxu0 0.0
        %3975 = vmatprep.subr.mxu0 0.0
        %3976 = vmatpush1.msra.mxu0 0.0
        %3977 = vmatprep.subr.mxu0 0.0
        %3978 = vmatpush1.msra.mxu0 0.0
        %3979 = vmatprep.subr.mxu0 0.0
        %3980 = vmatpush1.msra.mxu0 0.0
        %3981 = vmatprep.subr.mxu0 0.0
        %3982 = vmatpush1.msra.mxu0 0.0
        %3983 = vmatprep.subr.mxu0 0.0
        %3984 = vmatpush1.msra.mxu0 0.0
        %3985 = vmatprep.subr.mxu0 0.0
        %3986 = vmatpush1.msra.mxu0 0.0
        %3987 = vmatprep.subr.mxu0 0.0
        %3988 = vmatpush1.msra.mxu0 0.0
        %3989 = vmatprep.subr.mxu0 0.0
        %3990 = vmatpush1.msra.mxu0 0.0
        %3991 = vmatprep.subr.mxu0 0.0
        %3992 = vmatpush1.msra.mxu0 0.0
        %3993 = vmatprep.mubr.f32.mxu0 0.0
        %3994 = vmatmul.mubr.f32.gmra.mrb[0].mxu0 %v306
        %v3995 = vpop.f32.mrb[0].mxu0
        %v3996 = vadd.f32 0.0, %v3995
        %v3997 = vpop.f32.mrb[0].mxu0
        %v3998 = vadd.f32 0.0, %v3997
        %3999 = vdwg.mxu0
        %4000 = vmatprep.subr.mxu0 %v281
        %4001 = vmatpush1.msra.mxu0 %v280
        %4002 = vmatprep.subr.mxu0 0.0
        %4003 = vmatpush1.msra.mxu0 0.0
        %4004 = vmatprep.subr.mxu0 0.0
        %4005 = vmatpush1.msra.mxu0 0.0
        %4006 = vmatprep.subr.mxu0 0.0
        %4007 = vmatpush1.msra.mxu0 0.0
        %4008 = vmatprep.subr.mxu0 0.0
        %4009 = vmatpush1.msra.mxu0 0.0
        %4010 = vmatprep.subr.mxu0 0.0
        %4011 = vmatpush1.msra.mxu0 0.0
        %4012 = vmatprep.subr.mxu0 0.0
        %4013 = vmatpush1.msra.mxu0 0.0
        %4014 = vmatprep.subr.mxu0 0.0
        %4015 = vmatpush1.msra.mxu0 0.0
        %4016 = vmatprep.subr.mxu0 0.0
        %4017 = vmatpush1.msra.mxu0 0.0
        %4018 = vmatprep.subr.mxu0 0.0
        %4019 = vmatpush1.msra.mxu0 0.0
        %4020 = vmatprep.subr.mxu0 0.0
        %4021 = vmatpush1.msra.mxu0 0.0
        %4022 = vmatprep.subr.mxu0 0.0
        %4023 = vmatpush1.msra.mxu0 0.0
        %4024 = vmatprep.subr.mxu0 0.0
        %4025 = vmatpush1.msra.mxu0 0.0
        %4026 = vmatprep.subr.mxu0 0.0
        %4027 = vmatpush1.msra.mxu0 0.0
        %4028 = vmatprep.subr.mxu0 0.0
        %4029 = vmatpush1.msra.mxu0 0.0
        %4030 = vmatprep.subr.mxu0 0.0
        %4031 = vmatpush1.msra.mxu0 0.0
        %4032 = vmatprep.subr.mxu0 0.0
        %4033 = vmatpush1.msra.mxu0 0.0
        %4034 = vmatprep.subr.mxu0 0.0
        %4035 = vmatpush1.msra.mxu0 0.0
        %4036 = vmatprep.subr.mxu0 0.0
        %4037 = vmatpush1.msra.mxu0 0.0
        %4038 = vmatprep.subr.mxu0 0.0
        %4039 = vmatpush1.msra.mxu0 0.0
        %4040 = vmatprep.subr.mxu0 0.0
        %4041 = vmatpush1.msra.mxu0 0.0
        %4042 = vmatprep.subr.mxu0 0.0
        %4043 = vmatpush1.msra.mxu0 0.0
        %4044 = vmatprep.subr.mxu0 0.0
        %4045 = vmatpush1.msra.mxu0 0.0
        %4046 = vmatprep.subr.mxu0 0.0
        %4047 = vmatpush1.msra.mxu0 0.0
        %4048 = vmatprep.subr.mxu0 0.0
        %4049 = vmatpush1.msra.mxu0 0.0
        %4050 = vmatprep.subr.mxu0 0.0
        %4051 = vmatpush1.msra.mxu0 0.0
        %4052 = vmatprep.subr.mxu0 0.0
        %4053 = vmatpush1.msra.mxu0 0.0
        %4054 = vmatprep.subr.mxu0 0.0
        %4055 = vmatpush1.msra.mxu0 0.0
        %4056 = vmatprep.subr.mxu0 0.0
        %4057 = vmatpush1.msra.mxu0 0.0
        %4058 = vmatprep.subr.mxu0 0.0
        %4059 = vmatpush1.msra.mxu0 0.0
        %4060 = vmatprep.subr.mxu0 0.0
        %4061 = vmatpush1.msra.mxu0 0.0
        %4062 = vmatprep.subr.mxu0 0.0
        %4063 = vmatpush1.msra.mxu0 0.0
        %4064 = vmatprep.mubr.f32.mxu0 0.0
        %4065 = vmatmul.mubr.f32.gmra.mrb[0].mxu0 %v306
        %v4066 = vpop.f32.mrb[0].mxu0
        %v4067 = vadd.f32 0.0, %v4066
        %v4068 = vpop.f32.mrb[0].mxu0
        %v4069 = vadd.f32 0.0, %v4068
        %4070 = vdwg.mxu0
        %4071 = vmatprep.subr.mxu0 %v283
        %4072 = vmatpush1.msra.mxu0 %v282
        %4073 = vmatprep.subr.mxu0 0.0
        %4074 = vmatpush1.msra.mxu0 0.0
        %4075 = vmatprep.subr.mxu0 0.0
        %4076 = vmatpush1.msra.mxu0 0.0
        %4077 = vmatprep.subr.mxu0 0.0
        %4078 = vmatpush1.msra.mxu0 0.0
        %4079 = vmatprep.subr.mxu0 0.0
        %4080 = vmatpush1.msra.mxu0 0.0
        %4081 = vmatprep.subr.mxu0 0.0
        %4082 = vmatpush1.msra.mxu0 0.0
        %4083 = vmatprep.subr.mxu0 0.0
        %4084 = vmatpush1.msra.mxu0 0.0
        %4085 = vmatprep.subr.mxu0 0.0
        %4086 = vmatpush1.msra.mxu0 0.0
        %4087 = vmatprep.subr.mxu0 0.0
        %4088 = vmatpush1.msra.mxu0 0.0
        %4089 = vmatprep.subr.mxu0 0.0
        %4090 = vmatpush1.msra.mxu0 0.0
        %4091 = vmatprep.subr.mxu0 0.0
        %4092 = vmatpush1.msra.mxu0 0.0
        %4093 = vmatprep.subr.mxu0 0.0
        %4094 = vmatpush1.msra.mxu0 0.0
        %4095 = vmatprep.subr.mxu0 0.0
        %4096 = vmatpush1.msra.mxu0 0.0
        %4097 = vmatprep.subr.mxu0 0.0
        %4098 = vmatpush1.msra.mxu0 0.0
        %4099 = vmatprep.subr.mxu0 0.0
        %4100 = vmatpush1.msra.mxu0 0.0
        %4101 = vmatprep.subr.mxu0 0.0
        %4102 = vmatpush1.msra.mxu0 0.0
        %4103 = vmatprep.subr.mxu0 0.0
        %4104 = vmatpush1.msra.mxu0 0.0
        %4105 = vmatprep.subr.mxu0 0.0
        %4106 = vmatpush1.msra.mxu0 0.0
        %4107 = vmatprep.subr.mxu0 0.0
        %4108 = vmatpush1.msra.mxu0 0.0
        %4109 = vmatprep.subr.mxu0 0.0
        %4110 = vmatpush1.msra.mxu0 0.0
        %4111 = vmatprep.subr.mxu0 0.0
        %4112 = vmatpush1.msra.mxu0 0.0
        %4113 = vmatprep.subr.mxu0 0.0
        %4114 = vmatpush1.msra.mxu0 0.0
        %4115 = vmatprep.subr.mxu0 0.0
        %4116 = vmatpush1.msra.mxu0 0.0
        %4117 = vmatprep.subr.mxu0 0.0
        %4118 = vmatpush1.msra.mxu0 0.0
        %4119 = vmatprep.subr.mxu0 0.0
        %4120 = vmatpush1.msra.mxu0 0.0
        %4121 = vmatprep.subr.mxu0 0.0
        %4122 = vmatpush1.msra.mxu0 0.0
        %4123 = vmatprep.subr.mxu0 0.0
        %4124 = vmatpush1.msra.mxu0 0.0
        %4125 = vmatprep.subr.mxu0 0.0
        %4126 = vmatpush1.msra.mxu0 0.0
        %4127 = vmatprep.subr.mxu0 0.0
        %4128 = vmatpush1.msra.mxu0 0.0
        %4129 = vmatprep.subr.mxu0 0.0
        %4130 = vmatpush1.msra.mxu0 0.0
        %4131 = vmatprep.subr.mxu0 0.0
        %4132 = vmatpush1.msra.mxu0 0.0
        %4133 = vmatprep.subr.mxu0 0.0
        %4134 = vmatpush1.msra.mxu0 0.0
        %4135 = vmatprep.mubr.f32.mxu0 0.0
        %4136 = vmatmul.mubr.f32.gmra.mrb[0].mxu0 %v306
        %v4137 = vpop.f32.mrb[0].mxu0
        %v4138 = vadd.f32 0.0, %v4137
        %v4139 = vpop.f32.mrb[0].mxu0
        %v4140 = vadd.f32 0.0, %v4139
        %4141 = vdwg.mxu0
        %4142 = vmatprep.subr.mxu0 %v285
        %4143 = vmatpush1.msra.mxu0 %v284
        %4144 = vmatprep.subr.mxu0 0.0
        %4145 = vmatpush1.msra.mxu0 0.0
        %4146 = vmatprep.subr.mxu0 0.0
        %4147 = vmatpush1.msra.mxu0 0.0
        %4148 = vmatprep.subr.mxu0 0.0
        %4149 = vmatpush1.msra.mxu0 0.0
        %4150 = vmatprep.subr.mxu0 0.0
        %4151 = vmatpush1.msra.mxu0 0.0
        %4152 = vmatprep.subr.mxu0 0.0
        %4153 = vmatpush1.msra.mxu0 0.0
        %4154 = vmatprep.subr.mxu0 0.0
        %4155 = vmatpush1.msra.mxu0 0.0
        %4156 = vmatprep.subr.mxu0 0.0
        %4157 = vmatpush1.msra.mxu0 0.0
        %4158 = vmatprep.subr.mxu0 0.0
        %4159 = vmatpush1.msra.mxu0 0.0
        %4160 = vmatprep.subr.mxu0 0.0
        %4161 = vmatpush1.msra.mxu0 0.0
        %4162 = vmatprep.subr.mxu0 0.0
        %4163 = vmatpush1.msra.mxu0 0.0
        %4164 = vmatprep.subr.mxu0 0.0
        %4165 = vmatpush1.msra.mxu0 0.0
        %4166 = vmatprep.subr.mxu0 0.0
        %4167 = vmatpush1.msra.mxu0 0.0
        %4168 = vmatprep.subr.mxu0 0.0
        %4169 = vmatpush1.msra.mxu0 0.0
        %4170 = vmatprep.subr.mxu0 0.0
        %4171 = vmatpush1.msra.mxu0 0.0
        %4172 = vmatprep.subr.mxu0 0.0
        %4173 = vmatpush1.msra.mxu0 0.0
        %4174 = vmatprep.subr.mxu0 0.0
        %4175 = vmatpush1.msra.mxu0 0.0
        %4176 = vmatprep.subr.mxu0 0.0
        %4177 = vmatpush1.msra.mxu0 0.0
        %4178 = vmatprep.subr.mxu0 0.0
        %4179 = vmatpush1.msra.mxu0 0.0
        %4180 = vmatprep.subr.mxu0 0.0
        %4181 = vmatpush1.msra.mxu0 0.0
        %4182 = vmatprep.subr.mxu0 0.0
        %4183 = vmatpush1.msra.mxu0 0.0
        %4184 = vmatprep.subr.mxu0 0.0
        %4185 = vmatpush1.msra.mxu0 0.0
        %4186 = vmatprep.subr.mxu0 0.0
        %4187 = vmatpush1.msra.mxu0 0.0
        %4188 = vmatprep.subr.mxu0 0.0
        %4189 = vmatpush1.msra.mxu0 0.0
        %4190 = vmatprep.subr.mxu0 0.0
        %4191 = vmatpush1.msra.mxu0 0.0
        %4192 = vmatprep.subr.mxu0 0.0
        %4193 = vmatpush1.msra.mxu0 0.0
        %4194 = vmatprep.subr.mxu0 0.0
        %4195 = vmatpush1.msra.mxu0 0.0
        %4196 = vmatprep.subr.mxu0 0.0
        %4197 = vmatpush1.msra.mxu0 0.0
        %4198 = vmatprep.subr.mxu0 0.0
        %4199 = vmatpush1.msra.mxu0 0.0
        %4200 = vmatprep.subr.mxu0 0.0
        %4201 = vmatpush1.msra.mxu0 0.0
        %4202 = vmatprep.subr.mxu0 0.0
        %4203 = vmatpush1.msra.mxu0 0.0
        %4204 = vmatprep.subr.mxu0 0.0
        %4205 = vmatpush1.msra.mxu0 0.0
        %4206 = vmatprep.mubr.f32.mxu0 0.0
        %4207 = vmatmul.mubr.f32.gmra.mrb[0].mxu0 %v306
        %v4208 = vpop.f32.mrb[0].mxu0
        %v4209 = vadd.f32 0.0, %v4208
        %v4210 = vpop.f32.mrb[0].mxu0
        %v4211 = vadd.f32 0.0, %v4210
        %4212 = vdwg.mxu0
        %4213 = vmatprep.subr.mxu0 %v287
        %4214 = vmatpush1.msra.mxu0 %v286
        %4215 = vmatprep.subr.mxu0 0.0
        %4216 = vmatpush1.msra.mxu0 0.0
        %4217 = vmatprep.subr.mxu0 0.0
        %4218 = vmatpush1.msra.mxu0 0.0
        %4219 = vmatprep.subr.mxu0 0.0
        %4220 = vmatpush1.msra.mxu0 0.0
        %4221 = vmatprep.subr.mxu0 0.0
        %4222 = vmatpush1.msra.mxu0 0.0
        %4223 = vmatprep.subr.mxu0 0.0
        %4224 = vmatpush1.msra.mxu0 0.0
        %4225 = vmatprep.subr.mxu0 0.0
        %4226 = vmatpush1.msra.mxu0 0.0
        %4227 = vmatprep.subr.mxu0 0.0
        %4228 = vmatpush1.msra.mxu0 0.0
        %4229 = vmatprep.subr.mxu0 0.0
        %4230 = vmatpush1.msra.mxu0 0.0
        %4231 = vmatprep.subr.mxu0 0.0
        %4232 = vmatpush1.msra.mxu0 0.0
        %4233 = vmatprep.subr.mxu0 0.0
        %4234 = vmatpush1.msra.mxu0 0.0
        %4235 = vmatprep.subr.mxu0 0.0
        %4236 = vmatpush1.msra.mxu0 0.0
        %4237 = vmatprep.subr.mxu0 0.0
        %4238 = vmatpush1.msra.mxu0 0.0
        %4239 = vmatprep.subr.mxu0 0.0
        %4240 = vmatpush1.msra.mxu0 0.0
        %4241 = vmatprep.subr.mxu0 0.0
        %4242 = vmatpush1.msra.mxu0 0.0
        %4243 = vmatprep.subr.mxu0 0.0
        %4244 = vmatpush1.msra.mxu0 0.0
        %4245 = vmatprep.subr.mxu0 0.0
        %4246 = vmatpush1.msra.mxu0 0.0
        %4247 = vmatprep.subr.mxu0 0.0
        %4248 = vmatpush1.msra.mxu0 0.0
        %4249 = vmatprep.subr.mxu0 0.0
        %4250 = vmatpush1.msra.mxu0 0.0
        %4251 = vmatprep.subr.mxu0 0.0
        %4252 = vmatpush1.msra.mxu0 0.0
        %4253 = vmatprep.subr.mxu0 0.0
        %4254 = vmatpush1.msra.mxu0 0.0
        %4255 = vmatprep.subr.mxu0 0.0
        %4256 = vmatpush1.msra.mxu0 0.0
        %4257 = vmatprep.subr.mxu0 0.0
        %4258 = vmatpush1.msra.mxu0 0.0
        %4259 = vmatprep.subr.mxu0 0.0
        %4260 = vmatpush1.msra.mxu0 0.0
        %4261 = vmatprep.subr.mxu0 0.0
        %4262 = vmatpush1.msra.mxu0 0.0
        %4263 = vmatprep.subr.mxu0 0.0
        %4264 = vmatpush1.msra.mxu0 0.0
        %4265 = vmatprep.subr.mxu0 0.0
        %4266 = vmatpush1.msra.mxu0 0.0
        %4267 = vmatprep.subr.mxu0 0.0
        %4268 = vmatpush1.msra.mxu0 0.0
        %4269 = vmatprep.subr.mxu0 0.0
        %4270 = vmatpush1.msra.mxu0 0.0
        %4271 = vmatprep.subr.mxu0 0.0
        %4272 = vmatpush1.msra.mxu0 0.0
        %4273 = vmatprep.subr.mxu0 0.0
        %4274 = vmatpush1.msra.mxu0 0.0
        %4275 = vmatprep.subr.mxu0 0.0
        %4276 = vmatpush1.msra.mxu0 0.0
        %4277 = vmatprep.mubr.f32.mxu0 0.0
        %4278 = vmatmul.mubr.f32.gmra.mrb[0].mxu0 %v306
        %v4279 = vpop.f32.mrb[0].mxu0
        %v4280 = vadd.f32 0.0, %v4279
        %v4281 = vpop.f32.mrb[0].mxu0
        %v4282 = vadd.f32 0.0, %v4281
        %4283 = vdwg.mxu0
        %4284 = vmatprep.subr.mxu0 %v289
        %4285 = vmatpush1.msra.mxu0 %v288
        %4286 = vmatprep.subr.mxu0 0.0
        %4287 = vmatpush1.msra.mxu0 0.0
        %4288 = vmatprep.subr.mxu0 0.0
        %4289 = vmatpush1.msra.mxu0 0.0
        %4290 = vmatprep.subr.mxu0 0.0
        %4291 = vmatpush1.msra.mxu0 0.0
        %4292 = vmatprep.subr.mxu0 0.0
        %4293 = vmatpush1.msra.mxu0 0.0
        %4294 = vmatprep.subr.mxu0 0.0
        %4295 = vmatpush1.msra.mxu0 0.0
        %4296 = vmatprep.subr.mxu0 0.0
        %4297 = vmatpush1.msra.mxu0 0.0
        %4298 = vmatprep.subr.mxu0 0.0
        %4299 = vmatpush1.msra.mxu0 0.0
        %4300 = vmatprep.subr.mxu0 0.0
        %4301 = vmatpush1.msra.mxu0 0.0
        %4302 = vmatprep.subr.mxu0 0.0
        %4303 = vmatpush1.msra.mxu0 0.0
        %4304 = vmatprep.subr.mxu0 0.0
        %4305 = vmatpush1.msra.mxu0 0.0
        %4306 = vmatprep.subr.mxu0 0.0
        %4307 = vmatpush1.msra.mxu0 0.0
        %4308 = vmatprep.subr.mxu0 0.0
        %4309 = vmatpush1.msra.mxu0 0.0
        %4310 = vmatprep.subr.mxu0 0.0
        %4311 = vmatpush1.msra.mxu0 0.0
        %4312 = vmatprep.subr.mxu0 0.0
        %4313 = vmatpush1.msra.mxu0 0.0
        %4314 = vmatprep.subr.mxu0 0.0
        %4315 = vmatpush1.msra.mxu0 0.0
        %4316 = vmatprep.subr.mxu0 0.0
        %4317 = vmatpush1.msra.mxu0 0.0
        %4318 = vmatprep.subr.mxu0 0.0
        %4319 = vmatpush1.msra.mxu0 0.0
        %4320 = vmatprep.subr.mxu0 0.0
        %4321 = vmatpush1.msra.mxu0 0.0
        %4322 = vmatprep.subr.mxu0 0.0
        %4323 = vmatpush1.msra.mxu0 0.0
        %4324 = vmatprep.subr.mxu0 0.0
        %4325 = vmatpush1.msra.mxu0 0.0
        %4326 = vmatprep.subr.mxu0 0.0
        %4327 = vmatpush1.msra.mxu0 0.0
        %4328 = vmatprep.subr.mxu0 0.0
        %4329 = vmatpush1.msra.mxu0 0.0
        %4330 = vmatprep.subr.mxu0 0.0
        %4331 = vmatpush1.msra.mxu0 0.0
        %4332 = vmatprep.subr.mxu0 0.0
        %4333 = vmatpush1.msra.mxu0 0.0
        %4334 = vmatprep.subr.mxu0 0.0
        %4335 = vmatpush1.msra.mxu0 0.0
        %4336 = vmatprep.subr.mxu0 0.0
        %4337 = vmatpush1.msra.mxu0 0.0
        %4338 = vmatprep.subr.mxu0 0.0
        %4339 = vmatpush1.msra.mxu0 0.0
        %4340 = vmatprep.subr.mxu0 0.0
        %4341 = vmatpush1.msra.mxu0 0.0
        %4342 = vmatprep.subr.mxu0 0.0
        %4343 = vmatpush1.msra.mxu0 0.0
        %4344 = vmatprep.subr.mxu0 0.0
        %4345 = vmatpush1.msra.mxu0 0.0
        %4346 = vmatprep.subr.mxu0 0.0
        %4347 = vmatpush1.msra.mxu0 0.0
        %4348 = vmatprep.mubr.f32.mxu0 0.0
        %4349 = vmatmul.mubr.f32.gmra.mrb[0].mxu0 %v306
        %v4350 = vpop.f32.mrb[0].mxu0
        %v4351 = vadd.f32 0.0, %v4350
        %v4352 = vpop.f32.mrb[0].mxu0
        %v4353 = vadd.f32 0.0, %v4352
        %4354 = vdwg.mxu0
        %4355 = vmatprep.subr.mxu0 %v291
        %4356 = vmatpush1.msra.mxu0 %v290
        %4357 = vmatprep.subr.mxu0 0.0
        %4358 = vmatpush1.msra.mxu0 0.0
        %4359 = vmatprep.subr.mxu0 0.0
        %4360 = vmatpush1.msra.mxu0 0.0
        %4361 = vmatprep.subr.mxu0 0.0
        %4362 = vmatpush1.msra.mxu0 0.0
        %4363 = vmatprep.subr.mxu0 0.0
        %4364 = vmatpush1.msra.mxu0 0.0
        %4365 = vmatprep.subr.mxu0 0.0
        %4366 = vmatpush1.msra.mxu0 0.0
        %4367 = vmatprep.subr.mxu0 0.0
        %4368 = vmatpush1.msra.mxu0 0.0
        %4369 = vmatprep.subr.mxu0 0.0
        %4370 = vmatpush1.msra.mxu0 0.0
        %4371 = vmatprep.subr.mxu0 0.0
        %4372 = vmatpush1.msra.mxu0 0.0
        %4373 = vmatprep.subr.mxu0 0.0
        %4374 = vmatpush1.msra.mxu0 0.0
        %4375 = vmatprep.subr.mxu0 0.0
        %4376 = vmatpush1.msra.mxu0 0.0
        %4377 = vmatprep.subr.mxu0 0.0
        %4378 = vmatpush1.msra.mxu0 0.0
        %4379 = vmatprep.subr.mxu0 0.0
        %4380 = vmatpush1.msra.mxu0 0.0
        %4381 = vmatprep.subr.mxu0 0.0
        %4382 = vmatpush1.msra.mxu0 0.0
        %4383 = vmatprep.subr.mxu0 0.0
        %4384 = vmatpush1.msra.mxu0 0.0
        %4385 = vmatprep.subr.mxu0 0.0
        %4386 = vmatpush1.msra.mxu0 0.0
        %4387 = vmatprep.subr.mxu0 0.0
        %4388 = vmatpush1.msra.mxu0 0.0
        %4389 = vmatprep.subr.mxu0 0.0
        %4390 = vmatpush1.msra.mxu0 0.0
        %4391 = vmatprep.subr.mxu0 0.0
        %4392 = vmatpush1.msra.mxu0 0.0
        %4393 = vmatprep.subr.mxu0 0.0
        %4394 = vmatpush1.msra.mxu0 0.0
        %4395 = vmatprep.subr.mxu0 0.0
        %4396 = vmatpush1.msra.mxu0 0.0
        %4397 = vmatprep.subr.mxu0 0.0
        %4398 = vmatpush1.msra.mxu0 0.0
        %4399 = vmatprep.subr.mxu0 0.0
        %4400 = vmatpush1.msra.mxu0 0.0
        %4401 = vmatprep.subr.mxu0 0.0
        %4402 = vmatpush1.msra.mxu0 0.0
        %4403 = vmatprep.subr.mxu0 0.0
        %4404 = vmatpush1.msra.mxu0 0.0
        %4405 = vmatprep.subr.mxu0 0.0
        %4406 = vmatpush1.msra.mxu0 0.0
        %4407 = vmatprep.subr.mxu0 0.0
        %4408 = vmatpush1.msra.mxu0 0.0
        %4409 = vmatprep.subr.mxu0 0.0
        %4410 = vmatpush1.msra.mxu0 0.0
        %4411 = vmatprep.subr.mxu0 0.0
        %4412 = vmatpush1.msra.mxu0 0.0
        %4413 = vmatprep.subr.mxu0 0.0
        %4414 = vmatpush1.msra.mxu0 0.0
        %4415 = vmatprep.subr.mxu0 0.0
        %4416 = vmatpush1.msra.mxu0 0.0
        %4417 = vmatprep.subr.mxu0 0.0
        %4418 = vmatpush1.msra.mxu0 0.0
        %4419 = vmatprep.mubr.f32.mxu0 0.0
        %4420 = vmatmul.mubr.f32.gmra.mrb[0].mxu0 %v306
        %v4421 = vpop.f32.mrb[0].mxu0
        %v4422 = vadd.f32 0.0, %v4421
        %v4423 = vpop.f32.mrb[0].mxu0
        %v4424 = vadd.f32 0.0, %v4423
        %4425 = vdwg.mxu0
        %4426 = vmatprep.subr.mxu0 %v293
        %4427 = vmatpush1.msra.mxu0 %v292
        %4428 = vmatprep.subr.mxu0 0.0
        %4429 = vmatpush1.msra.mxu0 0.0
        %4430 = vmatprep.subr.mxu0 0.0
        %4431 = vmatpush1.msra.mxu0 0.0
        %4432 = vmatprep.subr.mxu0 0.0
        %4433 = vmatpush1.msra.mxu0 0.0
        %4434 = vmatprep.subr.mxu0 0.0
        %4435 = vmatpush1.msra.mxu0 0.0
        %4436 = vmatprep.subr.mxu0 0.0
        %4437 = vmatpush1.msra.mxu0 0.0
        %4438 = vmatprep.subr.mxu0 0.0
        %4439 = vmatpush1.msra.mxu0 0.0
        %4440 = vmatprep.subr.mxu0 0.0
        %4441 = vmatpush1.msra.mxu0 0.0
        %4442 = vmatprep.subr.mxu0 0.0
        %4443 = vmatpush1.msra.mxu0 0.0
        %4444 = vmatprep.subr.mxu0 0.0
        %4445 = vmatpush1.msra.mxu0 0.0
        %4446 = vmatprep.subr.mxu0 0.0
        %4447 = vmatpush1.msra.mxu0 0.0
        %4448 = vmatprep.subr.mxu0 0.0
        %4449 = vmatpush1.msra.mxu0 0.0
        %4450 = vmatprep.subr.mxu0 0.0
        %4451 = vmatpush1.msra.mxu0 0.0
        %4452 = vmatprep.subr.mxu0 0.0
        %4453 = vmatpush1.msra.mxu0 0.0
        %4454 = vmatprep.subr.mxu0 0.0
        %4455 = vmatpush1.msra.mxu0 0.0
        %4456 = vmatprep.subr.mxu0 0.0
        %4457 = vmatpush1.msra.mxu0 0.0
        %4458 = vmatprep.subr.mxu0 0.0
        %4459 = vmatpush1.msra.mxu0 0.0
        %4460 = vmatprep.subr.mxu0 0.0
        %4461 = vmatpush1.msra.mxu0 0.0
        %4462 = vmatprep.subr.mxu0 0.0
        %4463 = vmatpush1.msra.mxu0 0.0
        %4464 = vmatprep.subr.mxu0 0.0
        %4465 = vmatpush1.msra.mxu0 0.0
        %4466 = vmatprep.subr.mxu0 0.0
        %4467 = vmatpush1.msra.mxu0 0.0
        %4468 = vmatprep.subr.mxu0 0.0
        %4469 = vmatpush1.msra.mxu0 0.0
        %4470 = vmatprep.subr.mxu0 0.0
        %4471 = vmatpush1.msra.mxu0 0.0
        %4472 = vmatprep.subr.mxu0 0.0
        %4473 = vmatpush1.msra.mxu0 0.0
        %4474 = vmatprep.subr.mxu0 0.0
        %4475 = vmatpush1.msra.mxu0 0.0
        %4476 = vmatprep.subr.mxu0 0.0
        %4477 = vmatpush1.msra.mxu0 0.0
        %4478 = vmatprep.subr.mxu0 0.0
        %4479 = vmatpush1.msra.mxu0 0.0
        %4480 = vmatprep.subr.mxu0 0.0
        %4481 = vmatpush1.msra.mxu0 0.0
        %4482 = vmatprep.subr.mxu0 0.0
        %4483 = vmatpush1.msra.mxu0 0.0
        %4484 = vmatprep.subr.mxu0 0.0
        %4485 = vmatpush1.msra.mxu0 0.0
        %4486 = vmatprep.subr.mxu0 0.0
        %4487 = vmatpush1.msra.mxu0 0.0
        %4488 = vmatprep.subr.mxu0 0.0
        %4489 = vmatpush1.msra.mxu0 0.0
        %4490 = vmatprep.mubr.f32.mxu0 0.0
        %4491 = vmatmul.mubr.f32.gmra.mrb[0].mxu0 %v306
        %v4492 = vpop.f32.mrb[0].mxu0
        %v4493 = vadd.f32 0.0, %v4492
        %v4494 = vpop.f32.mrb[0].mxu0
        %v4495 = vadd.f32 0.0, %v4494
        %4496 = vdwg.mxu0
        %4497 = vmatprep.subr.mxu0 %v295
        %4498 = vmatpush1.msra.mxu0 %v294
        %4499 = vmatprep.subr.mxu0 0.0
        %4500 = vmatpush1.msra.mxu0 0.0
        %4501 = vmatprep.subr.mxu0 0.0
        %4502 = vmatpush1.msra.mxu0 0.0
        %4503 = vmatprep.subr.mxu0 0.0
        %4504 = vmatpush1.msra.mxu0 0.0
        %4505 = vmatprep.subr.mxu0 0.0
        %4506 = vmatpush1.msra.mxu0 0.0
        %4507 = vmatprep.subr.mxu0 0.0
        %4508 = vmatpush1.msra.mxu0 0.0
        %4509 = vmatprep.subr.mxu0 0.0
        %4510 = vmatpush1.msra.mxu0 0.0
        %4511 = vmatprep.subr.mxu0 0.0
        %4512 = vmatpush1.msra.mxu0 0.0
        %4513 = vmatprep.subr.mxu0 0.0
        %4514 = vmatpush1.msra.mxu0 0.0
        %4515 = vmatprep.subr.mxu0 0.0
        %4516 = vmatpush1.msra.mxu0 0.0
        %4517 = vmatprep.subr.mxu0 0.0
        %4518 = vmatpush1.msra.mxu0 0.0
        %4519 = vmatprep.subr.mxu0 0.0
        %4520 = vmatpush1.msra.mxu0 0.0
        %4521 = vmatprep.subr.mxu0 0.0
        %4522 = vmatpush1.msra.mxu0 0.0
        %4523 = vmatprep.subr.mxu0 0.0
        %4524 = vmatpush1.msra.mxu0 0.0
        %4525 = vmatprep.subr.mxu0 0.0
        %4526 = vmatpush1.msra.mxu0 0.0
        %4527 = vmatprep.subr.mxu0 0.0
        %4528 = vmatpush1.msra.mxu0 0.0
        %4529 = vmatprep.subr.mxu0 0.0
        %4530 = vmatpush1.msra.mxu0 0.0
        %4531 = vmatprep.subr.mxu0 0.0
        %4532 = vmatpush1.msra.mxu0 0.0
        %4533 = vmatprep.subr.mxu0 0.0
        %4534 = vmatpush1.msra.mxu0 0.0
        %4535 = vmatprep.subr.mxu0 0.0
        %4536 = vmatpush1.msra.mxu0 0.0
        %4537 = vmatprep.subr.mxu0 0.0
        %4538 = vmatpush1.msra.mxu0 0.0
        %4539 = vmatprep.subr.mxu0 0.0
        %4540 = vmatpush1.msra.mxu0 0.0
        %4541 = vmatprep.subr.mxu0 0.0
        %4542 = vmatpush1.msra.mxu0 0.0
        %4543 = vmatprep.subr.mxu0 0.0
        %4544 = vmatpush1.msra.mxu0 0.0
        %4545 = vmatprep.subr.mxu0 0.0
        %4546 = vmatpush1.msra.mxu0 0.0
        %4547 = vmatprep.subr.mxu0 0.0
        %4548 = vmatpush1.msra.mxu0 0.0
        %4549 = vmatprep.subr.mxu0 0.0
        %4550 = vmatpush1.msra.mxu0 0.0
        %4551 = vmatprep.subr.mxu0 0.0
        %4552 = vmatpush1.msra.mxu0 0.0
        %4553 = vmatprep.subr.mxu0 0.0
        %4554 = vmatpush1.msra.mxu0 0.0
        %4555 = vmatprep.subr.mxu0 0.0
        %4556 = vmatpush1.msra.mxu0 0.0
        %4557 = vmatprep.subr.mxu0 0.0
        %4558 = vmatpush1.msra.mxu0 0.0
        %4559 = vmatprep.subr.mxu0 0.0
        %4560 = vmatpush1.msra.mxu0 0.0
        %4561 = vmatprep.mubr.f32.mxu0 0.0
        %4562 = vmatmul.mubr.f32.gmra.mrb[0].mxu0 %v306
        %v4563 = vpop.f32.mrb[0].mxu0
        %v4564 = vadd.f32 0.0, %v4563
        %v4565 = vpop.f32.mrb[0].mxu0
        %v4566 = vadd.f32 0.0, %v4565
        %4567 = vdwg.mxu0
        %4568 = vmatprep.subr.mxu0 %v297
        %4569 = vmatpush1.msra.mxu0 %v296
        %4570 = vmatprep.subr.mxu0 0.0
        %4571 = vmatpush1.msra.mxu0 0.0
        %4572 = vmatprep.subr.mxu0 0.0
        %4573 = vmatpush1.msra.mxu0 0.0
        %4574 = vmatprep.subr.mxu0 0.0
        %4575 = vmatpush1.msra.mxu0 0.0
        %4576 = vmatprep.subr.mxu0 0.0
        %4577 = vmatpush1.msra.mxu0 0.0
        %4578 = vmatprep.subr.mxu0 0.0
        %4579 = vmatpush1.msra.mxu0 0.0
        %4580 = vmatprep.subr.mxu0 0.0
        %4581 = vmatpush1.msra.mxu0 0.0
        %4582 = vmatprep.subr.mxu0 0.0
        %4583 = vmatpush1.msra.mxu0 0.0
        %4584 = vmatprep.subr.mxu0 0.0
        %4585 = vmatpush1.msra.mxu0 0.0
        %4586 = vmatprep.subr.mxu0 0.0
        %4587 = vmatpush1.msra.mxu0 0.0
        %4588 = vmatprep.subr.mxu0 0.0
        %4589 = vmatpush1.msra.mxu0 0.0
        %4590 = vmatprep.subr.mxu0 0.0
        %4591 = vmatpush1.msra.mxu0 0.0
        %4592 = vmatprep.subr.mxu0 0.0
        %4593 = vmatpush1.msra.mxu0 0.0
        %4594 = vmatprep.subr.mxu0 0.0
        %4595 = vmatpush1.msra.mxu0 0.0
        %4596 = vmatprep.subr.mxu0 0.0
        %4597 = vmatpush1.msra.mxu0 0.0
        %4598 = vmatprep.subr.mxu0 0.0
        %4599 = vmatpush1.msra.mxu0 0.0
        %4600 = vmatprep.subr.mxu0 0.0
        %4601 = vmatpush1.msra.mxu0 0.0
        %4602 = vmatprep.subr.mxu0 0.0
        %4603 = vmatpush1.msra.mxu0 0.0
        %4604 = vmatprep.subr.mxu0 0.0
        %4605 = vmatpush1.msra.mxu0 0.0
        %4606 = vmatprep.subr.mxu0 0.0
        %4607 = vmatpush1.msra.mxu0 0.0
        %4608 = vmatprep.subr.mxu0 0.0
        %4609 = vmatpush1.msra.mxu0 0.0
        %4610 = vmatprep.subr.mxu0 0.0
        %4611 = vmatpush1.msra.mxu0 0.0
        %4612 = vmatprep.subr.mxu0 0.0
        %4613 = vmatpush1.msra.mxu0 0.0
        %4614 = vmatprep.subr.mxu0 0.0
        %4615 = vmatpush1.msra.mxu0 0.0
        %4616 = vmatprep.subr.mxu0 0.0
        %4617 = vmatpush1.msra.mxu0 0.0
        %4618 = vmatprep.subr.mxu0 0.0
        %4619 = vmatpush1.msra.mxu0 0.0
        %4620 = vmatprep.subr.mxu0 0.0
        %4621 = vmatpush1.msra.mxu0 0.0
        %4622 = vmatprep.subr.mxu0 0.0
        %4623 = vmatpush1.msra.mxu0 0.0
        %4624 = vmatprep.subr.mxu0 0.0
        %4625 = vmatpush1.msra.mxu0 0.0
        %4626 = vmatprep.subr.mxu0 0.0
        %4627 = vmatpush1.msra.mxu0 0.0
        %4628 = vmatprep.subr.mxu0 0.0
        %4629 = vmatpush1.msra.mxu0 0.0
        %4630 = vmatprep.subr.mxu0 0.0
        %4631 = vmatpush1.msra.mxu0 0.0
        %4632 = vmatprep.mubr.f32.mxu0 0.0
        %4633 = vmatmul.mubr.f32.gmra.mrb[0].mxu0 %v306
        %v4634 = vpop.f32.mrb[0].mxu0
        %v4635 = vadd.f32 0.0, %v4634
        %v4636 = vpop.f32.mrb[0].mxu0
        %v4637 = vadd.f32 0.0, %v4636
        %4638 = vdwg.mxu0
        %4639 = vmatprep.subr.mxu0 %v299
        %4640 = vmatpush1.msra.mxu0 %v298
        %4641 = vmatprep.subr.mxu0 0.0
        %4642 = vmatpush1.msra.mxu0 0.0
        %4643 = vmatprep.subr.mxu0 0.0
        %4644 = vmatpush1.msra.mxu0 0.0
        %4645 = vmatprep.subr.mxu0 0.0
        %4646 = vmatpush1.msra.mxu0 0.0
        %4647 = vmatprep.subr.mxu0 0.0
        %4648 = vmatpush1.msra.mxu0 0.0
        %4649 = vmatprep.subr.mxu0 0.0
        %4650 = vmatpush1.msra.mxu0 0.0
        %4651 = vmatprep.subr.mxu0 0.0
        %4652 = vmatpush1.msra.mxu0 0.0
        %4653 = vmatprep.subr.mxu0 0.0
        %4654 = vmatpush1.msra.mxu0 0.0
        %4655 = vmatprep.subr.mxu0 0.0
        %4656 = vmatpush1.msra.mxu0 0.0
        %4657 = vmatprep.subr.mxu0 0.0
        %4658 = vmatpush1.msra.mxu0 0.0
        %4659 = vmatprep.subr.mxu0 0.0
        %4660 = vmatpush1.msra.mxu0 0.0
        %4661 = vmatprep.subr.mxu0 0.0
        %4662 = vmatpush1.msra.mxu0 0.0
        %4663 = vmatprep.subr.mxu0 0.0
        %4664 = vmatpush1.msra.mxu0 0.0
        %4665 = vmatprep.subr.mxu0 0.0
        %4666 = vmatpush1.msra.mxu0 0.0
        %4667 = vmatprep.subr.mxu0 0.0
        %4668 = vmatpush1.msra.mxu0 0.0
        %4669 = vmatprep.subr.mxu0 0.0
        %4670 = vmatpush1.msra.mxu0 0.0
        %4671 = vmatprep.subr.mxu0 0.0
        %4672 = vmatpush1.msra.mxu0 0.0
        %4673 = vmatprep.subr.mxu0 0.0
        %4674 = vmatpush1.msra.mxu0 0.0
        %4675 = vmatprep.subr.mxu0 0.0
        %4676 = vmatpush1.msra.mxu0 0.0
        %4677 = vmatprep.subr.mxu0 0.0
        %4678 = vmatpush1.msra.mxu0 0.0
        %4679 = vmatprep.subr.mxu0 0.0
        %4680 = vmatpush1.msra.mxu0 0.0
        %4681 = vmatprep.subr.mxu0 0.0
        %4682 = vmatpush1.msra.mxu0 0.0
        %4683 = vmatprep.subr.mxu0 0.0
        %4684 = vmatpush1.msra.mxu0 0.0
        %4685 = vmatprep.subr.mxu0 0.0
        %4686 = vmatpush1.msra.mxu0 0.0
        %4687 = vmatprep.subr.mxu0 0.0
        %4688 = vmatpush1.msra.mxu0 0.0
        %4689 = vmatprep.subr.mxu0 0.0
        %4690 = vmatpush1.msra.mxu0 0.0
        %4691 = vmatprep.subr.mxu0 0.0
        %4692 = vmatpush1.msra.mxu0 0.0
        %4693 = vmatprep.subr.mxu0 0.0
        %4694 = vmatpush1.msra.mxu0 0.0
        %4695 = vmatprep.subr.mxu0 0.0
        %4696 = vmatpush1.msra.mxu0 0.0
        %4697 = vmatprep.subr.mxu0 0.0
        %4698 = vmatpush1.msra.mxu0 0.0
        %4699 = vmatprep.subr.mxu0 0.0
        %4700 = vmatpush1.msra.mxu0 0.0
        %4701 = vmatprep.subr.mxu0 0.0
        %4702 = vmatpush1.msra.mxu0 0.0
        %4703 = vmatprep.mubr.f32.mxu0 0.0
        %4704 = vmatmul.mubr.f32.gmra.mrb[0].mxu0 %v306
        %v4705 = vpop.f32.mrb[0].mxu0
        %v4706 = vadd.f32 0.0, %v4705
        %v4707 = vpop.f32.mrb[0].mxu0
        %v4708 = vadd.f32 0.0, %v4707
        %4709 = vdwg.mxu0
        %4710 = vmatprep.subr.mxu0 %v301
        %4711 = vmatpush1.msra.mxu0 %v300
        %4712 = vmatprep.subr.mxu0 0.0
        %4713 = vmatpush1.msra.mxu0 0.0
        %4714 = vmatprep.subr.mxu0 0.0
        %4715 = vmatpush1.msra.mxu0 0.0
        %4716 = vmatprep.subr.mxu0 0.0
        %4717 = vmatpush1.msra.mxu0 0.0
        %4718 = vmatprep.subr.mxu0 0.0
        %4719 = vmatpush1.msra.mxu0 0.0
        %4720 = vmatprep.subr.mxu0 0.0
        %4721 = vmatpush1.msra.mxu0 0.0
        %4722 = vmatprep.subr.mxu0 0.0
        %4723 = vmatpush1.msra.mxu0 0.0
        %4724 = vmatprep.subr.mxu0 0.0
        %4725 = vmatpush1.msra.mxu0 0.0
        %4726 = vmatprep.subr.mxu0 0.0
        %4727 = vmatpush1.msra.mxu0 0.0
        %4728 = vmatprep.subr.mxu0 0.0
        %4729 = vmatpush1.msra.mxu0 0.0
        %4730 = vmatprep.subr.mxu0 0.0
        %4731 = vmatpush1.msra.mxu0 0.0
        %4732 = vmatprep.subr.mxu0 0.0
        %4733 = vmatpush1.msra.mxu0 0.0
        %4734 = vmatprep.subr.mxu0 0.0
        %4735 = vmatpush1.msra.mxu0 0.0
        %4736 = vmatprep.subr.mxu0 0.0
        %4737 = vmatpush1.msra.mxu0 0.0
        %4738 = vmatprep.subr.mxu0 0.0
        %4739 = vmatpush1.msra.mxu0 0.0
        %4740 = vmatprep.subr.mxu0 0.0
        %4741 = vmatpush1.msra.mxu0 0.0
        %4742 = vmatprep.subr.mxu0 0.0
        %4743 = vmatpush1.msra.mxu0 0.0
        %4744 = vmatprep.subr.mxu0 0.0
        %4745 = vmatpush1.msra.mxu0 0.0
        %4746 = vmatprep.subr.mxu0 0.0
        %4747 = vmatpush1.msra.mxu0 0.0
        %4748 = vmatprep.subr.mxu0 0.0
        %4749 = vmatpush1.msra.mxu0 0.0
        %4750 = vmatprep.subr.mxu0 0.0
        %4751 = vmatpush1.msra.mxu0 0.0
        %4752 = vmatprep.subr.mxu0 0.0
        %4753 = vmatpush1.msra.mxu0 0.0
        %4754 = vmatprep.subr.mxu0 0.0
        %4755 = vmatpush1.msra.mxu0 0.0
        %4756 = vmatprep.subr.mxu0 0.0
        %4757 = vmatpush1.msra.mxu0 0.0
        %4758 = vmatprep.subr.mxu0 0.0
        %4759 = vmatpush1.msra.mxu0 0.0
        %4760 = vmatprep.subr.mxu0 0.0
        %4761 = vmatpush1.msra.mxu0 0.0
        %4762 = vmatprep.subr.mxu0 0.0
        %4763 = vmatpush1.msra.mxu0 0.0
        %4764 = vmatprep.subr.mxu0 0.0
        %4765 = vmatpush1.msra.mxu0 0.0
        %4766 = vmatprep.subr.mxu0 0.0
        %4767 = vmatpush1.msra.mxu0 0.0
        %4768 = vmatprep.subr.mxu0 0.0
        %4769 = vmatpush1.msra.mxu0 0.0
        %4770 = vmatprep.subr.mxu0 0.0
        %4771 = vmatpush1.msra.mxu0 0.0
        %4772 = vmatprep.subr.mxu0 0.0
        %4773 = vmatpush1.msra.mxu0 0.0
        %4774 = vmatprep.mubr.f32.mxu0 0.0
        %4775 = vmatmul.mubr.f32.gmra.mrb[0].mxu0 %v306
        %v4776 = vpop.f32.mrb[0].mxu0
        %v4777 = vadd.f32 0.0, %v4776
        %v4778 = vpop.f32.mrb[0].mxu0
        %v4779 = vadd.f32 0.0, %v4778
        %4780 = vdwg.mxu0
        %4781 = vmatprep.subr.mxu0 %v303
        %4782 = vmatpush1.msra.mxu0 %v302
        %4783 = vmatprep.subr.mxu0 0.0
        %4784 = vmatpush1.msra.mxu0 0.0
        %4785 = vmatprep.subr.mxu0 0.0
        %4786 = vmatpush1.msra.mxu0 0.0
        %4787 = vmatprep.subr.mxu0 0.0
        %4788 = vmatpush1.msra.mxu0 0.0
        %4789 = vmatprep.subr.mxu0 0.0
        %4790 = vmatpush1.msra.mxu0 0.0
        %4791 = vmatprep.subr.mxu0 0.0
        %4792 = vmatpush1.msra.mxu0 0.0
        %4793 = vmatprep.subr.mxu0 0.0
        %4794 = vmatpush1.msra.mxu0 0.0
        %4795 = vmatprep.subr.mxu0 0.0
        %4796 = vmatpush1.msra.mxu0 0.0
        %4797 = vmatprep.subr.mxu0 0.0
        %4798 = vmatpush1.msra.mxu0 0.0
        %4799 = vmatprep.subr.mxu0 0.0
        %4800 = vmatpush1.msra.mxu0 0.0
        %4801 = vmatprep.subr.mxu0 0.0
        %4802 = vmatpush1.msra.mxu0 0.0
        %4803 = vmatprep.subr.mxu0 0.0
        %4804 = vmatpush1.msra.mxu0 0.0
        %4805 = vmatprep.subr.mxu0 0.0
        %4806 = vmatpush1.msra.mxu0 0.0
        %4807 = vmatprep.subr.mxu0 0.0
        %4808 = vmatpush1.msra.mxu0 0.0
        %4809 = vmatprep.subr.mxu0 0.0
        %4810 = vmatpush1.msra.mxu0 0.0
        %4811 = vmatprep.subr.mxu0 0.0
        %4812 = vmatpush1.msra.mxu0 0.0
        %4813 = vmatprep.subr.mxu0 0.0
        %4814 = vmatpush1.msra.mxu0 0.0
        %4815 = vmatprep.subr.mxu0 0.0
        %4816 = vmatpush1.msra.mxu0 0.0
        %4817 = vmatprep.subr.mxu0 0.0
        %4818 = vmatpush1.msra.mxu0 0.0
        %4819 = vmatprep.subr.mxu0 0.0
        %4820 = vmatpush1.msra.mxu0 0.0
        %4821 = vmatprep.subr.mxu0 0.0
        %4822 = vmatpush1.msra.mxu0 0.0
        %4823 = vmatprep.subr.mxu0 0.0
        %4824 = vmatpush1.msra.mxu0 0.0
        %4825 = vmatprep.subr.mxu0 0.0
        %4826 = vmatpush1.msra.mxu0 0.0
        %4827 = vmatprep.subr.mxu0 0.0
        %4828 = vmatpush1.msra.mxu0 0.0
        %4829 = vmatprep.subr.mxu0 0.0
        %4830 = vmatpush1.msra.mxu0 0.0
        %4831 = vmatprep.subr.mxu0 0.0
        %4832 = vmatpush1.msra.mxu0 0.0
        %4833 = vmatprep.subr.mxu0 0.0
        %4834 = vmatpush1.msra.mxu0 0.0
        %4835 = vmatprep.subr.mxu0 0.0
        %4836 = vmatpush1.msra.mxu0 0.0
        %4837 = vmatprep.subr.mxu0 0.0
        %4838 = vmatpush1.msra.mxu0 0.0
        %4839 = vmatprep.subr.mxu0 0.0
        %4840 = vmatpush1.msra.mxu0 0.0
        %4841 = vmatprep.subr.mxu0 0.0
        %4842 = vmatpush1.msra.mxu0 0.0
        %4843 = vmatprep.subr.mxu0 0.0
        %4844 = vmatpush1.msra.mxu0 0.0
        %4845 = vmatprep.mubr.f32.mxu0 0.0
        %4846 = vmatmul.mubr.f32.gmra.mrb[0].mxu0 %v306
        %v4847 = vpop.f32.mrb[0].mxu0
        %v4848 = vadd.f32 0.0, %v4847
        %v4849 = vpop.f32.mrb[0].mxu0
        %v4850 = vadd.f32 0.0, %v4849
        %4851 = vdwg.mxu0
        %4852 = vst [vmem:[%s172] sm:$0xff] %v375
        %4853 = vst [vmem:[%s172 + $0x8] sm:$0xff] %v377
        %4854 = vst [vmem:[%s172 + $0x10] sm:$0xff] %v446
        %4855 = vst [vmem:[%s172 + $0x18] sm:$0xff] %v448
        %4856 = vst [vmem:[%s172 + $0x20] sm:$0xff] %v517
        %4857 = vst [vmem:[%s172 + $0x28] sm:$0xff] %v519
        %4858 = vst [vmem:[%s172 + $0x30] sm:$0xff] %v588
        %4859 = vst [vmem:[%s172 + $0x38] sm:$0xff] %v590
        %4860 = vst [vmem:[%s172 + $0x40] sm:$0xff] %v659
        %4861 = vst [vmem:[%s172 + $0x48] sm:$0xff] %v661
        %4862 = vst [vmem:[%s172 + $0x50] sm:$0xff] %v730
        %4863 = vst [vmem:[%s172 + $0x58] sm:$0xff] %v732
        %4864 = vst [vmem:[%s172 + $0x60] sm:$0xff] %v801
        %4865 = vst [vmem:[%s172 + $0x68] sm:$0xff] %v803
        %4866 = vst [vmem:[%s172 + $0x70] sm:$0xff] %v872
        %4867 = vst [vmem:[%s172 + $0x78] sm:$0xff] %v874
        %4868 = vst [vmem:[%s172 + $0x80] sm:$0xff] %v943
        %4869 = vst [vmem:[%s172 + $0x88] sm:$0xff] %v945
        %4870 = vst [vmem:[%s172 + $0x90] sm:$0xff] %v1014
        %4871 = vst [vmem:[%s172 + $0x98] sm:$0xff] %v1016
        %4872 = vst [vmem:[%s172 + $0xa0] sm:$0xff] %v1085
        %4873 = vst [vmem:[%s172 + $0xa8] sm:$0xff] %v1087
        %4874 = vst [vmem:[%s172 + $0xb0] sm:$0xff] %v1156
        %4875 = vst [vmem:[%s172 + $0xb8] sm:$0xff] %v1158
        %4876 = vst [vmem:[%s172 + $0xc0] sm:$0xff] %v1227
        %4877 = vst [vmem:[%s172 + $0xc8] sm:$0xff] %v1229
        %4878 = vst [vmem:[%s172 + $0xd0] sm:$0xff] %v1298
        %4879 = vst [vmem:[%s172 + $0xd8] sm:$0xff] %v1300
        %4880 = vst [vmem:[%s172 + $0xe0] sm:$0xff] %v1369
        %4881 = vst [vmem:[%s172 + $0xe8] sm:$0xff] %v1371
        %4882 = vst [vmem:[%s172 + $0xf0] sm:$0xff] %v1440
        %4883 = vst [vmem:[%s172 + $0xf8] sm:$0xff] %v1442
        %4884 = vst [vmem:[%s172 + $0x100] sm:$0xff] %v1511
        %4885 = vst [vmem:[%s172 + $0x108] sm:$0xff] %v1513
        %4886 = vst [vmem:[%s172 + $0x110] sm:$0xff] %v1582
        %4887 = vst [vmem:[%s172 + $0x118] sm:$0xff] %v1584
        %4888 = vst [vmem:[%s172 + $0x120] sm:$0xff] %v1653
        %4889 = vst [vmem:[%s172 + $0x128] sm:$0xff] %v1655
        %4890 = vst [vmem:[%s172 + $0x130] sm:$0xff] %v1724
        %4891 = vst [vmem:[%s172 + $0x138] sm:$0xff] %v1726
        %4892 = vst [vmem:[%s172 + $0x140] sm:$0xff] %v1795
        %4893 = vst [vmem:[%s172 + $0x148] sm:$0xff] %v1797
        %4894 = vst [vmem:[%s172 + $0x150] sm:$0xff] %v1866
        %4895 = vst [vmem:[%s172 + $0x158] sm:$0xff] %v1868
        %4896 = vst [vmem:[%s172 + $0x160] sm:$0xff] %v1937
        %4897 = vst [vmem:[%s172 + $0x168] sm:$0xff] %v1939
        %4898 = vst [vmem:[%s172 + $0x170] sm:$0xff] %v2008
        %4899 = vst [vmem:[%s172 + $0x178] sm:$0xff] %v2010
        %4900 = vst [vmem:[%s172 + $0x180] sm:$0xff] %v2079
        %4901 = vst [vmem:[%s172 + $0x188] sm:$0xff] %v2081
        %4902 = vst [vmem:[%s172 + $0x190] sm:$0xff] %v2150
        %4903 = vst [vmem:[%s172 + $0x198] sm:$0xff] %v2152
        %4904 = vst [vmem:[%s172 + $0x1a0] sm:$0xff] %v2221
        %4905 = vst [vmem:[%s172 + $0x1a8] sm:$0xff] %v2223
        %4906 = vst [vmem:[%s172 + $0x1b0] sm:$0xff] %v2292
        %4907 = vst [vmem:[%s172 + $0x1b8] sm:$0xff] %v2294
        %4908 = vst [vmem:[%s172 + $0x1c0] sm:$0xff] %v2363
        %4909 = vst [vmem:[%s172 + $0x1c8] sm:$0xff] %v2365
        %4910 = vst [vmem:[%s172 + $0x1d0] sm:$0xff] %v2434
        %4911 = vst [vmem:[%s172 + $0x1d8] sm:$0xff] %v2436
        %4912 = vst [vmem:[%s172 + $0x1e0] sm:$0xff] %v2505
        %4913 = vst [vmem:[%s172 + $0x1e8] sm:$0xff] %v2507
        %4914 = vst [vmem:[%s172 + $0x1f0] sm:$0xff] %v2576
        %4915 = vst [vmem:[%s172 + $0x1f8] sm:$0xff] %v2578
        %4916 = vst [vmem:[%s172 + $0x200] sm:$0xff] %v2647
        %4917 = vst [vmem:[%s172 + $0x208] sm:$0xff] %v2649
        %4918 = vst [vmem:[%s172 + $0x210] sm:$0xff] %v2718
        %4919 = vst [vmem:[%s172 + $0x218] sm:$0xff] %v2720
        %4920 = vst [vmem:[%s172 + $0x220] sm:$0xff] %v2789
        %4921 = vst [vmem:[%s172 + $0x228] sm:$0xff] %v2791
        %4922 = vst [vmem:[%s172 + $0x230] sm:$0xff] %v2860
        %4923 = vst [vmem:[%s172 + $0x238] sm:$0xff] %v2862
        %4924 = vst [vmem:[%s172 + $0x240] sm:$0xff] %v2931
        %4925 = vst [vmem:[%s172 + $0x248] sm:$0xff] %v2933
        %4926 = vst [vmem:[%s172 + $0x250] sm:$0xff] %v3002
        %4927 = vst [vmem:[%s172 + $0x258] sm:$0xff] %v3004
        %4928 = vst [vmem:[%s172 + $0x260] sm:$0xff] %v3073
        %4929 = vst [vmem:[%s172 + $0x268] sm:$0xff] %v3075
        %4930 = vst [vmem:[%s172 + $0x270] sm:$0xff] %v3144
        %4931 = vst [vmem:[%s172 + $0x278] sm:$0xff] %v3146
        %4932 = vst [vmem:[%s172 + $0x280] sm:$0xff] %v3215
        %4933 = vst [vmem:[%s172 + $0x288] sm:$0xff] %v3217
        %4934 = vst [vmem:[%s172 + $0x290] sm:$0xff] %v3286
        %4935 = vst [vmem:[%s172 + $0x298] sm:$0xff] %v3288
        %4936 = vst [vmem:[%s172 + $0x2a0] sm:$0xff] %v3357
        %4937 = vst [vmem:[%s172 + $0x2a8] sm:$0xff] %v3359
        %4938 = vst [vmem:[%s172 + $0x2b0] sm:$0xff] %v3428
        %4939 = vst [vmem:[%s172 + $0x2b8] sm:$0xff] %v3430
        %4940 = vst [vmem:[%s172 + $0x2c0] sm:$0xff] %v3499
        %4941 = vst [vmem:[%s172 + $0x2c8] sm:$0xff] %v3501
        %4942 = vst [vmem:[%s172 + $0x2d0] sm:$0xff] %v3570
        %4943 = vst [vmem:[%s172 + $0x2d8] sm:$0xff] %v3572
        %4944 = vst [vmem:[%s172 + $0x2e0] sm:$0xff] %v3641
        %4945 = vst [vmem:[%s172 + $0x2e8] sm:$0xff] %v3643
        %4946 = vst [vmem:[%s172 + $0x2f0] sm:$0xff] %v3712
        %4947 = vst [vmem:[%s172 + $0x2f8] sm:$0xff] %v3714
        %4948 = vst [vmem:[%s172 + $0x300] sm:$0xff] %v3783
        %4949 = vst [vmem:[%s172 + $0x308] sm:$0xff] %v3785
        %4950 = vst [vmem:[%s172 + $0x310] sm:$0xff] %v3854
        %4951 = vst [vmem:[%s172 + $0x318] sm:$0xff] %v3856
        %4952 = vst [vmem:[%s172 + $0x320] sm:$0xff] %v3925
        %4953 = vst [vmem:[%s172 + $0x328] sm:$0xff] %v3927
        %4954 = vst [vmem:[%s172 + $0x330] sm:$0xff] %v3996
        %4955 = vst [vmem:[%s172 + $0x338] sm:$0xff] %v3998
        %4956 = vst [vmem:[%s172 + $0x340] sm:$0xff] %v4067
        %4957 = vst [vmem:[%s172 + $0x348] sm:$0xff] %v4069
        %4958 = vst [vmem:[%s172 + $0x350] sm:$0xff] %v4138
        %4959 = vst [vmem:[%s172 + $0x358] sm:$0xff] %v4140
        %4960 = vst [vmem:[%s172 + $0x360] sm:$0xff] %v4209
        %4961 = vst [vmem:[%s172 + $0x368] sm:$0xff] %v4211
        %4962 = vst [vmem:[%s172 + $0x370] sm:$0xff] %v4280
        %4963 = vst [vmem:[%s172 + $0x378] sm:$0xff] %v4282
        %4964 = vst [vmem:[%s172 + $0x380] sm:$0xff] %v4351
        %4965 = vst [vmem:[%s172 + $0x388] sm:$0xff] %v4353
        %4966 = vst [vmem:[%s172 + $0x390] sm:$0xff] %v4422
        %4967 = vst [vmem:[%s172 + $0x398] sm:$0xff] %v4424
        %4968 = vst [vmem:[%s172 + $0x3a0] sm:$0xff] %v4493
        %4969 = vst [vmem:[%s172 + $0x3a8] sm:$0xff] %v4495
        %4970 = vst [vmem:[%s172 + $0x3b0] sm:$0xff] %v4564
        %4971 = vst [vmem:[%s172 + $0x3b8] sm:$0xff] %v4566
        %4972 = vst [vmem:[%s172 + $0x3c0] sm:$0xff] %v4635
        %4973 = vst [vmem:[%s172 + $0x3c8] sm:$0xff] %v4637
        %4974 = vst [vmem:[%s172 + $0x3d0] sm:$0xff] %v4706
        %4975 = vst [vmem:[%s172 + $0x3d8] sm:$0xff] %v4708
        %4976 = vst [vmem:[%s172 + $0x3e0] sm:$0xff] %v4777
        %4977 = vst [vmem:[%s172 + $0x3e8] sm:$0xff] %v4779
        %4978 = vst [vmem:[%s172 + $0x3f0] sm:$0xff] %v4848
        %4979 = vst [vmem:[%s172 + $0x3f8] sm:$0xff] %v4850
        %s4980 = sand.u32 %s75, 1
        %s4981 = scalar_lea.sflag [#allocation4], %s4980
        %s4982 = sand.u32 %s75, 1
        %s4983 = smul.addr %s4982, 1024
        %s4984 = scalar_lea.vmem [#allocation7], %s4983
        // Predicated region
        $region37: #{tpu_custom_call.1} parent=27 // pred_check
          %p4985 = pneg %p85
        $region38: #{tpu_custom_call.1} parent=27 // pred_check_branch
          %4987 = sbr.rel (%p4985) target = $region40
        $region39: #{tpu_custom_call.1} parent=27 // pred_region
          %s4988 = smul.u32 128, %s20
          %s4990 = ssub.s32 16384, 16384
          %4991 = vsyncadd %s4981, %s4990
          %s4992 = smul.addr %s4988, 128
          %s4993 = scalar_lea.hbm %s2, %s4992
          %s4995 = sshll.u32 %s4984, 4
          %s4996 = int_to_ptr.vmem [resolvable:$true] %s4995
          %4998 = dma.vmem_to_hbm [thread:$0]  %s4996, 16384, %s4993, %s4981
        $region40: #{tpu_custom_call.1} parent=27 // pred_fallthru
          _
      $region28: #{tpu_custom_call.1} parent=5 // pred_fallthru
        _
      %p4999 = scmp.le.s32.totalorder 2, %s15
      // Predicated region
      $region41: #{tpu_custom_call.1} parent=5 // pred_check
        %p5000 = pneg %p4999
      $region42: #{tpu_custom_call.1} parent=5 // pred_check_branch
        %5002 = sbr.rel (%p5000) target = $region44
      $region43: #{tpu_custom_call.1} parent=5 // pred_region
        %s5003 = ssub.s32 %s15, 2
        // Predicated region
        $region45: #{tpu_custom_call.1} parent=43 // pred_check
          %p5004 = pneg %p91
        $region46: #{tpu_custom_call.1} parent=43 // pred_check_branch
          %5006 = sbr.rel (%p5004) target = $region48
        $region47: #{tpu_custom_call.1} parent=43 // pred_region
          %s5007 = sand.u32 %s76, 1
          %s5008 = scalar_lea.sflag [#allocation4], %s5007
          %s5009 = sand.u32 %s76, 1
          %s5010 = smul.addr %s5009, 1024
          %s5011 = scalar_lea.vmem [#allocation7], %s5010
          %5012 = dma.done %s5008, 16384
        $region48: #{tpu_custom_call.1} parent=43 // pred_fallthru
          _
      $region44: #{tpu_custom_call.1} parent=5 // pred_fallthru
        _
    $region6: #{tpu_custom_call.1} parent=1 // loop_footer
      %s19 = sadd.s32 1, %s15
    $region7: #{tpu_custom_call.1} parent=1 // loop_footer_branch
      %14 = sbr.rel target = $region3
    $region8: #{tpu_custom_call.1} parent=1 // loop_exit
      _
    %5013 = vsyncpa [#allocation3], 1
    %s5014 = scalar_lea.sflag [#allocation3], 1
    %5015 = vsyncpa %s5014, 1
    %5016 = vsyncpa [#allocation6], 1
    %s5017 = scalar_lea.sflag [#allocation6], 1
    %5018 = vsyncpa %s5017, 1
    %5019 = vsyncpa [#allocation4], 1
    %s5020 = scalar_lea.sflag [#allocation4], 1
    %5021 = vsyncpa %s5020, 1

</llo_original>
